<compile_context>
chip_gen: v7x
topology: tpu7x:2x2x1
jax: 0.10.0
libtpu: 0.0.40
codegen_flags: <defaults>
</compile_context>

<pallas_src>
import functools
import math

import jax
import jax.numpy as jnp
from jax.experimental import pallas as pl
from jax.experimental.pallas import tpu as pltpu

LN_EPS = 1e-12                 # BERT LayerNorm eps
INV_SQRT2 = 1.0 / math.sqrt(2.0)
VMEM_LIMIT = 48 * 1024 * 1024  # fits v7x's 64 MiB physical VMEM with headroom


def _pick_tile(dim, candidates):
    """Largest preferred tile that evenly divides `dim`, else the full dim."""
    for c in candidates:
        if dim % c == 0 and c <= dim:
            return c
    return dim


# ---------------------------------------------------------------------------
# Fused attention block kernel (BertSelfAttention + BertSelfOutput, eval mode):
#   x_tile -> Q proj ; kv (full) -> fused KV proj ; per-head SDPA
#   -> output dense -> residual add + LayerNorm
# All intermediates stay in VMEM / vregs; per-head context is written into a
# VMEM scratch slab at static column offsets (no lane-dim concatenate).
# ---------------------------------------------------------------------------
def _attn_block_kernel(*refs, num_heads, has_mask):
    if has_mask:
        (x_ref, kv_ref, mask_ref, wq_ref, bq_ref, wkv_ref, bkv_ref,
         wo_ref, bo_ref, g_ref, beta_ref, o_ref, ctx_ref) = refs
    else:
        (x_ref, kv_ref, wq_ref, bq_ref, wkv_ref, bkv_ref,
         wo_ref, bo_ref, g_ref, beta_ref, o_ref, ctx_ref) = refs
        mask_ref = None

    x = x_ref[...]                         # [tq, H]  (input dtype)
    kv = kv_ref[...]                       # [Skv, H]
    H = x.shape[-1]
    Dh = H // num_heads
    scale = 1.0 / math.sqrt(Dh)

    # Projections: bf16 MXU operands, f32 accumulation. Scale folded into Q.
    q = jnp.dot(x.astype(jnp.bfloat16), wq_ref[...],
                preferred_element_type=jnp.float32) + bq_ref[...]
    q = (q * scale).astype(jnp.bfloat16)                       # [tq, H]
    kvp = jnp.dot(kv.astype(jnp.bfloat16), wkv_ref[...],
                  preferred_element_type=jnp.float32) + bkv_ref[...]
    k = kvp[:, :H].astype(jnp.bfloat16)                        # [Skv, H]
    v = kvp[:, H:].astype(jnp.bfloat16)                        # [Skv, H]

    if mask_ref is not None:
        # HF-style extended mask computed in-kernel; broadcasts over q rows.
        add_mask = (1.0 - mask_ref[...].astype(jnp.float32)) * -10000.0
    else:
        add_mask = None

    # Per-head SDPA. Heads selected with static slices; dot_general contracts
    # the last dims directly (no explicit K transpose).
    for h in range(num_heads):
        lo, hi = h * Dh, (h + 1) * Dh
        qh = q[:, lo:hi]
        kh = k[:, lo:hi]
        vh = v[:, lo:hi]
        s = jax.lax.dot_general(
            qh, kh, dimension_numbers=(((1,), (1,)), ((), ())),
            preferred_element_type=jnp.float32)                # [tq, Skv]
        if add_mask is not None:
            s = s + add_mask
        s = s - jnp.max(s, axis=-1, keepdims=True)
        p = jnp.exp(s)
        # EUP approximate reciprocal: normalization off the VALU critical path.
        p = p * pl.reciprocal(jnp.sum(p, axis=-1, keepdims=True), approx=True)
        ctx_ref[:, lo:hi] = jnp.dot(p.astype(jnp.bfloat16), vh,
                                    preferred_element_type=jnp.float32)

    # Output dense + residual + LayerNorm (dropout = identity in eval).
    ctx = ctx_ref[...].astype(jnp.bfloat16)                    # [tq, H]
    out = jnp.dot(ctx, wo_ref[...],
                  preferred_element_type=jnp.float32) + bo_ref[...]
    hres = out + x.astype(jnp.float32)
    mean = jnp.mean(hres, axis=-1, keepdims=True)
    c = hres - mean
    var = jnp.mean(c * c, axis=-1, keepdims=True)
    inv = jax.lax.rsqrt(var + LN_EPS)
    o_ref[...] = (c * inv * g_ref[...] + beta_ref[...]).astype(o_ref.dtype)


def fused_attention(hidden, kv_source, p, num_heads, mask=None):
    """BertAttention (self or cross) in one pallas_call (eval mode).

    `mask`, if given, is the *raw* 0/1 encoder mask shaped [B, 1, Skv] or
    [B, Sq, Skv]; the HF (1-m)*-10000 extension happens inside the kernel.
    """
    B, Sq, H = hidden.shape
    Skv = kv_source.shape[1]
    has_mask = mask is not None
    tq = _pick_tile(Sq, (256, 128))

    in_specs = [
        pl.BlockSpec((None, tq, H), lambda b, q: (b, q, 0)),      # x tile
        pl.BlockSpec((None, Skv, H), lambda b, q: (b, 0, 0)),     # full KV src
    ]
    args = [hidden, kv_source]
    if has_mask:
        if mask.shape[1] == 1:
            in_specs.append(pl.BlockSpec((None, 1, Skv), lambda b, q: (b, 0, 0)))
        else:
            in_specs.append(pl.BlockSpec((None, tq, Skv), lambda b, q: (b, q, 0)))
        args.append(mask)
    in_specs += [
        pl.BlockSpec((H, H), lambda b, q: (0, 0)),        # q_w (bf16)
        pl.BlockSpec((1, H), lambda b, q: (0, 0)),        # q_b
        pl.BlockSpec((H, 2 * H), lambda b, q: (0, 0)),    # kv_w (fused K|V, bf16)
        pl.BlockSpec((1, 2 * H), lambda b, q: (0, 0)),    # kv_b
        pl.BlockSpec((H, H), lambda b, q: (0, 0)),        # o_w (bf16)
        pl.BlockSpec((1, H), lambda b, q: (0, 0)),        # o_b
        pl.BlockSpec((1, H), lambda b, q: (0, 0)),        # ln gamma
        pl.BlockSpec((1, H), lambda b, q: (0, 0)),        # ln beta
    ]
    args += [p["q_w"], p["q_b"], p["kv_w"], p["kv_b"],
             p["o_w"], p["o_b"], p["ln_g"], p["ln_b"]]

    kern = functools.partial(_attn_block_kernel, num_heads=num_heads,
                             has_mask=has_mask)
    return pl.pallas_call(
        kern,
        out_shape=jax.ShapeDtypeStruct((B, Sq, H), hidden.dtype),
        grid=(B, Sq // tq),
        in_specs=in_specs,
        out_specs=pl.BlockSpec((None, tq, H), lambda b, q: (b, q, 0)),
        scratch_shapes=[pltpu.VMEM((tq, H), jnp.float32)],       # ctx slab
        compiler_params=pltpu.CompilerParams(
            dimension_semantics=("parallel", "parallel"),
            vmem_limit_bytes=VMEM_LIMIT),
    )(*args)


# ---------------------------------------------------------------------------
# Fused FFN block kernel (BertIntermediate + BertOutput, eval mode), tiled over
# the intermediate dim I with a [tq, H] f32 VMEM accumulator:
#   acc += GELU(x @ wi[:, i_tile] + bi[i_tile]) @ wo[i_tile, :]
#   finalize: + bias, + residual, LayerNorm
# ---------------------------------------------------------------------------
def _ffn_block_kernel(x_ref, wi_ref, bi_ref, wo_ref, bo_ref, g_ref, beta_ref,
                      o_ref, acc_ref):
    i = pl.program_id(2)

    @pl.when(i == 0)
    def _():
        acc_ref[...] = jnp.zeros_like(acc_ref)

    xb = x_ref[...].astype(jnp.bfloat16)                         # [tq, H]
    inter = jnp.dot(xb, wi_ref[...],
                    preferred_element_type=jnp.float32) + bi_ref[...]
    # Exact (erf) GELU, matching BertIntermediate's default "gelu".
    inter = 0.5 * inter * (1.0 + jax.lax.erf(inter * INV_SQRT2))
    acc_ref[...] += jnp.dot(inter.astype(jnp.bfloat16), wo_ref[...],
                            preferred_element_type=jnp.float32)

    @pl.when(i == pl.num_programs(2) - 1)
    def _():
        out = acc_ref[...] + bo_ref[...]
        hres = out + x_ref[...].astype(jnp.float32)
        mean = jnp.mean(hres, axis=-1, keepdims=True)
        c = hres - mean
        var = jnp.mean(c * c, axis=-1, keepdims=True)
        inv = jax.lax.rsqrt(var + LN_EPS)
        o_ref[...] = (c * inv * g_ref[...] + beta_ref[...]).astype(o_ref.dtype)


def fused_ffn(x, p):
    """BertIntermediate + BertOutput in one pallas_call (eval mode)."""
    B, Sq, H = x.shape
    I = p["inter_w"].shape[1]
    tq = _pick_tile(Sq, (512, 256, 128))
    ti = _pick_tile(I, (1024, 512, 256, 128))    # shrink first pref for v7x if needed

    return pl.pallas_call(
        _ffn_block_kernel,
        out_shape=jax.ShapeDtypeStruct((B, Sq, H), x.dtype),
        grid=(B, Sq // tq, I // ti),
        in_specs=[
            pl.BlockSpec((None, tq, H), lambda b, q, i: (b, q, 0)),  # x (resident)
            pl.BlockSpec((H, ti), lambda b, q, i: (0, i)),           # wi tile (bf16)
            pl.BlockSpec((1, ti), lambda b, q, i: (0, i)),           # bi tile
            pl.BlockSpec((ti, H), lambda b, q, i: (i, 0)),           # wo tile (bf16)
            pl.BlockSpec((1, H), lambda b, q, i: (0, 0)),            # out bias
            pl.BlockSpec((1, H), lambda b, q, i: (0, 0)),            # ln gamma
            pl.BlockSpec((1, H), lambda b, q, i: (0, 0)),            # ln beta
        ],
        out_specs=pl.BlockSpec((None, tq, H), lambda b, q, i: (b, q, 0)),
        scratch_shapes=[pltpu.VMEM((tq, H), jnp.float32)],           # accumulator
        compiler_params=pltpu.CompilerParams(
            dimension_semantics=("parallel", "parallel", "arbitrary"),
            vmem_limit_bytes=VMEM_LIMIT),
    )(x, p["inter_w"], p["inter_b"], p["out_w"], p["out_b"],
      p["out_ln_g"], p["out_ln_b"])


# ---------------------------------------------------------------------------
# DecoderLayer forward
# ---------------------------------------------------------------------------
def decoder_layer(hidden_states, encoder_hidden_states, encoder_attention_mask,
                  params, *, num_heads):
    B, Sq, H = hidden_states.shape
    Benc, Senc, _ = encoder_hidden_states.shape
    assert Benc == B, "encoder batch must match decoder batch"

    # ---- self attention (reference forward passes no mask) ----
    attention_output = fused_attention(hidden_states, hidden_states,
                                       params["self_attn"], num_heads,
                                       mask=None)

    # ---- raw encoder mask, normalized to [B, {1|Sq}, Senc]; the HF-style
    #      (1 - m) * -10000 extension is computed inside the kernel ----
    if encoder_attention_mask.ndim == 2:
        mask = encoder_attention_mask[:, None, :]
    elif encoder_attention_mask.ndim == 3:
        mask = encoder_attention_mask
    else:
        raise ValueError("Wrong shape for encoder_attention_mask "
                         f"(shape {encoder_attention_mask.shape})")
    assert mask.shape[0] == B and mask.shape[-1] == Senc

    # ---- cross attention ----
    attention_output = fused_attention(attention_output, encoder_hidden_states,
                                       params["cross_attn"], num_heads,
                                       mask=mask)

    # ---- intermediate (GELU) + output (dense + residual LayerNorm) ----
    layer_output = fused_ffn(attention_output, params)

    # outputs tuple matches the reference (output_attentions=False)
    return (layer_output,)


decoder_layer_jit = jax.jit(decoder_layer, static_argnames=("num_heads",))


# ---------------------------------------------------------------------------
# Deterministic parameter init (synthetic, no checkpoint).
#   - matmul weights stored in bf16 (MXU-native, halves weight DMA/VMEM)
#   - K|V weights pre-fused as [H, 2H] for one wide KV matmul
#   - biases / LayerNorm params stay f32 (added after f32 accumulation)
# ---------------------------------------------------------------------------
def init_attention_params(key, hidden):
    ks = jax.random.split(key, 4)
    mk = lambda k: (0.02 * jax.random.normal(k, (hidden, hidden), jnp.float32)
                    ).astype(jnp.bfloat16)
    k_w = mk(ks[1])
    v_w = mk(ks[2])
    return {
        "q_w": mk(ks[0]), "q_b": jnp.zeros((1, hidden), jnp.float32),
        "kv_w": jnp.concatenate([k_w, v_w], axis=1),            # [H, 2H] bf16
        "kv_b": jnp.zeros((1, 2 * hidden), jnp.float32),
        "o_w": mk(ks[3]), "o_b": jnp.zeros((1, hidden), jnp.float32),
        "ln_g": jnp.ones((1, hidden), jnp.float32),
        "ln_b": jnp.zeros((1, hidden), jnp.float32),
    }


def init_decoder_params(key, hidden, intermediate):
    k0, k1, k2, k3 = jax.random.split(key, 4)
    return {
        "self_attn": init_attention_params(k0, hidden),
        "cross_attn": init_attention_params(k1, hidden),
        "inter_w": (0.02 * jax.random.normal(k2, (hidden, intermediate),
                                             jnp.float32)).astype(jnp.bfloat16),
        "inter_b": jnp.zeros((1, intermediate), jnp.float32),
        "out_w": (0.02 * jax.random.normal(k3, (intermediate, hidden),
                                           jnp.float32)).astype(jnp.bfloat16),
        "out_b": jnp.zeros((1, hidden), jnp.float32),
        "out_ln_g": jnp.ones((1, hidden), jnp.float32),
        "out_ln_b": jnp.zeros((1, hidden), jnp.float32),
    }


# ---------------------------------------------------------------------------
if __name__ == "__main__":
    # NOTE: toy shapes (H=32, Dh=8, S=8) are a correctness smoke test only;
    # production sizes should keep H / Dh as multiples of 128 for lane density.
    B, S, S_ENC = 2, 8, 8
    HIDDEN, HEADS, INTER = 32, 4, 64

    key = jax.random.PRNGKey(0)
    kp, kh, ke = jax.random.split(key, 3)

    params = init_decoder_params(kp, HIDDEN, INTER)
    hidden_states = jax.random.normal(kh, (B, S, HIDDEN), jnp.float32)
    encoder_hidden_states = jax.random.normal(ke, (B, S_ENC, HIDDEN), jnp.float32)
    # 2-D encoder attention mask: second example padded after position 5
    encoder_attention_mask = jnp.array(
        [[1] * S_ENC, [1] * 5 + [0] * (S_ENC - 5)], dtype=jnp.float32)

    outputs = decoder_layer_jit(hidden_states, encoder_hidden_states,
                                encoder_attention_mask, params,
                                num_heads=HEADS)
    layer_output = jax.block_until_ready(outputs[0])
    assert layer_output.shape == (B, S, HIDDEN)
    assert bool(jnp.all(jnp.isfinite(layer_output)))
    print("KERNEL_OK")
</pallas_src>

<mosaic_0001>
module attributes {stable_mosaic.version = 11 : i64} {
  func.func @_ffn_block_kernel(%arg0: i32, %arg1: i32, %arg2: i32, %arg3: memref<1x8x32xf32, #tpu.memory_space<vmem>>, %arg4: memref<32x64xbf16, #tpu.memory_space<vmem>>, %arg5: memref<1x64xf32, #tpu.memory_space<vmem>>, %arg6: memref<64x32xbf16, #tpu.memory_space<vmem>>, %arg7: memref<1x32xf32, #tpu.memory_space<vmem>>, %arg8: memref<1x32xf32, #tpu.memory_space<vmem>>, %arg9: memref<1x32xf32, #tpu.memory_space<vmem>>, %arg10: memref<1x8x32xf32, #tpu.memory_space<vmem>>, %arg11: memref<8x32xf32, #tpu.memory_space<vmem>>) attributes {dimension_semantics = [#tpu.dimension_semantics<parallel>, #tpu.dimension_semantics<parallel>, #tpu.dimension_semantics<arbitrary>], iteration_bounds = array<i64: 2, 1, 1>, scalar_prefetch = 0 : i64, scratch_operands = 1 : i64, tpu.core_type = #tpu.core_type<tc>, window_params = [{transform_indices = @transform_0, window_bounds = array<i64: 1, 8, 32>}, {transform_indices = @transform_1, window_bounds = array<i64: 32, 64>}, {transform_indices = @transform_2, window_bounds = array<i64: 1, 64>}, {transform_indices = @transform_3, window_bounds = array<i64: 64, 32>}, {pipeline_mode = #tpu.pipeline_mode<synchronous>, transform_indices = @transform_4, window_bounds = array<i64: 1, 32>}, {pipeline_mode = #tpu.pipeline_mode<synchronous>, transform_indices = @transform_5, window_bounds = array<i64: 1, 32>}, {pipeline_mode = #tpu.pipeline_mode<synchronous>, transform_indices = @transform_6, window_bounds = array<i64: 1, 32>}, {transform_indices = @transform_7, window_bounds = array<i64: 1, 8, 32>}]} {
    %c0_i32 = arith.constant 0 : i32
    %0 = arith.cmpi eq, %arg2, %c0_i32 : i32
    %1 = arith.extui %0 : i1 to i32
    %c0_i32_0 = arith.constant 0 : i32
    %2 = arith.cmpi ne, %1, %c0_i32_0 : i32
    scf.if %2 {
      %cst_19 = arith.constant 0.000000e+00 : f32
      %28 = vector.broadcast %cst_19 : f32 to vector<8x32xf32>
      %c0_20 = arith.constant 0 : index
      %c0_21 = arith.constant 0 : index
      %29 = vector.load %arg11[%c0_20, %c0_21] : memref<8x32xf32, #tpu.memory_space<vmem>>, vector<8x32xf32>
      tpu.vector_store %arg11[%c0_20, %c0_21], %28 {strides = array<i32>} : memref<8x32xf32, #tpu.memory_space<vmem>>, vector<8x32xf32>,
    } else {
    }
    %c0 = arith.constant 0 : index
    %c0_1 = arith.constant 0 : index
    %c0_2 = arith.constant 0 : index
    %3 = vector.load %arg3[%c0, %c0_1, %c0_2] : memref<1x8x32xf32, #tpu.memory_space<vmem>>, vector<1x8x32xf32>
    %4 = vector.shape_cast %3 : vector<1x8x32xf32> to vector<8x32xf32>
    %5 = arith.truncf %4 : vector<8x32xf32> to vector<8x32xbf16>
    %c0_3 = arith.constant 0 : index
    %c0_4 = arith.constant 0 : index
    %6 = vector.load %arg4[%c0_3, %c0_4] : memref<32x64xbf16, #tpu.memory_space<vmem>>, vector<32x64xbf16>
    %cst = arith.constant dense<0.000000e+00> : vector<8x64xf32>
    %7 = tpu.matmul %5, %6, %cst {dimension_numbers = #tpu.dot_dimension_numbers<[1], [0], [0], [1], [0, 0, 1, 1], [], []>} : vector<8x32xbf16>, vector<32x64xbf16>, vector<8x64xf32> -> vector<8x64xf32>
    %c0_5 = arith.constant 0 : index
    %c0_6 = arith.constant 0 : index
    %8 = vector.load %arg5[%c0_5, %c0_6] : memref<1x64xf32, #tpu.memory_space<vmem>>, vector<1x64xf32>
    %9 = vector.broadcast %8 : vector<1x64xf32> to vector<8x64xf32>
    %10 = arith.addf %7, %9 : vector<8x64xf32>
    %cst_7 = arith.constant 5.000000e-01 : f32
    %11 = vector.broadcast %cst_7 : f32 to vector<8x64xf32>
    %12 = arith.mulf %11, %10 : vector<8x64xf32>
    %cst_8 = arith.constant 0.707106769 : f32
    %13 = vector.broadcast %cst_8 : f32 to vector<8x64xf32>
    %14 = arith.mulf %10, %13 : vector<8x64xf32>
    %15 = math.erf %14 : vector<8x64xf32>
    %cst_9 = arith.constant 1.000000e+00 : f32
    %16 = vector.broadcast %cst_9 : f32 to vector<8x64xf32>
    %17 = arith.addf %16, %15 : vector<8x64xf32>
    %18 = arith.mulf %12, %17 : vector<8x64xf32>
    %c0_10 = arith.constant 0 : index
    %c0_11 = arith.constant 0 : index
    %19 = vector.load %arg11[%c0_10, %c0_11] : memref<8x32xf32, #tpu.memory_space<vmem>>, vector<8x32xf32>
    %20 = arith.truncf %18 : vector<8x64xf32> to vector<8x64xbf16>
    %c0_12 = arith.constant 0 : index
    %c0_13 = arith.constant 0 : index
    %21 = vector.load %arg6[%c0_12, %c0_13] : memref<64x32xbf16, #tpu.memory_space<vmem>>, vector<64x32xbf16>
    %cst_14 = arith.constant dense<0.000000e+00> : vector<8x32xf32>
    %22 = tpu.matmul %20, %21, %cst_14 {dimension_numbers = #tpu.dot_dimension_numbers<[1], [0], [0], [1], [0, 0, 1, 1], [], []>} : vector<8x64xbf16>, vector<64x32xbf16>, vector<8x32xf32> -> vector<8x32xf32>
    %23 = arith.addf %19, %22 : vector<8x32xf32>
    %c0_15 = arith.constant 0 : index
    %c0_16 = arith.constant 0 : index
    %24 = vector.load %arg11[%c0_15, %c0_16] : memref<8x32xf32, #tpu.memory_space<vmem>>, vector<8x32xf32>
    tpu.vector_store %arg11[%c0_15, %c0_16], %23 {strides = array<i32>} : memref<8x32xf32, #tpu.memory_space<vmem>>, vector<8x32xf32>,
    %c0_i32_17 = arith.constant 0 : i32
    %25 = arith.cmpi eq, %arg2, %c0_i32_17 : i32
    %26 = arith.extui %25 : i1 to i32
    %c0_i32_18 = arith.constant 0 : i32
    %27 = arith.cmpi ne, %26, %c0_i32_18 : i32
    scf.if %27 {
      %c0_19 = arith.constant 0 : index
      %c0_20 = arith.constant 0 : index
      %28 = vector.load %arg11[%c0_19, %c0_20] : memref<8x32xf32, #tpu.memory_space<vmem>>, vector<8x32xf32>
      %c0_21 = arith.constant 0 : index
      %c0_22 = arith.constant 0 : index
      %29 = vector.load %arg7[%c0_21, %c0_22] : memref<1x32xf32, #tpu.memory_space<vmem>>, vector<1x32xf32>
      %30 = vector.broadcast %29 : vector<1x32xf32> to vector<8x32xf32>
      %31 = arith.addf %28, %30 : vector<8x32xf32>
      %c0_23 = arith.constant 0 : index
      %c0_24 = arith.constant 0 : index
      %c0_25 = arith.constant 0 : index
      %32 = vector.load %arg3[%c0_23, %c0_24, %c0_25] : memref<1x8x32xf32, #tpu.memory_space<vmem>>, vector<1x8x32xf32>
      %33 = vector.shape_cast %32 : vector<1x8x32xf32> to vector<8x32xf32>
      %34 = arith.addf %31, %33 : vector<8x32xf32>
      %cst_26 = arith.constant dense<0.000000e+00> : vector<8xf32>
      %35 = vector.multi_reduction <add>, %34, %cst_26 [1] : vector<8x32xf32> to vector<8xf32>
      %36 = vector.shape_cast %35 : vector<8xf32> to vector<8x1xf32>
      %cst_27 = arith.constant 3.200000e+01 : f32
      %37 = vector.broadcast %cst_27 : f32 to vector<8x1xf32>
      %38 = arith.divf %36, %37 : vector<8x1xf32>
      %39 = vector.broadcast %38 : vector<8x1xf32> to vector<8x32xf32>
      %40 = arith.subf %34, %39 : vector<8x32xf32>
      %41 = arith.mulf %40, %40 : vector<8x32xf32>
      %cst_28 = arith.constant dense<0.000000e+00> : vector<8xf32>
      %42 = vector.multi_reduction <add>, %41, %cst_28 [1] : vector<8x32xf32> to vector<8xf32>
      %43 = vector.shape_cast %42 : vector<8xf32> to vector<8x1xf32>
      %cst_29 = arith.constant 3.200000e+01 : f32
      %44 = vector.broadcast %cst_29 : f32 to vector<8x1xf32>
      %45 = arith.divf %43, %44 : vector<8x1xf32>
      %cst_30 = arith.constant 9.99999996E-13 : f32
      %46 = vector.broadcast %cst_30 : f32 to vector<8x1xf32>
      %47 = arith.addf %45, %46 : vector<8x1xf32>
      %48 = math.rsqrt %47 : vector<8x1xf32>
      %49 = vector.broadcast %48 : vector<8x1xf32> to vector<8x32xf32>
      %50 = arith.mulf %40, %49 : vector<8x32xf32>
      %c0_31 = arith.constant 0 : index
      %c0_32 = arith.constant 0 : index
      %51 = vector.load %arg8[%c0_31, %c0_32] : memref<1x32xf32, #tpu.memory_space<vmem>>, vector<1x32xf32>
      %52 = vector.broadcast %51 : vector<1x32xf32> to vector<8x32xf32>
      %53 = arith.mulf %50, %52 : vector<8x32xf32>
      %c0_33 = arith.constant 0 : index
      %c0_34 = arith.constant 0 : index
      %54 = vector.load %arg9[%c0_33, %c0_34] : memref<1x32xf32, #tpu.memory_space<vmem>>, vector<1x32xf32>
      %55 = vector.broadcast %54 : vector<1x32xf32> to vector<8x32xf32>
      %56 = arith.addf %53, %55 : vector<8x32xf32>
      %c0_35 = arith.constant 0 : index
      %c0_36 = arith.constant 0 : index
      %c0_37 = arith.constant 0 : index
      %57 = vector.load %arg10[%c0_35, %c0_36, %c0_37] : memref<1x8x32xf32, #tpu.memory_space<vmem>>, vector<1x8x32xf32>
      %58 = vector.shape_cast %57 : vector<1x8x32xf32> to vector<8x32xf32>
      %59 = vector.shape_cast %56 : vector<8x32xf32> to vector<1x8x32xf32>
      tpu.vector_store %arg10[%c0_35, %c0_36, %c0_37], %59 {strides = array<i32>} : memref<1x8x32xf32, #tpu.memory_space<vmem>>, vector<1x8x32xf32>,
    } else {
    }
    return
  }
  func.func @transform_0(%arg0: i32, %arg1: i32, %arg2: i32) -> (i32, i32, i32) {
    %c0_i32 = arith.constant 0 : i32
    %c0_i32_0 = arith.constant 0 : i32
    return %arg0, %arg1, %c0_i32 : i32, i32, i32
  }
  func.func @transform_1(%arg0: i32, %arg1: i32, %arg2: i32) -> (i32, i32) {
    %c0_i32 = arith.constant 0 : i32
    %c0_i32_0 = arith.constant 0 : i32
    return %c0_i32, %arg2 : i32, i32
  }
  func.func @transform_2(%arg0: i32, %arg1: i32, %arg2: i32) -> (i32, i32) {
    %c0_i32 = arith.constant 0 : i32
    %c0_i32_0 = arith.constant 0 : i32
    return %c0_i32, %arg2 : i32, i32
  }
  func.func @transform_3(%arg0: i32, %arg1: i32, %arg2: i32) -> (i32, i32) {
    %c0_i32 = arith.constant 0 : i32
    %c0_i32_0 = arith.constant 0 : i32
    return %arg2, %c0_i32 : i32, i32
  }
  func.func @transform_4(%arg0: i32, %arg1: i32, %arg2: i32) -> (i32, i32) {
    %c0_i32 = arith.constant 0 : i32
    %c0_i32_0 = arith.constant 0 : i32
    %c0_i32_1 = arith.constant 0 : i32
    return %c0_i32, %c0_i32_0 : i32, i32
  }
  func.func @transform_5(%arg0: i32, %arg1: i32, %arg2: i32) -> (i32, i32) {
    %c0_i32 = arith.constant 0 : i32
    %c0_i32_0 = arith.constant 0 : i32
    %c0_i32_1 = arith.constant 0 : i32
    return %c0_i32, %c0_i32_0 : i32, i32
  }
  func.func @transform_6(%arg0: i32, %arg1: i32, %arg2: i32) -> (i32, i32) {
    %c0_i32 = arith.constant 0 : i32
    %c0_i32_0 = arith.constant 0 : i32
    %c0_i32_1 = arith.constant 0 : i32
    return %c0_i32, %c0_i32_0 : i32, i32
  }
  func.func @transform_7(%arg0: i32, %arg1: i32, %arg2: i32) -> (i32, i32, i32) {
    %c0_i32 = arith.constant 0 : i32
    %c0_i32_0 = arith.constant 0 : i32
    return %arg0, %arg1, %c0_i32 : i32, i32, i32
  }
}

module attributes {stable_mosaic.version = 11 : i64} {
  func.func @_attn_block_kernel(%arg0: i32, %arg1: i32, %arg2: memref<1x8x32xf32, #tpu.memory_space<vmem>>, %arg3: memref<1x8x32xf32, #tpu.memory_space<vmem>>, %arg4: memref<1x1x8xf32, #tpu.memory_space<vmem>>, %arg5: memref<32x32xbf16, #tpu.memory_space<vmem>>, %arg6: memref<1x32xf32, #tpu.memory_space<vmem>>, %arg7: memref<32x64xbf16, #tpu.memory_space<vmem>>, %arg8: memref<1x64xf32, #tpu.memory_space<vmem>>, %arg9: memref<32x32xbf16, #tpu.memory_space<vmem>>, %arg10: memref<1x32xf32, #tpu.memory_space<vmem>>, %arg11: memref<1x32xf32, #tpu.memory_space<vmem>>, %arg12: memref<1x32xf32, #tpu.memory_space<vmem>>, %arg13: memref<1x8x32xf32, #tpu.memory_space<vmem>>, %arg14: memref<8x32xf32, #tpu.memory_space<vmem>>) attributes {dimension_semantics = [#tpu.dimension_semantics<parallel>, #tpu.dimension_semantics<parallel>], iteration_bounds = array<i64: 2, 1>, scalar_prefetch = 0 : i64, scratch_operands = 1 : i64, tpu.core_type = #tpu.core_type<tc>, window_params = [{transform_indices = @transform_0, window_bounds = array<i64: 1, 8, 32>}, {transform_indices = @transform_1, window_bounds = array<i64: 1, 8, 32>}, {transform_indices = @transform_2, window_bounds = array<i64: 1, 1, 8>}, {pipeline_mode = #tpu.pipeline_mode<synchronous>, transform_indices = @transform_3, window_bounds = array<i64: 32, 32>}, {pipeline_mode = #tpu.pipeline_mode<synchronous>, transform_indices = @transform_4, window_bounds = array<i64: 1, 32>}, {pipeline_mode = #tpu.pipeline_mode<synchronous>, transform_indices = @transform_5, window_bounds = array<i64: 32, 64>}, {pipeline_mode = #tpu.pipeline_mode<synchronous>, transform_indices = @transform_6, window_bounds = array<i64: 1, 64>}, {pipeline_mode = #tpu.pipeline_mode<synchronous>, transform_indices = @transform_7, window_bounds = array<i64: 32, 32>}, {pipeline_mode = #tpu.pipeline_mode<synchronous>, transform_indices = @transform_8, window_bounds = array<i64: 1, 32>}, {pipeline_mode = #tpu.pipeline_mode<synchronous>, transform_indices = @transform_9, window_bounds = array<i64: 1, 32>}, {pipeline_mode = #tpu.pipeline_mode<synchronous>, transform_indices = @transform_10, window_bounds = array<i64: 1, 32>}, {transform_indices = @transform_11, window_bounds = array<i64: 1, 8, 32>}]} {
    %c0 = arith.constant 0 : index
    %c0_0 = arith.constant 0 : index
    %c0_1 = arith.constant 0 : index
    %0 = vector.load %arg2[%c0, %c0_0, %c0_1] : memref<1x8x32xf32, #tpu.memory_space<vmem>>, vector<1x8x32xf32>
    %1 = vector.shape_cast %0 : vector<1x8x32xf32> to vector<8x32xf32>
    %c0_2 = arith.constant 0 : index
    %c0_3 = arith.constant 0 : index
    %c0_4 = arith.constant 0 : index
    %2 = vector.load %arg3[%c0_2, %c0_3, %c0_4] : memref<1x8x32xf32, #tpu.memory_space<vmem>>, vector<1x8x32xf32>
    %3 = vector.shape_cast %2 : vector<1x8x32xf32> to vector<8x32xf32>
    %4 = arith.truncf %1 : vector<8x32xf32> to vector<8x32xbf16>
    %c0_5 = arith.constant 0 : index
    %c0_6 = arith.constant 0 : index
    %5 = vector.load %arg5[%c0_5, %c0_6] : memref<32x32xbf16, #tpu.memory_space<vmem>>, vector<32x32xbf16>
    %cst = arith.constant dense<0.000000e+00> : vector<8x32xf32>
    %6 = tpu.matmul %4, %5, %cst {dimension_numbers = #tpu.dot_dimension_numbers<[1], [0], [0], [1], [0, 0, 1, 1], [], []>} : vector<8x32xbf16>, vector<32x32xbf16>, vector<8x32xf32> -> vector<8x32xf32>
    %c0_7 = arith.constant 0 : index
    %c0_8 = arith.constant 0 : index
    %7 = vector.load %arg6[%c0_7, %c0_8] : memref<1x32xf32, #tpu.memory_space<vmem>>, vector<1x32xf32>
    %8 = vector.broadcast %7 : vector<1x32xf32> to vector<8x32xf32>
    %9 = arith.addf %6, %8 : vector<8x32xf32>
    %cst_9 = arith.constant 0.353553385 : f32
    %10 = vector.broadcast %cst_9 : f32 to vector<8x32xf32>
    %11 = arith.mulf %9, %10 : vector<8x32xf32>
    %12 = arith.truncf %11 : vector<8x32xf32> to vector<8x32xbf16>
    %13 = arith.truncf %3 : vector<8x32xf32> to vector<8x32xbf16>
    %c0_10 = arith.constant 0 : index
    %c0_11 = arith.constant 0 : index
    %14 = vector.load %arg7[%c0_10, %c0_11] : memref<32x64xbf16, #tpu.memory_space<vmem>>, vector<32x64xbf16>
    %cst_12 = arith.constant dense<0.000000e+00> : vector<8x64xf32>
    %15 = tpu.matmul %13, %14, %cst_12 {dimension_numbers = #tpu.dot_dimension_numbers<[1], [0], [0], [1], [0, 0, 1, 1], [], []>} : vector<8x32xbf16>, vector<32x64xbf16>, vector<8x64xf32> -> vector<8x64xf32>
    %c0_13 = arith.constant 0 : index
    %c0_14 = arith.constant 0 : index
    %16 = vector.load %arg8[%c0_13, %c0_14] : memref<1x64xf32, #tpu.memory_space<vmem>>, vector<1x64xf32>
    %17 = vector.broadcast %16 : vector<1x64xf32> to vector<8x64xf32>
    %18 = arith.addf %15, %17 : vector<8x64xf32>
    %19 = vector.extract_strided_slice %18 {offsets = [0, 0], sizes = [8, 32], strides = [1, 1]} : vector<8x64xf32> to vector<8x32xf32>
    %20 = arith.truncf %19 : vector<8x32xf32> to vector<8x32xbf16>
    %21 = vector.extract_strided_slice %18 {offsets = [0, 32], sizes = [8, 32], strides = [1, 1]} : vector<8x64xf32> to vector<8x32xf32>
    %22 = arith.truncf %21 : vector<8x32xf32> to vector<8x32xbf16>
    %c0_15 = arith.constant 0 : index
    %c0_16 = arith.constant 0 : index
    %c0_17 = arith.constant 0 : index
    %23 = vector.load %arg4[%c0_15, %c0_16, %c0_17] : memref<1x1x8xf32, #tpu.memory_space<vmem>>, vector<1x1x8xf32>
    %24 = vector.shape_cast %23 : vector<1x1x8xf32> to vector<1x8xf32>
    %cst_18 = arith.constant 1.000000e+00 : f32
    %25 = vector.broadcast %cst_18 : f32 to vector<1x8xf32>
    %26 = arith.subf %25, %24 : vector<1x8xf32>
    %cst_19 = arith.constant -1.000000e+04 : f32
    %27 = vector.broadcast %cst_19 : f32 to vector<1x8xf32>
    %28 = arith.mulf %26, %27 : vector<1x8xf32>
    %29 = vector.extract_strided_slice %12 {offsets = [0, 0], sizes = [8, 8], strides = [1, 1]} : vector<8x32xbf16> to vector<8x8xbf16>
    %30 = vector.extract_strided_slice %20 {offsets = [0, 0], sizes = [8, 8], strides = [1, 1]} : vector<8x32xbf16> to vector<8x8xbf16>
    %31 = vector.extract_strided_slice %22 {offsets = [0, 0], sizes = [8, 8], strides = [1, 1]} : vector<8x32xbf16> to vector<8x8xbf16>
    %cst_20 = arith.constant dense<0.000000e+00> : vector<8x8xf32>
    %32 = tpu.matmul %29, %30, %cst_20 {dimension_numbers = #tpu.dot_dimension_numbers<[1], [1], [0], [0], [0, 0, 1, 0], [], []>} : vector<8x8xbf16>, vector<8x8xbf16>, vector<8x8xf32> -> vector<8x8xf32>
    %33 = vector.broadcast %28 : vector<1x8xf32> to vector<8x8xf32>
    %34 = arith.addf %32, %33 : vector<8x8xf32>
    %cst_21 = arith.constant dense<0xFF800000> : vector<8xf32>
    %35 = vector.multi_reduction <maximumf>, %34, %cst_21 [1] : vector<8x8xf32> to vector<8xf32>
    %36 = vector.shape_cast %35 : vector<8xf32> to vector<8x1xf32>
    %37 = vector.broadcast %36 : vector<8x1xf32> to vector<8x8xf32>
    %38 = arith.subf %34, %37 : vector<8x8xf32>
    %39 = math.exp %38 : vector<8x8xf32>
    %cst_22 = arith.constant dense<0.000000e+00> : vector<8xf32>
    %40 = vector.multi_reduction <add>, %39, %cst_22 [1] : vector<8x8xf32> to vector<8xf32>
    %41 = vector.shape_cast %40 : vector<8xf32> to vector<8x1xf32>
    %42 = tpu.reciprocal %41 {approx = true} : vector<8x1xf32> -> vector<8x1xf32>
    %43 = vector.broadcast %42 : vector<8x1xf32> to vector<8x8xf32>
    %44 = arith.mulf %39, %43 : vector<8x8xf32>
    %45 = arith.truncf %44 : vector<8x8xf32> to vector<8x8xbf16>
    %cst_23 = arith.constant dense<0.000000e+00> : vector<8x8xf32>
    %46 = tpu.matmul %45, %31, %cst_23 {dimension_numbers = #tpu.dot_dimension_numbers<[1], [0], [0], [1], [0, 0, 1, 1], [], []>} : vector<8x8xbf16>, vector<8x8xbf16>, vector<8x8xf32> -> vector<8x8xf32>
    %c0_24 = arith.constant 0 : index
    %c0_25 = arith.constant 0 : index
    %47 = vector.load %arg14[%c0_24, %c0_25] : memref<8x32xf32, #tpu.memory_space<vmem>>, vector<8x8xf32>
    tpu.vector_store %arg14[%c0_24, %c0_25], %46 {strides = array<i32>} : memref<8x32xf32, #tpu.memory_space<vmem>>, vector<8x8xf32>,
    %48 = vector.extract_strided_slice %12 {offsets = [0, 8], sizes = [8, 8], strides = [1, 1]} : vector<8x32xbf16> to vector<8x8xbf16>
    %49 = vector.extract_strided_slice %20 {offsets = [0, 8], sizes = [8, 8], strides = [1, 1]} : vector<8x32xbf16> to vector<8x8xbf16>
    %50 = vector.extract_strided_slice %22 {offsets = [0, 8], sizes = [8, 8], strides = [1, 1]} : vector<8x32xbf16> to vector<8x8xbf16>
    %cst_26 = arith.constant dense<0.000000e+00> : vector<8x8xf32>
    %51 = tpu.matmul %48, %49, %cst_26 {dimension_numbers = #tpu.dot_dimension_numbers<[1], [1], [0], [0], [0, 0, 1, 0], [], []>} : vector<8x8xbf16>, vector<8x8xbf16>, vector<8x8xf32> -> vector<8x8xf32>
    %52 = vector.broadcast %28 : vector<1x8xf32> to vector<8x8xf32>
    %53 = arith.addf %51, %52 : vector<8x8xf32>
    %cst_27 = arith.constant dense<0xFF800000> : vector<8xf32>
    %54 = vector.multi_reduction <maximumf>, %53, %cst_27 [1] : vector<8x8xf32> to vector<8xf32>
    %55 = vector.shape_cast %54 : vector<8xf32> to vector<8x1xf32>
    %56 = vector.broadcast %55 : vector<8x1xf32> to vector<8x8xf32>
    %57 = arith.subf %53, %56 : vector<8x8xf32>
    %58 = math.exp %57 : vector<8x8xf32>
    %cst_28 = arith.constant dense<0.000000e+00> : vector<8xf32>
    %59 = vector.multi_reduction <add>, %58, %cst_28 [1] : vector<8x8xf32> to vector<8xf32>
    %60 = vector.shape_cast %59 : vector<8xf32> to vector<8x1xf32>
    %61 = tpu.reciprocal %60 {approx = true} : vector<8x1xf32> -> vector<8x1xf32>
    %62 = vector.broadcast %61 : vector<8x1xf32> to vector<8x8xf32>
    %63 = arith.mulf %58, %62 : vector<8x8xf32>
    %64 = arith.truncf %63 : vector<8x8xf32> to vector<8x8xbf16>
    %cst_29 = arith.constant dense<0.000000e+00> : vector<8x8xf32>
    %65 = tpu.matmul %64, %50, %cst_29 {dimension_numbers = #tpu.dot_dimension_numbers<[1], [0], [0], [1], [0, 0, 1, 1], [], []>} : vector<8x8xbf16>, vector<8x8xbf16>, vector<8x8xf32> -> vector<8x8xf32>
    %c0_30 = arith.constant 0 : index
    %c8 = arith.constant 8 : index
    %66 = vector.load %arg14[%c0_30, %c8] : memref<8x32xf32, #tpu.memory_space<vmem>>, vector<8x8xf32>
    tpu.vector_store %arg14[%c0_30, %c8], %65 {strides = array<i32>} : memref<8x32xf32, #tpu.memory_space<vmem>>, vector<8x8xf32>,
    %67 = vector.extract_strided_slice %12 {offsets = [0, 16], sizes = [8, 8], strides = [1, 1]} : vector<8x32xbf16> to vector<8x8xbf16>
    %68 = vector.extract_strided_slice %20 {offsets = [0, 16], sizes = [8, 8], strides = [1, 1]} : vector<8x32xbf16> to vector<8x8xbf16>
    %69 = vector.extract_strided_slice %22 {offsets = [0, 16], sizes = [8, 8], strides = [1, 1]} : vector<8x32xbf16> to vector<8x8xbf16>
    %cst_31 = arith.constant dense<0.000000e+00> : vector<8x8xf32>
    %70 = tpu.matmul %67, %68, %cst_31 {dimension_numbers = #tpu.dot_dimension_numbers<[1], [1], [0], [0], [0, 0, 1, 0], [], []>} : vector<8x8xbf16>, vector<8x8xbf16>, vector<8x8xf32> -> vector<8x8xf32>
    %71 = vector.broadcast %28 : vector<1x8xf32> to vector<8x8xf32>
    %72 = arith.addf %70, %71 : vector<8x8xf32>
    %cst_32 = arith.constant dense<0xFF800000> : vector<8xf32>
    %73 = vector.multi_reduction <maximumf>, %72, %cst_32 [1] : vector<8x8xf32> to vector<8xf32>
    %74 = vector.shape_cast %73 : vector<8xf32> to vector<8x1xf32>
    %75 = vector.broadcast %74 : vector<8x1xf32> to vector<8x8xf32>
    %76 = arith.subf %72, %75 : vector<8x8xf32>
    %77 = math.exp %76 : vector<8x8xf32>
    %cst_33 = arith.constant dense<0.000000e+00> : vector<8xf32>
    %78 = vector.multi_reduction <add>, %77, %cst_33 [1] : vector<8x8xf32> to vector<8xf32>
    %79 = vector.shape_cast %78 : vector<8xf32> to vector<8x1xf32>
    %80 = tpu.reciprocal %79 {approx = true} : vector<8x1xf32> -> vector<8x1xf32>
    %81 = vector.broadcast %80 : vector<8x1xf32> to vector<8x8xf32>
    %82 = arith.mulf %77, %81 : vector<8x8xf32>
    %83 = arith.truncf %82 : vector<8x8xf32> to vector<8x8xbf16>
    %cst_34 = arith.constant dense<0.000000e+00> : vector<8x8xf32>
    %84 = tpu.matmul %83, %69, %cst_34 {dimension_numbers = #tpu.dot_dimension_numbers<[1], [0], [0], [1], [0, 0, 1, 1], [], []>} : vector<8x8xbf16>, vector<8x8xbf16>, vector<8x8xf32> -> vector<8x8xf32>
    %c0_35 = arith.constant 0 : index
    %c16 = arith.constant 16 : index
    %85 = vector.load %arg14[%c0_35, %c16] : memref<8x32xf32, #tpu.memory_space<vmem>>, vector<8x8xf32>
    tpu.vector_store %arg14[%c0_35, %c16], %84 {strides = array<i32>} : memref<8x32xf32, #tpu.memory_space<vmem>>, vector<8x8xf32>,
    %86 = vector.extract_strided_slice %12 {offsets = [0, 24], sizes = [8, 8], strides = [1, 1]} : vector<8x32xbf16> to vector<8x8xbf16>
    %87 = vector.extract_strided_slice %20 {offsets = [0, 24], sizes = [8, 8], strides = [1, 1]} : vector<8x32xbf16> to vector<8x8xbf16>
    %88 = vector.extract_strided_slice %22 {offsets = [0, 24], sizes = [8, 8], strides = [1, 1]} : vector<8x32xbf16> to vector<8x8xbf16>
    %cst_36 = arith.constant dense<0.000000e+00> : vector<8x8xf32>
    %89 = tpu.matmul %86, %87, %cst_36 {dimension_numbers = #tpu.dot_dimension_numbers<[1], [1], [0], [0], [0, 0, 1, 0], [], []>} : vector<8x8xbf16>, vector<8x8xbf16>, vector<8x8xf32> -> vector<8x8xf32>
    %90 = vector.broadcast %28 : vector<1x8xf32> to vector<8x8xf32>
    %91 = arith.addf %89, %90 : vector<8x8xf32>
    %cst_37 = arith.constant dense<0xFF800000> : vector<8xf32>
    %92 = vector.multi_reduction <maximumf>, %91, %cst_37 [1] : vector<8x8xf32> to vector<8xf32>
    %93 = vector.shape_cast %92 : vector<8xf32> to vector<8x1xf32>
    %94 = vector.broadcast %93 : vector<8x1xf32> to vector<8x8xf32>
    %95 = arith.subf %91, %94 : vector<8x8xf32>
    %96 = math.exp %95 : vector<8x8xf32>
    %cst_38 = arith.constant dense<0.000000e+00> : vector<8xf32>
    %97 = vector.multi_reduction <add>, %96, %cst_38 [1] : vector<8x8xf32> to vector<8xf32>
    %98 = vector.shape_cast %97 : vector<8xf32> to vector<8x1xf32>
    %99 = tpu.reciprocal %98 {approx = true} : vector<8x1xf32> -> vector<8x1xf32>
    %100 = vector.broadcast %99 : vector<8x1xf32> to vector<8x8xf32>
    %101 = arith.mulf %96, %100 : vector<8x8xf32>
    %102 = arith.truncf %101 : vector<8x8xf32> to vector<8x8xbf16>
    %cst_39 = arith.constant dense<0.000000e+00> : vector<8x8xf32>
    %103 = tpu.matmul %102, %88, %cst_39 {dimension_numbers = #tpu.dot_dimension_numbers<[1], [0], [0], [1], [0, 0, 1, 1], [], []>} : vector<8x8xbf16>, vector<8x8xbf16>, vector<8x8xf32> -> vector<8x8xf32>
    %c0_40 = arith.constant 0 : index
    %c24 = arith.constant 24 : index
    %104 = vector.load %arg14[%c0_40, %c24] : memref<8x32xf32, #tpu.memory_space<vmem>>, vector<8x8xf32>
    tpu.vector_store %arg14[%c0_40, %c24], %103 {strides = array<i32>} : memref<8x32xf32, #tpu.memory_space<vmem>>, vector<8x8xf32>,
    %c0_41 = arith.constant 0 : index
    %c0_42 = arith.constant 0 : index
    %105 = vector.load %arg14[%c0_41, %c0_42] : memref<8x32xf32, #tpu.memory_space<vmem>>, vector<8x32xf32>
    %106 = arith.truncf %105 : vector<8x32xf32> to vector<8x32xbf16>
    %c0_43 = arith.constant 0 : index
    %c0_44 = arith.constant 0 : index
    %107 = vector.load %arg9[%c0_43, %c0_44] : memref<32x32xbf16, #tpu.memory_space<vmem>>, vector<32x32xbf16>
    %cst_45 = arith.constant dense<0.000000e+00> : vector<8x32xf32>
    %108 = tpu.matmul %106, %107, %cst_45 {dimension_numbers = #tpu.dot_dimension_numbers<[1], [0], [0], [1], [0, 0, 1, 1], [], []>} : vector<8x32xbf16>, vector<32x32xbf16>, vector<8x32xf32> -> vector<8x32xf32>
    %c0_46 = arith.constant 0 : index
    %c0_47 = arith.constant 0 : index
    %109 = vector.load %arg10[%c0_46, %c0_47] : memref<1x32xf32, #tpu.memory_space<vmem>>, vector<1x32xf32>
    %110 = vector.broadcast %109 : vector<1x32xf32> to vector<8x32xf32>
    %111 = arith.addf %108, %110 : vector<8x32xf32>
    %112 = arith.addf %111, %1 : vector<8x32xf32>
    %cst_48 = arith.constant dense<0.000000e+00> : vector<8xf32>
    %113 = vector.multi_reduction <add>, %112, %cst_48 [1] : vector<8x32xf32> to vector<8xf32>
    %114 = vector.shape_cast %113 : vector<8xf32> to vector<8x1xf32>
    %cst_49 = arith.constant 3.200000e+01 : f32
    %115 = vector.broadcast %cst_49 : f32 to vector<8x1xf32>
    %116 = arith.divf %114, %115 : vector<8x1xf32>
    %117 = vector.broadcast %116 : vector<8x1xf32> to vector<8x32xf32>
    %118 = arith.subf %112, %117 : vector<8x32xf32>
    %119 = arith.mulf %118, %118 : vector<8x32xf32>
    %cst_50 = arith.constant dense<0.000000e+00> : vector<8xf32>
    %120 = vector.multi_reduction <add>, %119, %cst_50 [1] : vector<8x32xf32> to vector<8xf32>
    %121 = vector.shape_cast %120 : vector<8xf32> to vector<8x1xf32>
    %cst_51 = arith.constant 3.200000e+01 : f32
    %122 = vector.broadcast %cst_51 : f32 to vector<8x1xf32>
    %123 = arith.divf %121, %122 : vector<8x1xf32>
    %cst_52 = arith.constant 9.99999996E-13 : f32
    %124 = vector.broadcast %cst_52 : f32 to vector<8x1xf32>
    %125 = arith.addf %123, %124 : vector<8x1xf32>
    %126 = math.rsqrt %125 : vector<8x1xf32>
    %127 = vector.broadcast %126 : vector<8x1xf32> to vector<8x32xf32>
    %128 = arith.mulf %118, %127 : vector<8x32xf32>
    %c0_53 = arith.constant 0 : index
    %c0_54 = arith.constant 0 : index
    %129 = vector.load %arg11[%c0_53, %c0_54] : memref<1x32xf32, #tpu.memory_space<vmem>>, vector<1x32xf32>
    %130 = vector.broadcast %129 : vector<1x32xf32> to vector<8x32xf32>
    %131 = arith.mulf %128, %130 : vector<8x32xf32>
    %c0_55 = arith.constant 0 : index
    %c0_56 = arith.constant 0 : index
    %132 = vector.load %arg12[%c0_55, %c0_56] : memref<1x32xf32, #tpu.memory_space<vmem>>, vector<1x32xf32>
    %133 = vector.broadcast %132 : vector<1x32xf32> to vector<8x32xf32>
    %134 = arith.addf %131, %133 : vector<8x32xf32>
    %c0_57 = arith.constant 0 : index
    %c0_58 = arith.constant 0 : index
    %c0_59 = arith.constant 0 : index
    %135 = vector.load %arg13[%c0_57, %c0_58, %c0_59] : memref<1x8x32xf32, #tpu.memory_space<vmem>>, vector<1x8x32xf32>
    %136 = vector.shape_cast %135 : vector<1x8x32xf32> to vector<8x32xf32>
    %137 = vector.shape_cast %134 : vector<8x32xf32> to vector<1x8x32xf32>
    tpu.vector_store %arg13[%c0_57, %c0_58, %c0_59], %137 {strides = array<i32>} : memref<1x8x32xf32, #tpu.memory_space<vmem>>, vector<1x8x32xf32>,
    return
  }
  func.func @transform_0(%arg0: i32, %arg1: i32) -> (i32, i32, i32) {
    %c0_i32 = arith.constant 0 : i32
    %c0_i32_0 = arith.constant 0 : i32
    return %arg0, %arg1, %c0_i32 : i32, i32, i32
  }
  func.func @transform_1(%arg0: i32, %arg1: i32) -> (i32, i32, i32) {
    %c0_i32 = arith.constant 0 : i32
    %c0_i32_0 = arith.constant 0 : i32
    %c0_i32_1 = arith.constant 0 : i32
    return %arg0, %c0_i32, %c0_i32_0 : i32, i32, i32
  }
  func.func @transform_2(%arg0: i32, %arg1: i32) -> (i32, i32, i32) {
    %c0_i32 = arith.constant 0 : i32
    %c0_i32_0 = arith.constant 0 : i32
    %c0_i32_1 = arith.constant 0 : i32
    return %arg0, %c0_i32, %c0_i32_0 : i32, i32, i32
  }
  func.func @transform_3(%arg0: i32, %arg1: i32) -> (i32, i32) {
    %c0_i32 = arith.constant 0 : i32
    %c0_i32_0 = arith.constant 0 : i32
    %c0_i32_1 = arith.constant 0 : i32
    return %c0_i32, %c0_i32_0 : i32, i32
  }
  func.func @transform_4(%arg0: i32, %arg1: i32) -> (i32, i32) {
    %c0_i32 = arith.constant 0 : i32
    %c0_i32_0 = arith.constant 0 : i32
    %c0_i32_1 = arith.constant 0 : i32
    return %c0_i32, %c0_i32_0 : i32, i32
  }
  func.func @transform_5(%arg0: i32, %arg1: i32) -> (i32, i32) {
    %c0_i32 = arith.constant 0 : i32
    %c0_i32_0 = arith.constant 0 : i32
    %c0_i32_1 = arith.constant 0 : i32
    return %c0_i32, %c0_i32_0 : i32, i32
  }
  func.func @transform_6(%arg0: i32, %arg1: i32) -> (i32, i32) {
    %c0_i32 = arith.constant 0 : i32
    %c0_i32_0 = arith.constant 0 : i32
    %c0_i32_1 = arith.constant 0 : i32
    return %c0_i32, %c0_i32_0 : i32, i32
  }
  func.func @transform_7(%arg0: i32, %arg1: i32) -> (i32, i32) {
    %c0_i32 = arith.constant 0 : i32
    %c0_i32_0 = arith.constant 0 : i32
    %c0_i32_1 = arith.constant 0 : i32
    return %c0_i32, %c0_i32_0 : i32, i32
  }
  func.func @transform_8(%arg0: i32, %arg1: i32) -> (i32, i32) {
    %c0_i32 = arith.constant 0 : i32
    %c0_i32_0 = arith.constant 0 : i32
    %c0_i32_1 = arith.constant 0 : i32
    return %c0_i32, %c0_i32_0 : i32, i32
  }
  func.func @transform_9(%arg0: i32, %arg1: i32) -> (i32, i32) {
    %c0_i32 = arith.constant 0 : i32
    %c0_i32_0 = arith.constant 0 : i32
    %c0_i32_1 = arith.constant 0 : i32
    return %c0_i32, %c0_i32_0 : i32, i32
  }
  func.func @transform_10(%arg0: i32, %arg1: i32) -> (i32, i32) {
    %c0_i32 = arith.constant 0 : i32
    %c0_i32_0 = arith.constant 0 : i32
    %c0_i32_1 = arith.constant 0 : i32
    return %c0_i32, %c0_i32_0 : i32, i32
  }
  func.func @transform_11(%arg0: i32, %arg1: i32) -> (i32, i32, i32) {
    %c0_i32 = arith.constant 0 : i32
    %c0_i32_0 = arith.constant 0 : i32
    return %arg0, %arg1, %c0_i32 : i32, i32, i32
  }
}

module attributes {stable_mosaic.version = 11 : i64} {
  func.func @_attn_block_kernel(%arg0: i32, %arg1: i32, %arg2: memref<1x8x32xf32, #tpu.memory_space<vmem>>, %arg3: memref<1x8x32xf32, #tpu.memory_space<vmem>>, %arg4: memref<32x32xbf16, #tpu.memory_space<vmem>>, %arg5: memref<1x32xf32, #tpu.memory_space<vmem>>, %arg6: memref<32x64xbf16, #tpu.memory_space<vmem>>, %arg7: memref<1x64xf32, #tpu.memory_space<vmem>>, %arg8: memref<32x32xbf16, #tpu.memory_space<vmem>>, %arg9: memref<1x32xf32, #tpu.memory_space<vmem>>, %arg10: memref<1x32xf32, #tpu.memory_space<vmem>>, %arg11: memref<1x32xf32, #tpu.memory_space<vmem>>, %arg12: memref<1x8x32xf32, #tpu.memory_space<vmem>>, %arg13: memref<8x32xf32, #tpu.memory_space<vmem>>) attributes {dimension_semantics = [#tpu.dimension_semantics<parallel>, #tpu.dimension_semantics<parallel>], iteration_bounds = array<i64: 2, 1>, scalar_prefetch = 0 : i64, scratch_operands = 1 : i64, tpu.core_type = #tpu.core_type<tc>, window_params = [{transform_indices = @transform_0, window_bounds = array<i64: 1, 8, 32>}, {transform_indices = @transform_1, window_bounds = array<i64: 1, 8, 32>}, {pipeline_mode = #tpu.pipeline_mode<synchronous>, transform_indices = @transform_2, window_bounds = array<i64: 32, 32>}, {pipeline_mode = #tpu.pipeline_mode<synchronous>, transform_indices = @transform_3, window_bounds = array<i64: 1, 32>}, {pipeline_mode = #tpu.pipeline_mode<synchronous>, transform_indices = @transform_4, window_bounds = array<i64: 32, 64>}, {pipeline_mode = #tpu.pipeline_mode<synchronous>, transform_indices = @transform_5, window_bounds = array<i64: 1, 64>}, {pipeline_mode = #tpu.pipeline_mode<synchronous>, transform_indices = @transform_6, window_bounds = array<i64: 32, 32>}, {pipeline_mode = #tpu.pipeline_mode<synchronous>, transform_indices = @transform_7, window_bounds = array<i64: 1, 32>}, {pipeline_mode = #tpu.pipeline_mode<synchronous>, transform_indices = @transform_8, window_bounds = array<i64: 1, 32>}, {pipeline_mode = #tpu.pipeline_mode<synchronous>, transform_indices = @transform_9, window_bounds = array<i64: 1, 32>}, {transform_indices = @transform_10, window_bounds = array<i64: 1, 8, 32>}]} {
    %c0 = arith.constant 0 : index
    %c0_0 = arith.constant 0 : index
    %c0_1 = arith.constant 0 : index
    %0 = vector.load %arg2[%c0, %c0_0, %c0_1] : memref<1x8x32xf32, #tpu.memory_space<vmem>>, vector<1x8x32xf32>
    %1 = vector.shape_cast %0 : vector<1x8x32xf32> to vector<8x32xf32>
    %c0_2 = arith.constant 0 : index
    %c0_3 = arith.constant 0 : index
    %c0_4 = arith.constant 0 : index
    %2 = vector.load %arg3[%c0_2, %c0_3, %c0_4] : memref<1x8x32xf32, #tpu.memory_space<vmem>>, vector<1x8x32xf32>
    %3 = vector.shape_cast %2 : vector<1x8x32xf32> to vector<8x32xf32>
    %4 = arith.truncf %1 : vector<8x32xf32> to vector<8x32xbf16>
    %c0_5 = arith.constant 0 : index
    %c0_6 = arith.constant 0 : index
    %5 = vector.load %arg4[%c0_5, %c0_6] : memref<32x32xbf16, #tpu.memory_space<vmem>>, vector<32x32xbf16>
    %cst = arith.constant dense<0.000000e+00> : vector<8x32xf32>
    %6 = tpu.matmul %4, %5, %cst {dimension_numbers = #tpu.dot_dimension_numbers<[1], [0], [0], [1], [0, 0, 1, 1], [], []>} : vector<8x32xbf16>, vector<32x32xbf16>, vector<8x32xf32> -> vector<8x32xf32>
    %c0_7 = arith.constant 0 : index
    %c0_8 = arith.constant 0 : index
    %7 = vector.load %arg5[%c0_7, %c0_8] : memref<1x32xf32, #tpu.memory_space<vmem>>, vector<1x32xf32>
    %8 = vector.broadcast %7 : vector<1x32xf32> to vector<8x32xf32>
    %9 = arith.addf %6, %8 : vector<8x32xf32>
    %cst_9 = arith.constant 0.353553385 : f32
    %10 = vector.broadcast %cst_9 : f32 to vector<8x32xf32>
    %11 = arith.mulf %9, %10 : vector<8x32xf32>
    %12 = arith.truncf %11 : vector<8x32xf32> to vector<8x32xbf16>
    %13 = arith.truncf %3 : vector<8x32xf32> to vector<8x32xbf16>
    %c0_10 = arith.constant 0 : index
    %c0_11 = arith.constant 0 : index
    %14 = vector.load %arg6[%c0_10, %c0_11] : memref<32x64xbf16, #tpu.memory_space<vmem>>, vector<32x64xbf16>
    %cst_12 = arith.constant dense<0.000000e+00> : vector<8x64xf32>
    %15 = tpu.matmul %13, %14, %cst_12 {dimension_numbers = #tpu.dot_dimension_numbers<[1], [0], [0], [1], [0, 0, 1, 1], [], []>} : vector<8x32xbf16>, vector<32x64xbf16>, vector<8x64xf32> -> vector<8x64xf32>
    %c0_13 = arith.constant 0 : index
    %c0_14 = arith.constant 0 : index
    %16 = vector.load %arg7[%c0_13, %c0_14] : memref<1x64xf32, #tpu.memory_space<vmem>>, vector<1x64xf32>
    %17 = vector.broadcast %16 : vector<1x64xf32> to vector<8x64xf32>
    %18 = arith.addf %15, %17 : vector<8x64xf32>
    %19 = vector.extract_strided_slice %18 {offsets = [0, 0], sizes = [8, 32], strides = [1, 1]} : vector<8x64xf32> to vector<8x32xf32>
    %20 = arith.truncf %19 : vector<8x32xf32> to vector<8x32xbf16>
    %21 = vector.extract_strided_slice %18 {offsets = [0, 32], sizes = [8, 32], strides = [1, 1]} : vector<8x64xf32> to vector<8x32xf32>
    %22 = arith.truncf %21 : vector<8x32xf32> to vector<8x32xbf16>
    %23 = vector.extract_strided_slice %12 {offsets = [0, 0], sizes = [8, 8], strides = [1, 1]} : vector<8x32xbf16> to vector<8x8xbf16>
    %24 = vector.extract_strided_slice %20 {offsets = [0, 0], sizes = [8, 8], strides = [1, 1]} : vector<8x32xbf16> to vector<8x8xbf16>
    %25 = vector.extract_strided_slice %22 {offsets = [0, 0], sizes = [8, 8], strides = [1, 1]} : vector<8x32xbf16> to vector<8x8xbf16>
    %cst_15 = arith.constant dense<0.000000e+00> : vector<8x8xf32>
    %26 = tpu.matmul %23, %24, %cst_15 {dimension_numbers = #tpu.dot_dimension_numbers<[1], [1], [0], [0], [0, 0, 1, 0], [], []>} : vector<8x8xbf16>, vector<8x8xbf16>, vector<8x8xf32> -> vector<8x8xf32>
    %cst_16 = arith.constant dense<0xFF800000> : vector<8xf32>
    %27 = vector.multi_reduction <maximumf>, %26, %cst_16 [1] : vector<8x8xf32> to vector<8xf32>
    %28 = vector.shape_cast %27 : vector<8xf32> to vector<8x1xf32>
    %29 = vector.broadcast %28 : vector<8x1xf32> to vector<8x8xf32>
    %30 = arith.subf %26, %29 : vector<8x8xf32>
    %31 = math.exp %30 : vector<8x8xf32>
    %cst_17 = arith.constant dense<0.000000e+00> : vector<8xf32>
    %32 = vector.multi_reduction <add>, %31, %cst_17 [1] : vector<8x8xf32> to vector<8xf32>
    %33 = vector.shape_cast %32 : vector<8xf32> to vector<8x1xf32>
    %34 = tpu.reciprocal %33 {approx = true} : vector<8x1xf32> -> vector<8x1xf32>
    %35 = vector.broadcast %34 : vector<8x1xf32> to vector<8x8xf32>
    %36 = arith.mulf %31, %35 : vector<8x8xf32>
    %37 = arith.truncf %36 : vector<8x8xf32> to vector<8x8xbf16>
    %cst_18 = arith.constant dense<0.000000e+00> : vector<8x8xf32>
    %38 = tpu.matmul %37, %25, %cst_18 {dimension_numbers = #tpu.dot_dimension_numbers<[1], [0], [0], [1], [0, 0, 1, 1], [], []>} : vector<8x8xbf16>, vector<8x8xbf16>, vector<8x8xf32> -> vector<8x8xf32>
    %c0_19 = arith.constant 0 : index
    %c0_20 = arith.constant 0 : index
    %39 = vector.load %arg13[%c0_19, %c0_20] : memref<8x32xf32, #tpu.memory_space<vmem>>, vector<8x8xf32>
    tpu.vector_store %arg13[%c0_19, %c0_20], %38 {strides = array<i32>} : memref<8x32xf32, #tpu.memory_space<vmem>>, vector<8x8xf32>,
    %40 = vector.extract_strided_slice %12 {offsets = [0, 8], sizes = [8, 8], strides = [1, 1]} : vector<8x32xbf16> to vector<8x8xbf16>
    %41 = vector.extract_strided_slice %20 {offsets = [0, 8], sizes = [8, 8], strides = [1, 1]} : vector<8x32xbf16> to vector<8x8xbf16>
    %42 = vector.extract_strided_slice %22 {offsets = [0, 8], sizes = [8, 8], strides = [1, 1]} : vector<8x32xbf16> to vector<8x8xbf16>
    %cst_21 = arith.constant dense<0.000000e+00> : vector<8x8xf32>
    %43 = tpu.matmul %40, %41, %cst_21 {dimension_numbers = #tpu.dot_dimension_numbers<[1], [1], [0], [0], [0, 0, 1, 0], [], []>} : vector<8x8xbf16>, vector<8x8xbf16>, vector<8x8xf32> -> vector<8x8xf32>
    %cst_22 = arith.constant dense<0xFF800000> : vector<8xf32>
    %44 = vector.multi_reduction <maximumf>, %43, %cst_22 [1] : vector<8x8xf32> to vector<8xf32>
    %45 = vector.shape_cast %44 : vector<8xf32> to vector<8x1xf32>
    %46 = vector.broadcast %45 : vector<8x1xf32> to vector<8x8xf32>
    %47 = arith.subf %43, %46 : vector<8x8xf32>
    %48 = math.exp %47 : vector<8x8xf32>
    %cst_23 = arith.constant dense<0.000000e+00> : vector<8xf32>
    %49 = vector.multi_reduction <add>, %48, %cst_23 [1] : vector<8x8xf32> to vector<8xf32>
    %50 = vector.shape_cast %49 : vector<8xf32> to vector<8x1xf32>
    %51 = tpu.reciprocal %50 {approx = true} : vector<8x1xf32> -> vector<8x1xf32>
    %52 = vector.broadcast %51 : vector<8x1xf32> to vector<8x8xf32>
    %53 = arith.mulf %48, %52 : vector<8x8xf32>
    %54 = arith.truncf %53 : vector<8x8xf32> to vector<8x8xbf16>
    %cst_24 = arith.constant dense<0.000000e+00> : vector<8x8xf32>
    %55 = tpu.matmul %54, %42, %cst_24 {dimension_numbers = #tpu.dot_dimension_numbers<[1], [0], [0], [1], [0, 0, 1, 1], [], []>} : vector<8x8xbf16>, vector<8x8xbf16>, vector<8x8xf32> -> vector<8x8xf32>
    %c0_25 = arith.constant 0 : index
    %c8 = arith.constant 8 : index
    %56 = vector.load %arg13[%c0_25, %c8] : memref<8x32xf32, #tpu.memory_space<vmem>>, vector<8x8xf32>
    tpu.vector_store %arg13[%c0_25, %c8], %55 {strides = array<i32>} : memref<8x32xf32, #tpu.memory_space<vmem>>, vector<8x8xf32>,
    %57 = vector.extract_strided_slice %12 {offsets = [0, 16], sizes = [8, 8], strides = [1, 1]} : vector<8x32xbf16> to vector<8x8xbf16>
    %58 = vector.extract_strided_slice %20 {offsets = [0, 16], sizes = [8, 8], strides = [1, 1]} : vector<8x32xbf16> to vector<8x8xbf16>
    %59 = vector.extract_strided_slice %22 {offsets = [0, 16], sizes = [8, 8], strides = [1, 1]} : vector<8x32xbf16> to vector<8x8xbf16>
    %cst_26 = arith.constant dense<0.000000e+00> : vector<8x8xf32>
    %60 = tpu.matmul %57, %58, %cst_26 {dimension_numbers = #tpu.dot_dimension_numbers<[1], [1], [0], [0], [0, 0, 1, 0], [], []>} : vector<8x8xbf16>, vector<8x8xbf16>, vector<8x8xf32> -> vector<8x8xf32>
    %cst_27 = arith.constant dense<0xFF800000> : vector<8xf32>
    %61 = vector.multi_reduction <maximumf>, %60, %cst_27 [1] : vector<8x8xf32> to vector<8xf32>
    %62 = vector.shape_cast %61 : vector<8xf32> to vector<8x1xf32>
    %63 = vector.broadcast %62 : vector<8x1xf32> to vector<8x8xf32>
    %64 = arith.subf %60, %63 : vector<8x8xf32>
    %65 = math.exp %64 : vector<8x8xf32>
    %cst_28 = arith.constant dense<0.000000e+00> : vector<8xf32>
    %66 = vector.multi_reduction <add>, %65, %cst_28 [1] : vector<8x8xf32> to vector<8xf32>
    %67 = vector.shape_cast %66 : vector<8xf32> to vector<8x1xf32>
    %68 = tpu.reciprocal %67 {approx = true} : vector<8x1xf32> -> vector<8x1xf32>
    %69 = vector.broadcast %68 : vector<8x1xf32> to vector<8x8xf32>
    %70 = arith.mulf %65, %69 : vector<8x8xf32>
    %71 = arith.truncf %70 : vector<8x8xf32> to vector<8x8xbf16>
    %cst_29 = arith.constant dense<0.000000e+00> : vector<8x8xf32>
    %72 = tpu.matmul %71, %59, %cst_29 {dimension_numbers = #tpu.dot_dimension_numbers<[1], [0], [0], [1], [0, 0, 1, 1], [], []>} : vector<8x8xbf16>, vector<8x8xbf16>, vector<8x8xf32> -> vector<8x8xf32>
    %c0_30 = arith.constant 0 : index
    %c16 = arith.constant 16 : index
    %73 = vector.load %arg13[%c0_30, %c16] : memref<8x32xf32, #tpu.memory_space<vmem>>, vector<8x8xf32>
    tpu.vector_store %arg13[%c0_30, %c16], %72 {strides = array<i32>} : memref<8x32xf32, #tpu.memory_space<vmem>>, vector<8x8xf32>,
    %74 = vector.extract_strided_slice %12 {offsets = [0, 24], sizes = [8, 8], strides = [1, 1]} : vector<8x32xbf16> to vector<8x8xbf16>
    %75 = vector.extract_strided_slice %20 {offsets = [0, 24], sizes = [8, 8], strides = [1, 1]} : vector<8x32xbf16> to vector<8x8xbf16>
    %76 = vector.extract_strided_slice %22 {offsets = [0, 24], sizes = [8, 8], strides = [1, 1]} : vector<8x32xbf16> to vector<8x8xbf16>
    %cst_31 = arith.constant dense<0.000000e+00> : vector<8x8xf32>
    %77 = tpu.matmul %74, %75, %cst_31 {dimension_numbers = #tpu.dot_dimension_numbers<[1], [1], [0], [0], [0, 0, 1, 0], [], []>} : vector<8x8xbf16>, vector<8x8xbf16>, vector<8x8xf32> -> vector<8x8xf32>
    %cst_32 = arith.constant dense<0xFF800000> : vector<8xf32>
    %78 = vector.multi_reduction <maximumf>, %77, %cst_32 [1] : vector<8x8xf32> to vector<8xf32>
    %79 = vector.shape_cast %78 : vector<8xf32> to vector<8x1xf32>
    %80 = vector.broadcast %79 : vector<8x1xf32> to vector<8x8xf32>
    %81 = arith.subf %77, %80 : vector<8x8xf32>
    %82 = math.exp %81 : vector<8x8xf32>
    %cst_33 = arith.constant dense<0.000000e+00> : vector<8xf32>
    %83 = vector.multi_reduction <add>, %82, %cst_33 [1] : vector<8x8xf32> to vector<8xf32>
    %84 = vector.shape_cast %83 : vector<8xf32> to vector<8x1xf32>
    %85 = tpu.reciprocal %84 {approx = true} : vector<8x1xf32> -> vector<8x1xf32>
    %86 = vector.broadcast %85 : vector<8x1xf32> to vector<8x8xf32>
    %87 = arith.mulf %82, %86 : vector<8x8xf32>
    %88 = arith.truncf %87 : vector<8x8xf32> to vector<8x8xbf16>
    %cst_34 = arith.constant dense<0.000000e+00> : vector<8x8xf32>
    %89 = tpu.matmul %88, %76, %cst_34 {dimension_numbers = #tpu.dot_dimension_numbers<[1], [0], [0], [1], [0, 0, 1, 1], [], []>} : vector<8x8xbf16>, vector<8x8xbf16>, vector<8x8xf32> -> vector<8x8xf32>
    %c0_35 = arith.constant 0 : index
    %c24 = arith.constant 24 : index
    %90 = vector.load %arg13[%c0_35, %c24] : memref<8x32xf32, #tpu.memory_space<vmem>>, vector<8x8xf32>
    tpu.vector_store %arg13[%c0_35, %c24], %89 {strides = array<i32>} : memref<8x32xf32, #tpu.memory_space<vmem>>, vector<8x8xf32>,
    %c0_36 = arith.constant 0 : index
    %c0_37 = arith.constant 0 : index
    %91 = vector.load %arg13[%c0_36, %c0_37] : memref<8x32xf32, #tpu.memory_space<vmem>>, vector<8x32xf32>
    %92 = arith.truncf %91 : vector<8x32xf32> to vector<8x32xbf16>
    %c0_38 = arith.constant 0 : index
    %c0_39 = arith.constant 0 : index
    %93 = vector.load %arg8[%c0_38, %c0_39] : memref<32x32xbf16, #tpu.memory_space<vmem>>, vector<32x32xbf16>
    %cst_40 = arith.constant dense<0.000000e+00> : vector<8x32xf32>
    %94 = tpu.matmul %92, %93, %cst_40 {dimension_numbers = #tpu.dot_dimension_numbers<[1], [0], [0], [1], [0, 0, 1, 1], [], []>} : vector<8x32xbf16>, vector<32x32xbf16>, vector<8x32xf32> -> vector<8x32xf32>
    %c0_41 = arith.constant 0 : index
    %c0_42 = arith.constant 0 : index
    %95 = vector.load %arg9[%c0_41, %c0_42] : memref<1x32xf32, #tpu.memory_space<vmem>>, vector<1x32xf32>
    %96 = vector.broadcast %95 : vector<1x32xf32> to vector<8x32xf32>
    %97 = arith.addf %94, %96 : vector<8x32xf32>
    %98 = arith.addf %97, %1 : vector<8x32xf32>
    %cst_43 = arith.constant dense<0.000000e+00> : vector<8xf32>
    %99 = vector.multi_reduction <add>, %98, %cst_43 [1] : vector<8x32xf32> to vector<8xf32>
    %100 = vector.shape_cast %99 : vector<8xf32> to vector<8x1xf32>
    %cst_44 = arith.constant 3.200000e+01 : f32
    %101 = vector.broadcast %cst_44 : f32 to vector<8x1xf32>
    %102 = arith.divf %100, %101 : vector<8x1xf32>
    %103 = vector.broadcast %102 : vector<8x1xf32> to vector<8x32xf32>
    %104 = arith.subf %98, %103 : vector<8x32xf32>
    %105 = arith.mulf %104, %104 : vector<8x32xf32>
    %cst_45 = arith.constant dense<0.000000e+00> : vector<8xf32>
    %106 = vector.multi_reduction <add>, %105, %cst_45 [1] : vector<8x32xf32> to vector<8xf32>
    %107 = vector.shape_cast %106 : vector<8xf32> to vector<8x1xf32>
    %cst_46 = arith.constant 3.200000e+01 : f32
    %108 = vector.broadcast %cst_46 : f32 to vector<8x1xf32>
    %109 = arith.divf %107, %108 : vector<8x1xf32>
    %cst_47 = arith.constant 9.99999996E-13 : f32
    %110 = vector.broadcast %cst_47 : f32 to vector<8x1xf32>
    %111 = arith.addf %109, %110 : vector<8x1xf32>
    %112 = math.rsqrt %111 : vector<8x1xf32>
    %113 = vector.broadcast %112 : vector<8x1xf32> to vector<8x32xf32>
    %114 = arith.mulf %104, %113 : vector<8x32xf32>
    %c0_48 = arith.constant 0 : index
    %c0_49 = arith.constant 0 : index
    %115 = vector.load %arg10[%c0_48, %c0_49] : memref<1x32xf32, #tpu.memory_space<vmem>>, vector<1x32xf32>
    %116 = vector.broadcast %115 : vector<1x32xf32> to vector<8x32xf32>
    %117 = arith.mulf %114, %116 : vector<8x32xf32>
    %c0_50 = arith.constant 0 : index
    %c0_51 = arith.constant 0 : index
    %118 = vector.load %arg11[%c0_50, %c0_51] : memref<1x32xf32, #tpu.memory_space<vmem>>, vector<1x32xf32>
    %119 = vector.broadcast %118 : vector<1x32xf32> to vector<8x32xf32>
    %120 = arith.addf %117, %119 : vector<8x32xf32>
    %c0_52 = arith.constant 0 : index
    %c0_53 = arith.constant 0 : index
    %c0_54 = arith.constant 0 : index
    %121 = vector.load %arg12[%c0_52, %c0_53, %c0_54] : memref<1x8x32xf32, #tpu.memory_space<vmem>>, vector<1x8x32xf32>
    %122 = vector.shape_cast %121 : vector<1x8x32xf32> to vector<8x32xf32>
    %123 = vector.shape_cast %120 : vector<8x32xf32> to vector<1x8x32xf32>
    tpu.vector_store %arg12[%c0_52, %c0_53, %c0_54], %123 {strides = array<i32>} : memref<1x8x32xf32, #tpu.memory_space<vmem>>, vector<1x8x32xf32>,
    return
  }
  func.func @transform_0(%arg0: i32, %arg1: i32) -> (i32, i32, i32) {
    %c0_i32 = arith.constant 0 : i32
    %c0_i32_0 = arith.constant 0 : i32
    return %arg0, %arg1, %c0_i32 : i32, i32, i32
  }
  func.func @transform_1(%arg0: i32, %arg1: i32) -> (i32, i32, i32) {
    %c0_i32 = arith.constant 0 : i32
    %c0_i32_0 = arith.constant 0 : i32
    %c0_i32_1 = arith.constant 0 : i32
    return %arg0, %c0_i32, %c0_i32_0 : i32, i32, i32
  }
  func.func @transform_2(%arg0: i32, %arg1: i32) -> (i32, i32) {
    %c0_i32 = arith.constant 0 : i32
    %c0_i32_0 = arith.constant 0 : i32
    %c0_i32_1 = arith.constant 0 : i32
    return %c0_i32, %c0_i32_0 : i32, i32
  }
  func.func @transform_3(%arg0: i32, %arg1: i32) -> (i32, i32) {
    %c0_i32 = arith.constant 0 : i32
    %c0_i32_0 = arith.constant 0 : i32
    %c0_i32_1 = arith.constant 0 : i32
    return %c0_i32, %c0_i32_0 : i32, i32
  }
  func.func @transform_4(%arg0: i32, %arg1: i32) -> (i32, i32) {
    %c0_i32 = arith.constant 0 : i32
    %c0_i32_0 = arith.constant 0 : i32
    %c0_i32_1 = arith.constant 0 : i32
    return %c0_i32, %c0_i32_0 : i32, i32
  }
  func.func @transform_5(%arg0: i32, %arg1: i32) -> (i32, i32) {
    %c0_i32 = arith.constant 0 : i32
    %c0_i32_0 = arith.constant 0 : i32
    %c0_i32_1 = arith.constant 0 : i32
    return %c0_i32, %c0_i32_0 : i32, i32
  }
  func.func @transform_6(%arg0: i32, %arg1: i32) -> (i32, i32) {
    %c0_i32 = arith.constant 0 : i32
    %c0_i32_0 = arith.constant 0 : i32
    %c0_i32_1 = arith.constant 0 : i32
    return %c0_i32, %c0_i32_0 : i32, i32
  }
  func.func @transform_7(%arg0: i32, %arg1: i32) -> (i32, i32) {
    %c0_i32 = arith.constant 0 : i32
    %c0_i32_0 = arith.constant 0 : i32
    %c0_i32_1 = arith.constant 0 : i32
    return %c0_i32, %c0_i32_0 : i32, i32
  }
  func.func @transform_8(%arg0: i32, %arg1: i32) -> (i32, i32) {
    %c0_i32 = arith.constant 0 : i32
    %c0_i32_0 = arith.constant 0 : i32
    %c0_i32_1 = arith.constant 0 : i32
    return %c0_i32, %c0_i32_0 : i32, i32
  }
  func.func @transform_9(%arg0: i32, %arg1: i32) -> (i32, i32) {
    %c0_i32 = arith.constant 0 : i32
    %c0_i32_0 = arith.constant 0 : i32
    %c0_i32_1 = arith.constant 0 : i32
    return %c0_i32, %c0_i32_0 : i32, i32
  }
  func.func @transform_10(%arg0: i32, %arg1: i32) -> (i32, i32, i32) {
    %c0_i32 = arith.constant 0 : i32
    %c0_i32_0 = arith.constant 0 : i32
    return %arg0, %arg1, %c0_i32 : i32, i32, i32
  }
}

</mosaic_0001>

<llo_original>
// kernel: decoder_layer.5
$region0: #{decoder_layer.5}
  #allocation0 [shape = 'u32[]', space=smem, size = 0x4, offset = 0x4, fixed_abs, tag = 'smem constant byte address 0x4 - core index']
  #allocation1 [shape = 'u32[144,128]{1,0:T(1,128)}', space=vmem, size = 0x12000, scoped, tag = 'internal scratch']
  #allocation2 [shape = 'f32[8,32]{1,0:T(8,128)}', space=vmem, size = 0x1000, scoped, tag = 'scratch operand']
  %s0 = inlined_call_operand.vmem [shape: f32[2,8,32], index: 0, kind: input, shape index: {}]
  %s1 = inlined_call_operand.vmem [shape: bf16[32,64], index: 1, kind: input, shape index: {}]
  %s2 = inlined_call_operand.vmem [shape: f32[1,64], index: 2, kind: input, shape index: {}]
  %s3 = inlined_call_operand.vmem [shape: bf16[64,32], index: 3, kind: input, shape index: {}]
  %s4 = inlined_call_operand.vmem [shape: f32[1,32], index: 4, kind: input, shape index: {}]
  %s5 = inlined_call_operand.vmem [shape: f32[1,32], index: 5, kind: input, shape index: {}]
  %s6 = inlined_call_operand.vmem [shape: f32[1,32], index: 6, kind: input, shape index: {}]
  %s7 = inlined_call_operand.hbm [shape: f32[2,8,32], index: 7, kind: output, shape index: {}]
  %s8 = sld [smem:[#allocation0]]
  $region69: #{decoder_layer.5} parent=0
    _
  %s10 = ssub.s32 1, %s8
  %s11 = scalar_select 0, %s10, %s8
  $region1: #{decoder_layer.5} parent=0
    #allocation3 [shape = 'u8[8192]{0}', space=vmem, size = 0x2000, scoped, tag = 'output window, operand 0']
    #allocation4 [shape = 's32[2]{0}', space=sflag, size = 0x8, scoped, tag = 'scoped memory for decoder_layer.5']
    %12 = vsyncpa [#allocation4], 0
    %s13 = scalar_lea.sflag [#allocation4], 1
    %14 = vsyncpa %s13, 0
    loop: start=0, step=1, limit=4
    $region2: #{decoder_layer.5} parent=1 // loop_pre_header
      _
    $region3: #{decoder_layer.5} parent=1 // loop_header
      %s16 = sphi 0, %s20
      %p17 = scmp.ge.s32.totalorder %s16, 4
      %s23 = sphi 0, %s42
      %s24 = sphi 0, %s38
      %s25 = sphi 0, %s34
      %s26 = sphi 0, %s23
      %s27 = sphi 0, %s24
      %s28 = sphi 0, %s25
      %s29 = sphi 0, %s26
      %s30 = sphi 0, %s27
      %s31 = sphi 0, %s28
      %s47 = sphi 0, %s49
      %s50 = sphi 0, %s47
      %s51 = sphi 0, %s50
      %s67 = sphi 0, %s51
      %s73 = sphi 0, %s75
      %s76 = sphi 0, %s73
      %s77 = sphi 0, %s76
      %s93 = sphi 0, %s77
      %s99 = sphi 0, %s101
      %s102 = sphi 0, %s99
      %s103 = sphi 0, %s102
      %s119 = sphi 0, %s103
      %s125 = sphi 0, %s127
      %s128 = sphi 0, %s125
      %s129 = sphi 0, %s128
      %s145 = sphi 0, %s129
      %s149 = sphi 0, %s149
      %s151 = sphi 0, %s149
      %s152 = sphi 0, %s151
      %s166 = sphi 0, %s152
      %s170 = sphi 0, %s170
      %s172 = sphi 0, %s170
      %s173 = sphi 0, %s172
      %s187 = sphi 0, %s173
      %s191 = sphi 0, %s191
      %s193 = sphi 0, %s191
      %s194 = sphi 0, %s193
      %s208 = sphi 0, %s194
      %s216 = sphi 0, %s218
      %s219 = sphi 0, %s216
      %s220 = sphi 0, %s219
      %s236 = sphi 0, %s220
    $region4: #{decoder_layer.5} parent=1 // loop_header_branch
      %19 = sbr.rel (%p17) target = $region8
    $region5: #{decoder_layer.5} parent=1 // loop_body
      %s21 = ssub.s32 %s16, 1
      %s22 = ssub.s32 %s16, 2
      %s32 = sadd.s32 1, %s25
      %p33 = scmp.ge.s32.totalorder %s32, 1
      %s34 = scalar_select %p33, 0, %s32
      %s35 = sadd.s32 1, %s24
      %s36 = scalar_select %p33, %s35, %s24
      %p37 = scmp.ge.s32.totalorder %s36, 1
      %s38 = scalar_select %p37, 0, %s36
      %s39 = sadd.s32 1, %s23
      %s40 = scalar_select %p37, %s39, %s23
      %p41 = scmp.ge.s32.totalorder %s40, 2
      %s42 = scalar_select %p41, 0, %s40
      %s43 = ssub.s32 %s23, %s42
      %s44 = ssub.s32 %s24, %s38
      %s45 = sor.u32 %s43, %s44
      %p46 = scmp.eq.s32.totalorder %s45, 0
      %s48 = sadd.s32 %s47, 1
      %s49 = scalar_select %p46, %s47, %s48
      %p52 = pneg %p46
      %p53 = scmp.eq.s32.totalorder %s16, 1
      %p54 = por %p52, %p53
      %p55 = scmp.ne.s32.totalorder %s47, %s50
      %p56 = scmp.eq.s32.totalorder %s16, 0
      %p57 = por %p55, %p56
      %p58 = scmp.ne.s32.totalorder %s47, %s50
      %p59 = scmp.eq.s32.totalorder %s21, 1
      %p60 = por %p58, %p59
      %p61 = scmp.ne.s32.totalorder %s50, %s51
      %p62 = scmp.eq.s32.totalorder %s21, 0
      %p63 = por %p61, %p62
      %p64 = scmp.ne.s32.totalorder %s50, %s51
      %p65 = scmp.eq.s32.totalorder %s22, 1
      %p66 = por %p64, %p65
      %p68 = scmp.ne.s32.totalorder %s51, %s67
      %p69 = scmp.eq.s32.totalorder %s22, 0
      %p70 = por %p68, %p69
      %s71 = ssub.s32 %s25, %s34
      %p72 = scmp.eq.s32.totalorder %s71, 0
      %s74 = sadd.s32 %s73, 1
      %s75 = scalar_select %p72, %s73, %s74
      %p78 = pneg %p72
      %p79 = scmp.eq.s32.totalorder %s16, 1
      %p80 = por %p78, %p79
      %p81 = scmp.ne.s32.totalorder %s73, %s76
      %p82 = scmp.eq.s32.totalorder %s16, 0
      %p83 = por %p81, %p82
      %p84 = scmp.ne.s32.totalorder %s73, %s76
      %p85 = scmp.eq.s32.totalorder %s21, 1
      %p86 = por %p84, %p85
      %p87 = scmp.ne.s32.totalorder %s76, %s77
      %p88 = scmp.eq.s32.totalorder %s21, 0
      %p89 = por %p87, %p88
      %p90 = scmp.ne.s32.totalorder %s76, %s77
      %p91 = scmp.eq.s32.totalorder %s22, 1
      %p92 = por %p90, %p91
      %p94 = scmp.ne.s32.totalorder %s77, %s93
      %p95 = scmp.eq.s32.totalorder %s22, 0
      %p96 = por %p94, %p95
      %s97 = ssub.s32 %s25, %s34
      %p98 = scmp.eq.s32.totalorder %s97, 0
      %s100 = sadd.s32 %s99, 1
      %s101 = scalar_select %p98, %s99, %s100
      %p104 = pneg %p98
      %p105 = scmp.eq.s32.totalorder %s16, 1
      %p106 = por %p104, %p105
      %p107 = scmp.ne.s32.totalorder %s99, %s102
      %p108 = scmp.eq.s32.totalorder %s16, 0
      %p109 = por %p107, %p108
      %p110 = scmp.ne.s32.totalorder %s99, %s102
      %p111 = scmp.eq.s32.totalorder %s21, 1
      %p112 = por %p110, %p111
      %p113 = scmp.ne.s32.totalorder %s102, %s103
      %p114 = scmp.eq.s32.totalorder %s21, 0
      %p115 = por %p113, %p114
      %p116 = scmp.ne.s32.totalorder %s102, %s103
      %p117 = scmp.eq.s32.totalorder %s22, 1
      %p118 = por %p116, %p117
      %p120 = scmp.ne.s32.totalorder %s103, %s119
      %p121 = scmp.eq.s32.totalorder %s22, 0
      %p122 = por %p120, %p121
      %s123 = ssub.s32 %s25, %s34
      %p124 = scmp.eq.s32.totalorder %s123, 0
      %s126 = sadd.s32 %s125, 1
      %s127 = scalar_select %p124, %s125, %s126
      %p130 = pneg %p124
      %p131 = scmp.eq.s32.totalorder %s16, 1
      %p132 = por %p130, %p131
      %p133 = scmp.ne.s32.totalorder %s125, %s128
      %p134 = scmp.eq.s32.totalorder %s16, 0
      %p135 = por %p133, %p134
      %p136 = scmp.ne.s32.totalorder %s125, %s128
      %p137 = scmp.eq.s32.totalorder %s21, 1
      %p138 = por %p136, %p137
      %p139 = scmp.ne.s32.totalorder %s128, %s129
      %p140 = scmp.eq.s32.totalorder %s21, 0
      %p141 = por %p139, %p140
      %p142 = scmp.ne.s32.totalorder %s128, %s129
      %p143 = scmp.eq.s32.totalorder %s22, 1
      %p144 = por %p142, %p143
      %p146 = scmp.ne.s32.totalorder %s129, %s145
      %p147 = scmp.eq.s32.totalorder %s22, 0
      %p148 = por %p146, %p147
      %s150 = sadd.s32 %s149, 1
      %p153 = scmp.eq.s32.totalorder %s16, 1
      %p154 = scmp.ne.s32.totalorder %s149, %s151
      %p155 = scmp.eq.s32.totalorder %s16, 0
      %p156 = por %p154, %p155
      %p157 = scmp.ne.s32.totalorder %s149, %s151
      %p158 = scmp.eq.s32.totalorder %s21, 1
      %p159 = por %p157, %p158
      %p160 = scmp.ne.s32.totalorder %s151, %s152
      %p161 = scmp.eq.s32.totalorder %s21, 0
      %p162 = por %p160, %p161
      %p163 = scmp.ne.s32.totalorder %s151, %s152
      %p164 = scmp.eq.s32.totalorder %s22, 1
      %p165 = por %p163, %p164
      %p167 = scmp.ne.s32.totalorder %s152, %s166
      %p168 = scmp.eq.s32.totalorder %s22, 0
      %p169 = por %p167, %p168
      %s171 = sadd.s32 %s170, 1
      %p174 = scmp.eq.s32.totalorder %s16, 1
      %p175 = scmp.ne.s32.totalorder %s170, %s172
      %p176 = scmp.eq.s32.totalorder %s16, 0
      %p177 = por %p175, %p176
      %p178 = scmp.ne.s32.totalorder %s170, %s172
      %p179 = scmp.eq.s32.totalorder %s21, 1
      %p180 = por %p178, %p179
      %p181 = scmp.ne.s32.totalorder %s172, %s173
      %p182 = scmp.eq.s32.totalorder %s21, 0
      %p183 = por %p181, %p182
      %p184 = scmp.ne.s32.totalorder %s172, %s173
      %p185 = scmp.eq.s32.totalorder %s22, 1
      %p186 = por %p184, %p185
      %p188 = scmp.ne.s32.totalorder %s173, %s187
      %p189 = scmp.eq.s32.totalorder %s22, 0
      %p190 = por %p188, %p189
      %s192 = sadd.s32 %s191, 1
      %p195 = scmp.eq.s32.totalorder %s16, 1
      %p196 = scmp.ne.s32.totalorder %s191, %s193
      %p197 = scmp.eq.s32.totalorder %s16, 0
      %p198 = por %p196, %p197
      %p199 = scmp.ne.s32.totalorder %s191, %s193
      %p200 = scmp.eq.s32.totalorder %s21, 1
      %p201 = por %p199, %p200
      %p202 = scmp.ne.s32.totalorder %s193, %s194
      %p203 = scmp.eq.s32.totalorder %s21, 0
      %p204 = por %p202, %p203
      %p205 = scmp.ne.s32.totalorder %s193, %s194
      %p206 = scmp.eq.s32.totalorder %s22, 1
      %p207 = por %p205, %p206
      %p209 = scmp.ne.s32.totalorder %s194, %s208
      %p210 = scmp.eq.s32.totalorder %s22, 0
      %p211 = por %p209, %p210
      %s212 = ssub.s32 %s23, %s42
      %s213 = ssub.s32 %s24, %s38
      %s214 = sor.u32 %s212, %s213
      %p215 = scmp.eq.s32.totalorder %s214, 0
      %s217 = sadd.s32 %s216, 1
      %s218 = scalar_select %p215, %s216, %s217
      %p221 = pneg %p215
      %p222 = scmp.eq.s32.totalorder %s16, 1
      %p223 = por %p221, %p222
      %p224 = scmp.ne.s32.totalorder %s216, %s219
      %p225 = scmp.eq.s32.totalorder %s16, 0
      %p226 = por %p224, %p225
      %p227 = scmp.ne.s32.totalorder %s216, %s219
      %p228 = scmp.eq.s32.totalorder %s21, 1
      %p229 = por %p227, %p228
      %p230 = scmp.ne.s32.totalorder %s219, %s220
      %p231 = scmp.eq.s32.totalorder %s21, 0
      %p232 = por %p230, %p231
      %p233 = scmp.ne.s32.totalorder %s219, %s220
      %p234 = scmp.eq.s32.totalorder %s22, 1
      %p235 = por %p233, %p234
      %p237 = scmp.ne.s32.totalorder %s220, %s236
      %p238 = scmp.eq.s32.totalorder %s22, 0
      %p239 = por %p237, %p238
      %p240 = scmp.le.s32.totalorder 1, %s16
      %p241 = scmp.lt.s32.totalorder %s16, 3
      %p242 = pnand %p240, %p241
      %p243 = pneg %p242
      // Predicated region
      $region9: #{decoder_layer.5} parent=5 // pred_check
        _
      $region10: #{decoder_layer.5} parent=5 // pred_check_branch
        %245 = sbr.rel (%p242) target = $region12
      $region11: #{decoder_layer.5} parent=5 // pred_region
        %s246 = ssub.s32 %s16, 1
        // Predicated region
        $region13: #{decoder_layer.5} parent=11 // pred_check
          %p247 = pneg %p89
        $region14: #{decoder_layer.5} parent=11 // pred_check_branch
          %249 = sbr.rel (%p247) target = $region16
        $region15: #{decoder_layer.5} parent=11 // pred_region
          %p250 = scmp.lt.s32.totalorder %s28, 0
          %s251 = scalar_select %p250, %s28, 0
          %s252 = smul.addr %s251, 4
          %s253 = scalar_lea.vmem %s1, %s252
        $region16: #{decoder_layer.5} parent=11 // pred_fallthru
          _
        // Predicated region
        $region17: #{decoder_layer.5} parent=11 // pred_check
          %p254 = pneg %p115
        $region18: #{decoder_layer.5} parent=11 // pred_check_branch
          %256 = sbr.rel (%p254) target = $region20
        $region19: #{decoder_layer.5} parent=11 // pred_region
          %p257 = scmp.lt.s32.totalorder %s28, 0
          %s258 = scalar_select %p257, %s28, 0
          %s259 = scalar_lea.vmem %s2, %s258
        $region20: #{decoder_layer.5} parent=11 // pred_fallthru
          _
        // Predicated region
        $region21: #{decoder_layer.5} parent=11 // pred_check
          %p260 = pneg %p141
        $region22: #{decoder_layer.5} parent=11 // pred_check_branch
          %262 = sbr.rel (%p260) target = $region24
        $region23: #{decoder_layer.5} parent=11 // pred_region
          %s263 = smul.u32 8, %s28
          %p264 = scmp.lt.s32.totalorder %s263, 7
          %s265 = scalar_select %p264, %s263, 7
          %s266 = smul.addr %s265, 4
          %s267 = scalar_lea.vmem %s3, %s266
          %s268 = smul.u32 8, %s28
        $region24: #{decoder_layer.5} parent=11 // pred_fallthru
          _
        // Predicated region
        $region25: #{decoder_layer.5} parent=11 // pred_check
          %p269 = pneg %p162
        $region26: #{decoder_layer.5} parent=11 // pred_check_branch
          %271 = sbr.rel (%p269) target = $region28
        $region27: #{decoder_layer.5} parent=11 // pred_region
          _
        $region28: #{decoder_layer.5} parent=11 // pred_fallthru
          _
        // Predicated region
        $region29: #{decoder_layer.5} parent=11 // pred_check
          %p272 = pneg %p183
        $region30: #{decoder_layer.5} parent=11 // pred_check_branch
          %274 = sbr.rel (%p272) target = $region32
        $region31: #{decoder_layer.5} parent=11 // pred_region
          _
        $region32: #{decoder_layer.5} parent=11 // pred_fallthru
          _
        // Predicated region
        $region33: #{decoder_layer.5} parent=11 // pred_check
          %p275 = pneg %p204
        $region34: #{decoder_layer.5} parent=11 // pred_check_branch
          %277 = sbr.rel (%p275) target = $region36
        $region35: #{decoder_layer.5} parent=11 // pred_region
          _
        $region36: #{decoder_layer.5} parent=11 // pred_fallthru
          _
      $region12: #{decoder_layer.5} parent=5 // pred_fallthru
        _
      %p278 = scmp.lt.s32.totalorder %s16, 2
      // Predicated region
      $region37: #{decoder_layer.5} parent=5 // pred_check
        %p279 = pneg %p278
      $region38: #{decoder_layer.5} parent=5 // pred_check_branch
        %281 = sbr.rel (%p279) target = $region40
      $region39: #{decoder_layer.5} parent=5 // pred_region
        // Predicated region
        $region41: #{decoder_layer.5} parent=39 // pred_check
          %p282 = pneg %p57
        $region42: #{decoder_layer.5} parent=39 // pred_check_branch
          %284 = sbr.rel (%p282) target = $region44
        $region43: #{decoder_layer.5} parent=39 // pred_region
          %p285 = scmp.lt.s32.totalorder %s23, 1
          %s286 = scalar_select %p285, %s23, 1
          %p287 = scmp.lt.s32.totalorder %s24, 0
          %s288 = scalar_select %p287, %s24, 0
          %s289 = sadd.s32 %s288, %s286
          %s290 = smul.addr %s289, 8
          %s291 = scalar_lea.vmem %s0, %s290
        $region44: #{decoder_layer.5} parent=39 // pred_fallthru
          _
      $region40: #{decoder_layer.5} parent=5 // pred_fallthru
        _
      %p292 = scmp.le.s32.totalorder 1, %s16
      %p293 = scmp.lt.s32.totalorder %s16, 3
      %p294 = pnand %p292, %p293
      %p295 = pneg %p294
      // Predicated region
      $region45: #{decoder_layer.5} parent=5 // pred_check
        _
      $region46: #{decoder_layer.5} parent=5 // pred_check_branch
        %297 = sbr.rel (%p294) target = $region48
      $region47: #{decoder_layer.5} parent=5 // pred_region
        %s298 = ssub.s32 %s16, 1
        %p299 = scmp.lt.s32.totalorder %s26, 1
        %s300 = scalar_select %p299, %s26, 1
        %p301 = scmp.lt.s32.totalorder %s27, 0
        %s302 = scalar_select %p301, %s27, 0
        %s303 = sadd.s32 %s302, %s300
        %s304 = smul.addr %s303, 8
        %s305 = scalar_lea.vmem %s0, %s304
        %p306 = pneg %p63
        %p307 = pneg %p60
        %p308 = scmp.lt.s32.totalorder %s28, 0
        %s309 = scalar_select %p308, %s28, 0
        %s310 = smul.addr %s309, 4
        %s311 = scalar_lea.vmem %s1, %s310
        %p312 = pneg %p89
        %p313 = pneg %p86
        %p314 = scmp.lt.s32.totalorder %s28, 0
        %s315 = scalar_select %p314, %s28, 0
        %s316 = scalar_lea.vmem %s2, %s315
        %p317 = pneg %p115
        %p318 = pneg %p112
        %s319 = smul.u32 8, %s28
        %p320 = scmp.lt.s32.totalorder %s319, 7
        %s321 = scalar_select %p320, %s319, 7
        %s322 = smul.addr %s321, 4
        %s323 = scalar_lea.vmem %s3, %s322
        %p324 = pneg %p141
        %p325 = pneg %p138
        %p326 = pneg %p162
        %p327 = pneg %p159
        %p328 = pneg %p183
        %p329 = pneg %p180
        %p330 = pneg %p204
        %p331 = pneg %p201
        %p332 = pneg %p232
        %p333 = pneg %p229
        %s334 = sand.u32 %s219, 1
        %s335 = scalar_lea.sflag [#allocation4], %s334
        %s336 = sand.u32 %s219, 1
        %s337 = smul.addr %s336, 8
        %s338 = scalar_lea.vmem [#allocation3], %s337
        %p339 = scmp.lt.s32.totalorder %s26, 1
        %s340 = scalar_select %p339, %s26, 1
        %p341 = scmp.lt.s32.totalorder %s27, 0
        %s342 = scalar_select %p341, %s27, 0
        %s343 = sadd.s32 %s342, %s340
        %s344 = smul.addr %s343, 8
        %s345 = scalar_lea.vmem %s0, %s344
        %p346 = scmp.lt.s32.totalorder %s28, 0
        %s347 = scalar_select %p346, %s28, 0
        %s348 = smul.addr %s347, 4
        %s349 = scalar_lea.vmem %s1, %s348
        %p350 = scmp.lt.s32.totalorder %s28, 0
        %s351 = scalar_select %p350, %s28, 0
        %s352 = scalar_lea.vmem %s2, %s351
        %s353 = smul.u32 8, %s28
        %p354 = scmp.lt.s32.totalorder %s353, 7
        %s355 = scalar_select %p354, %s353, 7
        %s356 = smul.addr %s355, 4
        %s357 = scalar_lea.vmem %s3, %s356
        %s358 = smul.u32 8, %s28
        %p360 = scmp.eq.s32.totalorder %s28, 0
        // Predicated region
        $region49: #{decoder_layer.5} parent=47 // pred_check
          %p361 = pneg %p360
        $region50: #{decoder_layer.5} parent=47 // pred_check_branch
          %363 = sbr.rel (%p361) target = $region52
        $region51: #{decoder_layer.5} parent=47 // pred_region
          %vm364 = vcmask 261120
          %365 = vst.msk [vmem:[#allocation2] sm:$0xff] %vm364, 0.0
        $region52: #{decoder_layer.5} parent=47 // pred_fallthru
          _
        %v366 = vld [vmem:[%s345] sm:$0xff]
        %v367 = vpack.c.bf16 %v366, %v366
        %v368 = vld [vmem:[%s349] sm:$0xf]
        %v369 = vld [vmem:[%s349 + $0x4] sm:$0xf]
        %v370 = vld [vmem:[%s349 + $0x8] sm:$0xf]
        %v371 = vld [vmem:[%s349 + $0xc] sm:$0xf]
        %v372 = vld [vmem:[%s352] sm:$0x1]
        %v374 = vlaneseq
        %v375 = vshrl.u32 %v374, 7
        %v376 = vsub.s32 0, %v375
        %v377 = vrot.slane %v372, %v376
        %v383 = vunpack.c.l.b16 %v368
        %v384 = vunpack.c.l.b16 %v369
        %v385 = vunpack.c.l.b16 %v370
        %v386 = vunpack.c.l.b16 %v371
        %v387 = vpack.c.b16 %v384, %v383
        %v388 = vpack.c.b16 %v386, %v385
        %vm391 = vcmask 261120
        %v393 = vsel %vm391, %v367, 0
        %395 = vmatprep.subr.bf16.mxu0 0
        %396 = vmatpush1.bf16.msra.mxu0 %v387
        %397 = vmatprep.subr.bf16.mxu0 0
        %398 = vmatpush1.bf16.msra.mxu0 %v388
        %399 = vmatprep.subr.bf16.mxu0 0
        %400 = vmatpush1.bf16.msra.mxu0 0
        %401 = vmatprep.subr.bf16.mxu0 0
        %402 = vmatpush1.bf16.msra.mxu0 0
        %403 = vmatprep.subr.bf16.mxu0 0
        %404 = vmatpush1.bf16.msra.mxu0 0
        %405 = vmatprep.subr.bf16.mxu0 0
        %406 = vmatpush1.bf16.msra.mxu0 0
        %407 = vmatprep.subr.bf16.mxu0 0
        %408 = vmatpush1.bf16.msra.mxu0 0
        %409 = vmatprep.subr.bf16.mxu0 0
        %410 = vmatpush1.bf16.msra.mxu0 0
        %411 = vmatprep.subr.bf16.mxu0 0
        %412 = vmatpush1.bf16.msra.mxu0 0
        %413 = vmatprep.subr.bf16.mxu0 0
        %414 = vmatpush1.bf16.msra.mxu0 0
        %415 = vmatprep.subr.bf16.mxu0 0
        %416 = vmatpush1.bf16.msra.mxu0 0
        %417 = vmatprep.subr.bf16.mxu0 0
        %418 = vmatpush1.bf16.msra.mxu0 0
        %419 = vmatprep.subr.bf16.mxu0 0
        %420 = vmatpush1.bf16.msra.mxu0 0
        %421 = vmatprep.subr.bf16.mxu0 0
        %422 = vmatpush1.bf16.msra.mxu0 0
        %423 = vmatprep.subr.bf16.mxu0 0
        %424 = vmatpush1.bf16.msra.mxu0 0
        %425 = vmatprep.subr.bf16.mxu0 0
        %426 = vmatpush1.bf16.msra.mxu0 0
        %427 = vmatprep.mubr.bf16.mxu0 0
        %428 = vmatmul.mubr.bf16.gmra.mrb[0].mxu0 %v393
        %v429 = vpop.f32.mrb[0].mxu0
        %v430 = vadd.f32 %v377, %v429
        %v431 = vpop.f32.mrb[0].mxu0
        %v432 = vpop.f32.mrb[0].mxu0
        %v433 = vpop.f32.mrb[0].mxu0
        %434 = vdwg.mxu0
        %v435 = vmul.f32 %v430, 0.5
        %v436 = vmul.f32 %v430, 0.70710677
        %v437 = verf.f32.pop %v436
        %v438 = vadd.f32 %v437, 1.0
        %v439 = vmul.f32 %v435, %v438
        %v440 = vld [vmem:[#allocation2] sm:$0xff]
        %v441 = vpack.c.bf16 %v439, %v439
        %v442 = vld [vmem:[%s357] sm:$0xf]
        %v443 = vld [vmem:[%s357 + $0x4] sm:$0xf]
        %v444 = vld [vmem:[%s357 + $0x8] sm:$0xf]
        %v445 = vld [vmem:[%s357 + $0xc] sm:$0xf]
        %v446 = vld [vmem:[%s357 + $0x10] sm:$0xf]
        %v447 = vld [vmem:[%s357 + $0x14] sm:$0xf]
        %v448 = vld [vmem:[%s357 + $0x18] sm:$0xf]
        %v449 = vld [vmem:[%s357 + $0x1c] sm:$0xf]
        %v458 = vunpack.c.l.b16 %v442
        %v459 = vunpack.c.l.b16 %v443
        %v460 = vunpack.c.l.b16 %v444
        %v461 = vunpack.c.l.b16 %v445
        %v462 = vunpack.c.l.b16 %v446
        %v463 = vunpack.c.l.b16 %v447
        %v464 = vunpack.c.l.b16 %v448
        %v465 = vunpack.c.l.b16 %v449
        %v466 = vpack.c.b16 %v459, %v458
        %v467 = vpack.c.b16 %v461, %v460
        %v468 = vpack.c.b16 %v463, %v462
        %v469 = vpack.c.b16 %v465, %v464
        %vm474 = vcmask 523264
        %v476 = vsel %vm474, %v441, 0
        %478 = vmatprep.subr.bf16.mxu0 0
        %479 = vmatpush1.bf16.msra.mxu0 %v466
        %480 = vmatprep.subr.bf16.mxu0 0
        %481 = vmatpush1.bf16.msra.mxu0 %v467
        %482 = vmatprep.subr.bf16.mxu0 0
        %483 = vmatpush1.bf16.msra.mxu0 %v468
        %484 = vmatprep.subr.bf16.mxu0 0
        %485 = vmatpush1.bf16.msra.mxu0 %v469
        %486 = vmatprep.subr.bf16.mxu0 0
        %487 = vmatpush1.bf16.msra.mxu0 0
        %488 = vmatprep.subr.bf16.mxu0 0
        %489 = vmatpush1.bf16.msra.mxu0 0
        %490 = vmatprep.subr.bf16.mxu0 0
        %491 = vmatpush1.bf16.msra.mxu0 0
        %492 = vmatprep.subr.bf16.mxu0 0
        %493 = vmatpush1.bf16.msra.mxu0 0
        %494 = vmatprep.subr.bf16.mxu0 0
        %495 = vmatpush1.bf16.msra.mxu0 0
        %496 = vmatprep.subr.bf16.mxu0 0
        %497 = vmatpush1.bf16.msra.mxu0 0
        %498 = vmatprep.subr.bf16.mxu0 0
        %499 = vmatpush1.bf16.msra.mxu0 0
        %500 = vmatprep.subr.bf16.mxu0 0
        %501 = vmatpush1.bf16.msra.mxu0 0
        %502 = vmatprep.subr.bf16.mxu0 0
        %503 = vmatpush1.bf16.msra.mxu0 0
        %504 = vmatprep.subr.bf16.mxu0 0
        %505 = vmatpush1.bf16.msra.mxu0 0
        %506 = vmatprep.subr.bf16.mxu0 0
        %507 = vmatpush1.bf16.msra.mxu0 0
        %508 = vmatprep.subr.bf16.mxu0 0
        %509 = vmatpush1.bf16.msra.mxu0 0
        %510 = vmatprep.mubr.bf16.mxu0 0
        %511 = vmatmul.mubr.bf16.gmra.mrb[0].mxu0 %v476
        %v512 = vpop.f32.mrb[0].mxu0
        %v513 = vadd.f32 0.0, %v512
        %v514 = vpop.f32.mrb[0].mxu0
        %v515 = vpop.f32.mrb[0].mxu0
        %v516 = vpop.f32.mrb[0].mxu0
        %517 = vdwg.mxu0
        %v518 = vadd.f32 %v440, %v513
        %519 = vst.msk [vmem:[#allocation2] sm:$0xff] %vm391, %v518
        // Predicated region
        $region53: #{decoder_layer.5} parent=47 // pred_check
          %p520 = pneg %p360
        $region54: #{decoder_layer.5} parent=47 // pred_check_branch
          %522 = sbr.rel (%p520) target = $region56
        $region55: #{decoder_layer.5} parent=47 // pred_region
          %v523 = vld [vmem:[#allocation2] sm:$0xff]
          %v524 = vld [vmem:[%s4] sm:$0x1]
          %v526 = vlaneseq
          %v527 = vshrl.u32 %v526, 7
          %v528 = vsub.s32 0, %v527
          %v529 = vrot.slane %v524, %v528
          %v531 = vadd.f32 %v523, %v529
          %v532 = vld [vmem:[%s345] sm:$0xff]
          %v533 = vadd.f32 %v531, %v532
          %v534 = vsel %vm391, %v533, 0.0
          %535 = vadd.xlane.f32.xlu0 %v534
          %v536 = vpop.xlane.xlu0 %535
          %v537 = vrcp.pop 32.0
          %v538 = vmul.f32 %v536, %v537
          %v539 = vsub.f32 %v533, %v538
          %v540 = vmul.f32 %v539, %v539
          %v541 = vsel %vm391, %v540, 0.0
          %542 = vadd.xlane.f32.xlu0 %v541
          %v543 = vpop.xlane.xlu0 %542
          %v544 = vmul.f32 %v543, %v537
          %v545 = vadd.f32 %v544, 1e-12
          %v546 = vrsqrt.pop %v545
          %v547 = vmul.f32 %v539, %v546
          %v548 = vld [vmem:[%s5] sm:$0x1]
          %v550 = vlaneseq
          %v551 = vshrl.u32 %v550, 7
          %v552 = vsub.s32 0, %v551
          %v553 = vrot.slane %v548, %v552
          %v555 = vmul.f32 %v547, %v553
          %v556 = vld [vmem:[%s6] sm:$0x1]
          %v558 = vlaneseq
          %v559 = vshrl.u32 %v558, 7
          %v560 = vsub.s32 0, %v559
          %v561 = vrot.slane %v556, %v560
          %v563 = vadd.f32 %v555, %v561
          %564 = vst.msk [vmem:[%s338] sm:$0xff] %vm391, %v563
        $region56: #{decoder_layer.5} parent=47 // pred_fallthru
          _
        %s565 = sand.u32 %s219, 1
        %s566 = scalar_lea.sflag [#allocation4], %s565
        %s567 = sand.u32 %s219, 1
        %s568 = smul.addr %s567, 8
        %s569 = scalar_lea.vmem [#allocation3], %s568
        // Predicated region
        $region57: #{decoder_layer.5} parent=47 // pred_check
          %p570 = pneg %p229
        $region58: #{decoder_layer.5} parent=47 // pred_check_branch
          %572 = sbr.rel (%p570) target = $region60
        $region59: #{decoder_layer.5} parent=47 // pred_region
          %s574 = ssub.s32 128, 128
          %575 = vsyncadd %s566, %s574
          %s576 = sadd.s32 %s27, %s26
          %s577 = smul.addr %s576, 128
          %s578 = scalar_lea.hbm %s7, %s577
          %s580 = sshll.u32 %s569, 4
          %s581 = int_to_ptr.vmem [resolvable:$true] %s580
          %583 = dma.vmem_to_hbm [thread:$0]  %s581, 128, %s578, %s566
        $region60: #{decoder_layer.5} parent=47 // pred_fallthru
          _
      $region48: #{decoder_layer.5} parent=5 // pred_fallthru
        _
      %p584 = scmp.le.s32.totalorder 2, %s16
      // Predicated region
      $region61: #{decoder_layer.5} parent=5 // pred_check
        %p585 = pneg %p584
      $region62: #{decoder_layer.5} parent=5 // pred_check_branch
        %587 = sbr.rel (%p585) target = $region64
      $region63: #{decoder_layer.5} parent=5 // pred_region
        %s588 = ssub.s32 %s16, 2
        // Predicated region
        $region65: #{decoder_layer.5} parent=63 // pred_check
          %p589 = pneg %p235
        $region66: #{decoder_layer.5} parent=63 // pred_check_branch
          %591 = sbr.rel (%p589) target = $region68
        $region67: #{decoder_layer.5} parent=63 // pred_region
          %s592 = sand.u32 %s220, 1
          %s593 = scalar_lea.sflag [#allocation4], %s592
          %s594 = sand.u32 %s220, 1
          %s595 = smul.addr %s594, 8
          %s596 = scalar_lea.vmem [#allocation3], %s595
          %597 = dma.done %s593, 128
        $region68: #{decoder_layer.5} parent=63 // pred_fallthru
          _
      $region64: #{decoder_layer.5} parent=5 // pred_fallthru
        _
    $region6: #{decoder_layer.5} parent=1 // loop_footer
      %s20 = sadd.s32 1, %s16
    $region7: #{decoder_layer.5} parent=1 // loop_footer_branch
      %15 = sbr.rel target = $region3
    $region8: #{decoder_layer.5} parent=1 // loop_exit
      _
    %598 = vsyncpa [#allocation4], 1
    %s599 = scalar_lea.sflag [#allocation4], 1
    %600 = vsyncpa %s599, 1

// kernel: decoder_layer.4
$region0: #{decoder_layer.4}
  #allocation0 [shape = 'u32[]', space=smem, size = 0x4, offset = 0x4, fixed_abs, tag = 'smem constant byte address 0x4 - core index']
  #allocation1 [shape = 'u32[144,128]{1,0:T(1,128)}', space=vmem, size = 0x12000, scoped, tag = 'internal scratch']
  #allocation2 [shape = 'f32[8,32]{1,0:T(8,128)}', space=vmem, size = 0x1000, scoped, tag = 'scratch operand']
  %s0 = inlined_call_operand.vmem [shape: f32[2,8,32], index: 0, kind: input, shape index: {}]
  %s1 = inlined_call_operand.vmem [shape: f32[2,8,32], index: 1, kind: input, shape index: {}]
  %s2 = inlined_call_operand.vmem [shape: f32[2,1,8], index: 2, kind: input, shape index: {}]
  %s3 = inlined_call_operand.vmem [shape: bf16[32,32], index: 3, kind: input, shape index: {}]
  %s4 = inlined_call_operand.vmem [shape: f32[1,32], index: 4, kind: input, shape index: {}]
  %s5 = inlined_call_operand.vmem [shape: bf16[32,64], index: 5, kind: input, shape index: {}]
  %s6 = inlined_call_operand.vmem [shape: f32[1,64], index: 6, kind: input, shape index: {}]
  %s7 = inlined_call_operand.vmem [shape: bf16[32,32], index: 7, kind: input, shape index: {}]
  %s8 = inlined_call_operand.vmem [shape: f32[1,32], index: 8, kind: input, shape index: {}]
  %s9 = inlined_call_operand.vmem [shape: f32[1,32], index: 9, kind: input, shape index: {}]
  %s10 = inlined_call_operand.vmem [shape: f32[1,32], index: 10, kind: input, shape index: {}]
  %s11 = inlined_call_operand.vmem [shape: f32[2,8,32], index: 11, kind: output, shape index: {}]
  %s12 = sld [smem:[#allocation0]]
  $region77: #{decoder_layer.4} parent=0
    _
  %s14 = ssub.s32 1, %s12
  %s15 = scalar_select 0, %s14, %s12
  loop: start=0, step=1, limit=4
  $region2: #{decoder_layer.4} parent=0 // loop_pre_header
    _
  $region3: #{decoder_layer.4} parent=0 // loop_header
    %s17 = sphi 0, %s21
    %p18 = scmp.ge.s32.totalorder %s17, 4
    %s24 = sphi 0, %s36
    %s25 = sphi 0, %s32
    %s26 = sphi 0, %s24
    %s27 = sphi 0, %s25
    %s28 = sphi 0, %s26
    %s29 = sphi 0, %s27
    %s41 = sphi 0, %s43
    %s44 = sphi 0, %s41
    %s45 = sphi 0, %s44
    %s61 = sphi 0, %s45
    %s67 = sphi 0, %s69
    %s70 = sphi 0, %s67
    %s71 = sphi 0, %s70
    %s87 = sphi 0, %s71
    %s93 = sphi 0, %s95
    %s96 = sphi 0, %s93
    %s97 = sphi 0, %s96
    %s113 = sphi 0, %s97
    %s117 = sphi 0, %s117
    %s119 = sphi 0, %s117
    %s120 = sphi 0, %s119
    %s134 = sphi 0, %s120
    %s138 = sphi 0, %s138
    %s140 = sphi 0, %s138
    %s141 = sphi 0, %s140
    %s155 = sphi 0, %s141
    %s159 = sphi 0, %s159
    %s161 = sphi 0, %s159
    %s162 = sphi 0, %s161
    %s176 = sphi 0, %s162
    %s180 = sphi 0, %s180
    %s182 = sphi 0, %s180
    %s183 = sphi 0, %s182
    %s197 = sphi 0, %s183
    %s201 = sphi 0, %s201
    %s203 = sphi 0, %s201
    %s204 = sphi 0, %s203
    %s218 = sphi 0, %s204
    %s222 = sphi 0, %s222
    %s224 = sphi 0, %s222
    %s225 = sphi 0, %s224
    %s239 = sphi 0, %s225
    %s243 = sphi 0, %s243
    %s245 = sphi 0, %s243
    %s246 = sphi 0, %s245
    %s260 = sphi 0, %s246
    %s264 = sphi 0, %s264
    %s266 = sphi 0, %s264
    %s267 = sphi 0, %s266
    %s281 = sphi 0, %s267
    %s289 = sphi 0, %s291
    %s292 = sphi 0, %s289
    %s293 = sphi 0, %s292
    %s309 = sphi 0, %s293
  $region4: #{decoder_layer.4} parent=0 // loop_header_branch
    %20 = sbr.rel (%p18) target = $region8
  $region5: #{decoder_layer.4} parent=0 // loop_body
    %s22 = ssub.s32 %s17, 1
    %s23 = ssub.s32 %s17, 2
    %s30 = sadd.s32 1, %s25
    %p31 = scmp.ge.s32.totalorder %s30, 1
    %s32 = scalar_select %p31, 0, %s30
    %s33 = sadd.s32 1, %s24
    %s34 = scalar_select %p31, %s33, %s24
    %p35 = scmp.ge.s32.totalorder %s34, 2
    %s36 = scalar_select %p35, 0, %s34
    %s37 = ssub.s32 %s24, %s36
    %s38 = ssub.s32 %s25, %s32
    %s39 = sor.u32 %s37, %s38
    %p40 = scmp.eq.s32.totalorder %s39, 0
    %s42 = sadd.s32 %s41, 1
    %s43 = scalar_select %p40, %s41, %s42
    %p46 = pneg %p40
    %p47 = scmp.eq.s32.totalorder %s17, 1
    %p48 = por %p46, %p47
    %p49 = scmp.ne.s32.totalorder %s41, %s44
    %p50 = scmp.eq.s32.totalorder %s17, 0
    %p51 = por %p49, %p50
    %p52 = scmp.ne.s32.totalorder %s41, %s44
    %p53 = scmp.eq.s32.totalorder %s22, 1
    %p54 = por %p52, %p53
    %p55 = scmp.ne.s32.totalorder %s44, %s45
    %p56 = scmp.eq.s32.totalorder %s22, 0
    %p57 = por %p55, %p56
    %p58 = scmp.ne.s32.totalorder %s44, %s45
    %p59 = scmp.eq.s32.totalorder %s23, 1
    %p60 = por %p58, %p59
    %p62 = scmp.ne.s32.totalorder %s45, %s61
    %p63 = scmp.eq.s32.totalorder %s23, 0
    %p64 = por %p62, %p63
    %s65 = ssub.s32 %s24, %s36
    %p66 = scmp.eq.s32.totalorder %s65, 0
    %s68 = sadd.s32 %s67, 1
    %s69 = scalar_select %p66, %s67, %s68
    %p72 = pneg %p66
    %p73 = scmp.eq.s32.totalorder %s17, 1
    %p74 = por %p72, %p73
    %p75 = scmp.ne.s32.totalorder %s67, %s70
    %p76 = scmp.eq.s32.totalorder %s17, 0
    %p77 = por %p75, %p76
    %p78 = scmp.ne.s32.totalorder %s67, %s70
    %p79 = scmp.eq.s32.totalorder %s22, 1
    %p80 = por %p78, %p79
    %p81 = scmp.ne.s32.totalorder %s70, %s71
    %p82 = scmp.eq.s32.totalorder %s22, 0
    %p83 = por %p81, %p82
    %p84 = scmp.ne.s32.totalorder %s70, %s71
    %p85 = scmp.eq.s32.totalorder %s23, 1
    %p86 = por %p84, %p85
    %p88 = scmp.ne.s32.totalorder %s71, %s87
    %p89 = scmp.eq.s32.totalorder %s23, 0
    %p90 = por %p88, %p89
    %s91 = ssub.s32 %s24, %s36
    %p92 = scmp.eq.s32.totalorder %s91, 0
    %s94 = sadd.s32 %s93, 1
    %s95 = scalar_select %p92, %s93, %s94
    %p98 = pneg %p92
    %p99 = scmp.eq.s32.totalorder %s17, 1
    %p100 = por %p98, %p99
    %p101 = scmp.ne.s32.totalorder %s93, %s96
    %p102 = scmp.eq.s32.totalorder %s17, 0
    %p103 = por %p101, %p102
    %p104 = scmp.ne.s32.totalorder %s93, %s96
    %p105 = scmp.eq.s32.totalorder %s22, 1
    %p106 = por %p104, %p105
    %p107 = scmp.ne.s32.totalorder %s96, %s97
    %p108 = scmp.eq.s32.totalorder %s22, 0
    %p109 = por %p107, %p108
    %p110 = scmp.ne.s32.totalorder %s96, %s97
    %p111 = scmp.eq.s32.totalorder %s23, 1
    %p112 = por %p110, %p111
    %p114 = scmp.ne.s32.totalorder %s97, %s113
    %p115 = scmp.eq.s32.totalorder %s23, 0
    %p116 = por %p114, %p115
    %s118 = sadd.s32 %s117, 1
    %p121 = scmp.eq.s32.totalorder %s17, 1
    %p122 = scmp.ne.s32.totalorder %s117, %s119
    %p123 = scmp.eq.s32.totalorder %s17, 0
    %p124 = por %p122, %p123
    %p125 = scmp.ne.s32.totalorder %s117, %s119
    %p126 = scmp.eq.s32.totalorder %s22, 1
    %p127 = por %p125, %p126
    %p128 = scmp.ne.s32.totalorder %s119, %s120
    %p129 = scmp.eq.s32.totalorder %s22, 0
    %p130 = por %p128, %p129
    %p131 = scmp.ne.s32.totalorder %s119, %s120
    %p132 = scmp.eq.s32.totalorder %s23, 1
    %p133 = por %p131, %p132
    %p135 = scmp.ne.s32.totalorder %s120, %s134
    %p136 = scmp.eq.s32.totalorder %s23, 0
    %p137 = por %p135, %p136
    %s139 = sadd.s32 %s138, 1
    %p142 = scmp.eq.s32.totalorder %s17, 1
    %p143 = scmp.ne.s32.totalorder %s138, %s140
    %p144 = scmp.eq.s32.totalorder %s17, 0
    %p145 = por %p143, %p144
    %p146 = scmp.ne.s32.totalorder %s138, %s140
    %p147 = scmp.eq.s32.totalorder %s22, 1
    %p148 = por %p146, %p147
    %p149 = scmp.ne.s32.totalorder %s140, %s141
    %p150 = scmp.eq.s32.totalorder %s22, 0
    %p151 = por %p149, %p150
    %p152 = scmp.ne.s32.totalorder %s140, %s141
    %p153 = scmp.eq.s32.totalorder %s23, 1
    %p154 = por %p152, %p153
    %p156 = scmp.ne.s32.totalorder %s141, %s155
    %p157 = scmp.eq.s32.totalorder %s23, 0
    %p158 = por %p156, %p157
    %s160 = sadd.s32 %s159, 1
    %p163 = scmp.eq.s32.totalorder %s17, 1
    %p164 = scmp.ne.s32.totalorder %s159, %s161
    %p165 = scmp.eq.s32.totalorder %s17, 0
    %p166 = por %p164, %p165
    %p167 = scmp.ne.s32.totalorder %s159, %s161
    %p168 = scmp.eq.s32.totalorder %s22, 1
    %p169 = por %p167, %p168
    %p170 = scmp.ne.s32.totalorder %s161, %s162
    %p171 = scmp.eq.s32.totalorder %s22, 0
    %p172 = por %p170, %p171
    %p173 = scmp.ne.s32.totalorder %s161, %s162
    %p174 = scmp.eq.s32.totalorder %s23, 1
    %p175 = por %p173, %p174
    %p177 = scmp.ne.s32.totalorder %s162, %s176
    %p178 = scmp.eq.s32.totalorder %s23, 0
    %p179 = por %p177, %p178
    %s181 = sadd.s32 %s180, 1
    %p184 = scmp.eq.s32.totalorder %s17, 1
    %p185 = scmp.ne.s32.totalorder %s180, %s182
    %p186 = scmp.eq.s32.totalorder %s17, 0
    %p187 = por %p185, %p186
    %p188 = scmp.ne.s32.totalorder %s180, %s182
    %p189 = scmp.eq.s32.totalorder %s22, 1
    %p190 = por %p188, %p189
    %p191 = scmp.ne.s32.totalorder %s182, %s183
    %p192 = scmp.eq.s32.totalorder %s22, 0
    %p193 = por %p191, %p192
    %p194 = scmp.ne.s32.totalorder %s182, %s183
    %p195 = scmp.eq.s32.totalorder %s23, 1
    %p196 = por %p194, %p195
    %p198 = scmp.ne.s32.totalorder %s183, %s197
    %p199 = scmp.eq.s32.totalorder %s23, 0
    %p200 = por %p198, %p199
    %s202 = sadd.s32 %s201, 1
    %p205 = scmp.eq.s32.totalorder %s17, 1
    %p206 = scmp.ne.s32.totalorder %s201, %s203
    %p207 = scmp.eq.s32.totalorder %s17, 0
    %p208 = por %p206, %p207
    %p209 = scmp.ne.s32.totalorder %s201, %s203
    %p210 = scmp.eq.s32.totalorder %s22, 1
    %p211 = por %p209, %p210
    %p212 = scmp.ne.s32.totalorder %s203, %s204
    %p213 = scmp.eq.s32.totalorder %s22, 0
    %p214 = por %p212, %p213
    %p215 = scmp.ne.s32.totalorder %s203, %s204
    %p216 = scmp.eq.s32.totalorder %s23, 1
    %p217 = por %p215, %p216
    %p219 = scmp.ne.s32.totalorder %s204, %s218
    %p220 = scmp.eq.s32.totalorder %s23, 0
    %p221 = por %p219, %p220
    %s223 = sadd.s32 %s222, 1
    %p226 = scmp.eq.s32.totalorder %s17, 1
    %p227 = scmp.ne.s32.totalorder %s222, %s224
    %p228 = scmp.eq.s32.totalorder %s17, 0
    %p229 = por %p227, %p228
    %p230 = scmp.ne.s32.totalorder %s222, %s224
    %p231 = scmp.eq.s32.totalorder %s22, 1
    %p232 = por %p230, %p231
    %p233 = scmp.ne.s32.totalorder %s224, %s225
    %p234 = scmp.eq.s32.totalorder %s22, 0
    %p235 = por %p233, %p234
    %p236 = scmp.ne.s32.totalorder %s224, %s225
    %p237 = scmp.eq.s32.totalorder %s23, 1
    %p238 = por %p236, %p237
    %p240 = scmp.ne.s32.totalorder %s225, %s239
    %p241 = scmp.eq.s32.totalorder %s23, 0
    %p242 = por %p240, %p241
    %s244 = sadd.s32 %s243, 1
    %p247 = scmp.eq.s32.totalorder %s17, 1
    %p248 = scmp.ne.s32.totalorder %s243, %s245
    %p249 = scmp.eq.s32.totalorder %s17, 0
    %p250 = por %p248, %p249
    %p251 = scmp.ne.s32.totalorder %s243, %s245
    %p252 = scmp.eq.s32.totalorder %s22, 1
    %p253 = por %p251, %p252
    %p254 = scmp.ne.s32.totalorder %s245, %s246
    %p255 = scmp.eq.s32.totalorder %s22, 0
    %p256 = por %p254, %p255
    %p257 = scmp.ne.s32.totalorder %s245, %s246
    %p258 = scmp.eq.s32.totalorder %s23, 1
    %p259 = por %p257, %p258
    %p261 = scmp.ne.s32.totalorder %s246, %s260
    %p262 = scmp.eq.s32.totalorder %s23, 0
    %p263 = por %p261, %p262
    %s265 = sadd.s32 %s264, 1
    %p268 = scmp.eq.s32.totalorder %s17, 1
    %p269 = scmp.ne.s32.totalorder %s264, %s266
    %p270 = scmp.eq.s32.totalorder %s17, 0
    %p271 = por %p269, %p270
    %p272 = scmp.ne.s32.totalorder %s264, %s266
    %p273 = scmp.eq.s32.totalorder %s22, 1
    %p274 = por %p272, %p273
    %p275 = scmp.ne.s32.totalorder %s266, %s267
    %p276 = scmp.eq.s32.totalorder %s22, 0
    %p277 = por %p275, %p276
    %p278 = scmp.ne.s32.totalorder %s266, %s267
    %p279 = scmp.eq.s32.totalorder %s23, 1
    %p280 = por %p278, %p279
    %p282 = scmp.ne.s32.totalorder %s267, %s281
    %p283 = scmp.eq.s32.totalorder %s23, 0
    %p284 = por %p282, %p283
    %s285 = ssub.s32 %s24, %s36
    %s286 = ssub.s32 %s25, %s32
    %s287 = sor.u32 %s285, %s286
    %p288 = scmp.eq.s32.totalorder %s287, 0
    %s290 = sadd.s32 %s289, 1
    %s291 = scalar_select %p288, %s289, %s290
    %p294 = pneg %p288
    %p295 = scmp.eq.s32.totalorder %s17, 1
    %p296 = por %p294, %p295
    %p297 = scmp.ne.s32.totalorder %s289, %s292
    %p298 = scmp.eq.s32.totalorder %s17, 0
    %p299 = por %p297, %p298
    %p300 = scmp.ne.s32.totalorder %s289, %s292
    %p301 = scmp.eq.s32.totalorder %s22, 1
    %p302 = por %p300, %p301
    %p303 = scmp.ne.s32.totalorder %s292, %s293
    %p304 = scmp.eq.s32.totalorder %s22, 0
    %p305 = por %p303, %p304
    %p306 = scmp.ne.s32.totalorder %s292, %s293
    %p307 = scmp.eq.s32.totalorder %s23, 1
    %p308 = por %p306, %p307
    %p310 = scmp.ne.s32.totalorder %s293, %s309
    %p311 = scmp.eq.s32.totalorder %s23, 0
    %p312 = por %p310, %p311
    %p313 = scmp.le.s32.totalorder 1, %s17
    %p314 = scmp.lt.s32.totalorder %s17, 3
    %p315 = pnand %p313, %p314
    %p316 = pneg %p315
    // Predicated region
    $region9: #{decoder_layer.4} parent=5 // pred_check
      _
    $region10: #{decoder_layer.4} parent=5 // pred_check_branch
      %318 = sbr.rel (%p315) target = $region12
    $region11: #{decoder_layer.4} parent=5 // pred_region
      %s319 = ssub.s32 %s17, 1
      // Predicated region
      $region13: #{decoder_layer.4} parent=11 // pred_check
        %p320 = pneg %p130
      $region14: #{decoder_layer.4} parent=11 // pred_check_branch
        %322 = sbr.rel (%p320) target = $region16
      $region15: #{decoder_layer.4} parent=11 // pred_region
        _
      $region16: #{decoder_layer.4} parent=11 // pred_fallthru
        _
      // Predicated region
      $region17: #{decoder_layer.4} parent=11 // pred_check
        %p323 = pneg %p151
      $region18: #{decoder_layer.4} parent=11 // pred_check_branch
        %325 = sbr.rel (%p323) target = $region20
      $region19: #{decoder_layer.4} parent=11 // pred_region
        _
      $region20: #{decoder_layer.4} parent=11 // pred_fallthru
        _
      // Predicated region
      $region21: #{decoder_layer.4} parent=11 // pred_check
        %p326 = pneg %p172
      $region22: #{decoder_layer.4} parent=11 // pred_check_branch
        %328 = sbr.rel (%p326) target = $region24
      $region23: #{decoder_layer.4} parent=11 // pred_region
        _
      $region24: #{decoder_layer.4} parent=11 // pred_fallthru
        _
      // Predicated region
      $region25: #{decoder_layer.4} parent=11 // pred_check
        %p329 = pneg %p193
      $region26: #{decoder_layer.4} parent=11 // pred_check_branch
        %331 = sbr.rel (%p329) target = $region28
      $region27: #{decoder_layer.4} parent=11 // pred_region
        _
      $region28: #{decoder_layer.4} parent=11 // pred_fallthru
        _
      // Predicated region
      $region29: #{decoder_layer.4} parent=11 // pred_check
        %p332 = pneg %p214
      $region30: #{decoder_layer.4} parent=11 // pred_check_branch
        %334 = sbr.rel (%p332) target = $region32
      $region31: #{decoder_layer.4} parent=11 // pred_region
        _
      $region32: #{decoder_layer.4} parent=11 // pred_fallthru
        _
      // Predicated region
      $region33: #{decoder_layer.4} parent=11 // pred_check
        %p335 = pneg %p235
      $region34: #{decoder_layer.4} parent=11 // pred_check_branch
        %337 = sbr.rel (%p335) target = $region36
      $region35: #{decoder_layer.4} parent=11 // pred_region
        _
      $region36: #{decoder_layer.4} parent=11 // pred_fallthru
        _
      // Predicated region
      $region37: #{decoder_layer.4} parent=11 // pred_check
        %p338 = pneg %p256
      $region38: #{decoder_layer.4} parent=11 // pred_check_branch
        %340 = sbr.rel (%p338) target = $region40
      $region39: #{decoder_layer.4} parent=11 // pred_region
        _
      $region40: #{decoder_layer.4} parent=11 // pred_fallthru
        _
      // Predicated region
      $region41: #{decoder_layer.4} parent=11 // pred_check
        %p341 = pneg %p277
      $region42: #{decoder_layer.4} parent=11 // pred_check_branch
        %343 = sbr.rel (%p341) target = $region44
      $region43: #{decoder_layer.4} parent=11 // pred_region
        _
      $region44: #{decoder_layer.4} parent=11 // pred_fallthru
        _
    $region12: #{decoder_layer.4} parent=5 // pred_fallthru
      _
    %p344 = scmp.lt.s32.totalorder %s17, 2
    // Predicated region
    $region45: #{decoder_layer.4} parent=5 // pred_check
      %p345 = pneg %p344
    $region46: #{decoder_layer.4} parent=5 // pred_check_branch
      %347 = sbr.rel (%p345) target = $region48
    $region47: #{decoder_layer.4} parent=5 // pred_region
      // Predicated region
      $region49: #{decoder_layer.4} parent=47 // pred_check
        %p348 = pneg %p51
      $region50: #{decoder_layer.4} parent=47 // pred_check_branch
        %350 = sbr.rel (%p348) target = $region52
      $region51: #{decoder_layer.4} parent=47 // pred_region
        %p351 = scmp.lt.s32.totalorder %s24, 1
        %s352 = scalar_select %p351, %s24, 1
        %p353 = scmp.lt.s32.totalorder %s25, 0
        %s354 = scalar_select %p353, %s25, 0
        %s355 = sadd.s32 %s354, %s352
        %s356 = smul.addr %s355, 8
        %s357 = scalar_lea.vmem %s0, %s356
      $region52: #{decoder_layer.4} parent=47 // pred_fallthru
        _
      // Predicated region
      $region53: #{decoder_layer.4} parent=47 // pred_check
        %p358 = pneg %p77
      $region54: #{decoder_layer.4} parent=47 // pred_check_branch
        %360 = sbr.rel (%p358) target = $region56
      $region55: #{decoder_layer.4} parent=47 // pred_region
        %p361 = scmp.lt.s32.totalorder %s24, 1
        %s362 = scalar_select %p361, %s24, 1
        %s363 = smul.addr %s362, 8
        %s364 = scalar_lea.vmem %s1, %s363
      $region56: #{decoder_layer.4} parent=47 // pred_fallthru
        _
      // Predicated region
      $region57: #{decoder_layer.4} parent=47 // pred_check
        %p365 = pneg %p103
      $region58: #{decoder_layer.4} parent=47 // pred_check_branch
        %367 = sbr.rel (%p365) target = $region60
      $region59: #{decoder_layer.4} parent=47 // pred_region
        %p368 = scmp.lt.s32.totalorder %s24, 1
        %s369 = scalar_select %p368, %s24, 1
        %s370 = scalar_lea.vmem %s2, %s369
      $region60: #{decoder_layer.4} parent=47 // pred_fallthru
        _
    $region48: #{decoder_layer.4} parent=5 // pred_fallthru
      _
    %p371 = scmp.le.s32.totalorder 1, %s17
    %p372 = scmp.lt.s32.totalorder %s17, 3
    %p373 = pnand %p371, %p372
    %p374 = pneg %p373
    // Predicated region
    $region61: #{decoder_layer.4} parent=5 // pred_check
      _
    $region62: #{decoder_layer.4} parent=5 // pred_check_branch
      %376 = sbr.rel (%p373) target = $region64
    $region63: #{decoder_layer.4} parent=5 // pred_region
      %s377 = ssub.s32 %s17, 1
      %p378 = scmp.lt.s32.totalorder %s26, 1
      %s379 = scalar_select %p378, %s26, 1
      %p380 = scmp.lt.s32.totalorder %s27, 0
      %s381 = scalar_select %p380, %s27, 0
      %s382 = sadd.s32 %s381, %s379
      %s383 = smul.addr %s382, 8
      %s384 = scalar_lea.vmem %s0, %s383
      %p385 = pneg %p57
      %p386 = pneg %p54
      %p387 = scmp.lt.s32.totalorder %s26, 1
      %s388 = scalar_select %p387, %s26, 1
      %s389 = smul.addr %s388, 8
      %s390 = scalar_lea.vmem %s1, %s389
      %p391 = pneg %p83
      %p392 = pneg %p80
      %p393 = scmp.lt.s32.totalorder %s26, 1
      %s394 = scalar_select %p393, %s26, 1
      %s395 = scalar_lea.vmem %s2, %s394
      %p396 = pneg %p109
      %p397 = pneg %p106
      %p398 = pneg %p130
      %p399 = pneg %p127
      %p400 = pneg %p151
      %p401 = pneg %p148
      %p402 = pneg %p172
      %p403 = pneg %p169
      %p404 = pneg %p193
      %p405 = pneg %p190
      %p406 = pneg %p214
      %p407 = pneg %p211
      %p408 = pneg %p235
      %p409 = pneg %p232
      %p410 = pneg %p256
      %p411 = pneg %p253
      %p412 = pneg %p277
      %p413 = pneg %p274
      %p414 = pneg %p305
      %p415 = pneg %p302
      %p416 = scmp.lt.s32.totalorder %s26, 1
      %s417 = scalar_select %p416, %s26, 1
      %p418 = scmp.lt.s32.totalorder %s27, 0
      %s419 = scalar_select %p418, %s27, 0
      %s420 = sadd.s32 %s419, %s417
      %s421 = smul.addr %s420, 8
      %s422 = scalar_lea.vmem %s11, %s421
      %p423 = scmp.lt.s32.totalorder %s26, 1
      %s424 = scalar_select %p423, %s26, 1
      %p425 = scmp.lt.s32.totalorder %s27, 0
      %s426 = scalar_select %p425, %s27, 0
      %s427 = sadd.s32 %s426, %s424
      %s428 = smul.addr %s427, 8
      %s429 = scalar_lea.vmem %s0, %s428
      %p430 = scmp.lt.s32.totalorder %s26, 1
      %s431 = scalar_select %p430, %s26, 1
      %s432 = smul.addr %s431, 8
      %s433 = scalar_lea.vmem %s1, %s432
      %p434 = scmp.lt.s32.totalorder %s26, 1
      %s435 = scalar_select %p434, %s26, 1
      %s436 = scalar_lea.vmem %s2, %s435
      %p437 = scmp.lt.s32.totalorder %s26, 1
      %s438 = scalar_select %p437, %s26, 1
      %p439 = scmp.lt.s32.totalorder %s27, 0
      %s440 = scalar_select %p439, %s27, 0
      %s441 = sadd.s32 %s440, %s438
      %s442 = smul.addr %s441, 8
      %s443 = scalar_lea.vmem %s11, %s442
      %v445 = vld [vmem:[%s429] sm:$0xff]
      %v446 = vld [vmem:[%s433] sm:$0xff]
      %v447 = vpack.c.bf16 %v445, %v445
      %v448 = vld [vmem:[%s3] sm:$0xf]
      %v449 = vld [vmem:[%s3 + $0x4] sm:$0xf]
      %v450 = vld [vmem:[%s3 + $0x8] sm:$0xf]
      %v451 = vld [vmem:[%s3 + $0xc] sm:$0xf]
      %v452 = vld [vmem:[%s4] sm:$0x1]
      %v454 = vlaneseq
      %v455 = vshrl.u32 %v454, 7
      %v456 = vsub.s32 0, %v455
      %v457 = vrot.slane %v452, %v456
      %v463 = vunpack.c.l.b16 %v448
      %v464 = vunpack.c.l.b16 %v449
      %v465 = vunpack.c.l.b16 %v450
      %v466 = vunpack.c.l.b16 %v451
      %v467 = vpack.c.b16 %v464, %v463
      %v468 = vpack.c.b16 %v466, %v465
      %vm471 = vcmask 261120
      %v473 = vsel %vm471, %v447, 0
      %475 = vmatprep.subr.bf16.mxu0 0
      %476 = vmatpush1.bf16.msra.mxu0 %v467
      %477 = vmatprep.subr.bf16.mxu0 0
      %478 = vmatpush1.bf16.msra.mxu0 %v468
      %479 = vmatprep.subr.bf16.mxu0 0
      %480 = vmatpush1.bf16.msra.mxu0 0
      %481 = vmatprep.subr.bf16.mxu0 0
      %482 = vmatpush1.bf16.msra.mxu0 0
      %483 = vmatprep.subr.bf16.mxu0 0
      %484 = vmatpush1.bf16.msra.mxu0 0
      %485 = vmatprep.subr.bf16.mxu0 0
      %486 = vmatpush1.bf16.msra.mxu0 0
      %487 = vmatprep.subr.bf16.mxu0 0
      %488 = vmatpush1.bf16.msra.mxu0 0
      %489 = vmatprep.subr.bf16.mxu0 0
      %490 = vmatpush1.bf16.msra.mxu0 0
      %491 = vmatprep.subr.bf16.mxu0 0
      %492 = vmatpush1.bf16.msra.mxu0 0
      %493 = vmatprep.subr.bf16.mxu0 0
      %494 = vmatpush1.bf16.msra.mxu0 0
      %495 = vmatprep.subr.bf16.mxu0 0
      %496 = vmatpush1.bf16.msra.mxu0 0
      %497 = vmatprep.subr.bf16.mxu0 0
      %498 = vmatpush1.bf16.msra.mxu0 0
      %499 = vmatprep.subr.bf16.mxu0 0
      %500 = vmatpush1.bf16.msra.mxu0 0
      %501 = vmatprep.subr.bf16.mxu0 0
      %502 = vmatpush1.bf16.msra.mxu0 0
      %503 = vmatprep.subr.bf16.mxu0 0
      %504 = vmatpush1.bf16.msra.mxu0 0
      %505 = vmatprep.subr.bf16.mxu0 0
      %506 = vmatpush1.bf16.msra.mxu0 0
      %507 = vmatprep.mubr.bf16.mxu0 0
      %508 = vmatmul.mubr.bf16.gmra.mrb[0].mxu0 %v473
      %v509 = vpop.f32.mrb[0].mxu0
      %v510 = vadd.f32 %v457, %v509
      %v511 = vpop.f32.mrb[0].mxu0
      %v512 = vpop.f32.mrb[0].mxu0
      %v513 = vpop.f32.mrb[0].mxu0
      %514 = vdwg.mxu0
      %v515 = vmul.f32 %v510, 0.35355338
      %v516 = vpack.c.bf16 %v515, %v515
      %v517 = vpack.c.bf16 %v446, %v446
      %v518 = vld [vmem:[%s5] sm:$0xf]
      %v519 = vld [vmem:[%s5 + $0x4] sm:$0xf]
      %v520 = vld [vmem:[%s5 + $0x8] sm:$0xf]
      %v521 = vld [vmem:[%s5 + $0xc] sm:$0xf]
      %v522 = vld [vmem:[%s6] sm:$0x1]
      %v524 = vlaneseq
      %v525 = vshrl.u32 %v524, 7
      %v526 = vsub.s32 0, %v525
      %v527 = vrot.slane %v522, %v526
      %v533 = vunpack.c.l.b16 %v518
      %v534 = vunpack.c.l.b16 %v519
      %v535 = vunpack.c.l.b16 %v520
      %v536 = vunpack.c.l.b16 %v521
      %v537 = vpack.c.b16 %v534, %v533
      %v538 = vpack.c.b16 %v536, %v535
      %v542 = vsel %vm471, %v517, 0
      %544 = vmatprep.subr.bf16.mxu0 0
      %545 = vmatpush1.bf16.msra.mxu0 %v537
      %546 = vmatprep.subr.bf16.mxu0 0
      %547 = vmatpush1.bf16.msra.mxu0 %v538
      %548 = vmatprep.subr.bf16.mxu0 0
      %549 = vmatpush1.bf16.msra.mxu0 0
      %550 = vmatprep.subr.bf16.mxu0 0
      %551 = vmatpush1.bf16.msra.mxu0 0
      %552 = vmatprep.subr.bf16.mxu0 0
      %553 = vmatpush1.bf16.msra.mxu0 0
      %554 = vmatprep.subr.bf16.mxu0 0
      %555 = vmatpush1.bf16.msra.mxu0 0
      %556 = vmatprep.subr.bf16.mxu0 0
      %557 = vmatpush1.bf16.msra.mxu0 0
      %558 = vmatprep.subr.bf16.mxu0 0
      %559 = vmatpush1.bf16.msra.mxu0 0
      %560 = vmatprep.subr.bf16.mxu0 0
      %561 = vmatpush1.bf16.msra.mxu0 0
      %562 = vmatprep.subr.bf16.mxu0 0
      %563 = vmatpush1.bf16.msra.mxu0 0
      %564 = vmatprep.subr.bf16.mxu0 0
      %565 = vmatpush1.bf16.msra.mxu0 0
      %566 = vmatprep.subr.bf16.mxu0 0
      %567 = vmatpush1.bf16.msra.mxu0 0
      %568 = vmatprep.subr.bf16.mxu0 0
      %569 = vmatpush1.bf16.msra.mxu0 0
      %570 = vmatprep.subr.bf16.mxu0 0
      %571 = vmatpush1.bf16.msra.mxu0 0
      %572 = vmatprep.subr.bf16.mxu0 0
      %573 = vmatpush1.bf16.msra.mxu0 0
      %574 = vmatprep.subr.bf16.mxu0 0
      %575 = vmatpush1.bf16.msra.mxu0 0
      %576 = vmatprep.mubr.bf16.mxu0 0
      %577 = vmatmul.mubr.bf16.gmra.mrb[0].mxu0 %v542
      %v578 = vpop.f32.mrb[0].mxu0
      %v579 = vadd.f32 %v527, %v578
      %v580 = vpop.f32.mrb[0].mxu0
      %v581 = vpop.f32.mrb[0].mxu0
      %v582 = vpop.f32.mrb[0].mxu0
      %583 = vdwg.mxu0
      %v584 = vpack.c.bf16 %v579, %v579
      %v585 = vld [vmem:[%s436] sm:$0x1]
      %v586 = vsub.f32 1.0, %v585
      %v587 = vmul.f32 %v586, -10000.0
      %v589 = vlaneseq
      %v590 = vshrl.u32 %v589, 7
      %v591 = vsub.s32 0, %v590
      %v592 = vrot.slane %v587, %v591
      %vm594 = vcmask 64512
      %v596 = vsel %vm594, %v516, 0
      %v599 = vsel %vm594, %v584, 0
      %601 = vmatprep.subr.bf16.mxu0 0
      %602 = vmatpush1.bf16.xpose.msra.mxu0 %v599
      %603 = vmatprep.subr.bf16.mxu0 0
      %604 = vmatpush1.bf16.xpose.msra.mxu0 0
      %605 = vmatprep.subr.bf16.mxu0 0
      %606 = vmatpush1.bf16.xpose.msra.mxu0 0
      %607 = vmatprep.subr.bf16.mxu0 0
      %608 = vmatpush1.bf16.xpose.msra.mxu0 0
      %609 = vmatprep.subr.bf16.mxu0 0
      %610 = vmatpush1.bf16.xpose.msra.mxu0 0
      %611 = vmatprep.subr.bf16.mxu0 0
      %612 = vmatpush1.bf16.xpose.msra.mxu0 0
      %613 = vmatprep.subr.bf16.mxu0 0
      %614 = vmatpush1.bf16.xpose.msra.mxu0 0
      %615 = vmatprep.subr.bf16.mxu0 0
      %616 = vmatpush1.bf16.xpose.msra.mxu0 0
      %617 = vmatprep.subr.bf16.mxu0 0
      %618 = vmatpush1.bf16.xpose.msra.mxu0 0
      %619 = vmatprep.subr.bf16.mxu0 0
      %620 = vmatpush1.bf16.xpose.msra.mxu0 0
      %621 = vmatprep.subr.bf16.mxu0 0
      %622 = vmatpush1.bf16.xpose.msra.mxu0 0
      %623 = vmatprep.subr.bf16.mxu0 0
      %624 = vmatpush1.bf16.xpose.msra.mxu0 0
      %625 = vmatprep.subr.bf16.mxu0 0
      %626 = vmatpush1.bf16.xpose.msra.mxu0 0
      %627 = vmatprep.subr.bf16.mxu0 0
      %628 = vmatpush1.bf16.xpose.msra.mxu0 0
      %629 = vmatprep.subr.bf16.mxu0 0
      %630 = vmatpush1.bf16.xpose.msra.mxu0 0
      %631 = vmatprep.subr.bf16.mxu0 0
      %632 = vmatpush1.bf16.xpose.msra.mxu0 0
      %633 = vmatprep.mubr.bf16.mxu0 0
      %634 = vmatmul.mubr.bf16.gmra.mrb[0].mxu0 %v596
      %v635 = vpop.f32.mrb[0].mxu0
      %v636 = vadd.f32 %v592, %v635
      %v637 = vpop.f32.mrb[0].mxu0
      %v638 = vpop.f32.mrb[0].mxu0
      %v639 = vpop.f32.mrb[0].mxu0
      %640 = vdwg.mxu0
      %v641 = vsel %vm594, %v636, -inf
      %642 = vmax.xlane.f32.xlu0 %v641
      %v643 = vpop.xlane.xlu0 %642
      %v644 = vsub.f32 %v636, %v643
      %v645 = vmul.f32 %v644, 1.442695
      %v646 = vpow.pop %v645
      %v647 = vsel %vm594, %v646, 0.0
      %648 = vadd.xlane.f32.xlu0 %v647
      %v649 = vpop.xlane.xlu0 %648
      %v650 = vrcp.pop %v649
      %v651 = vmul.f32 %v646, %v650
      %v652 = vpack.c.bf16 %v651, %v651
      %654 = vrot.lane.b32.xlu0 %v584, 96
      %v655 = vpop.permute.xlu0 %654
      %v657 = vsel %vm594, %v652, 0
      %vm659 = vcmask 1043456
      %v661 = vsel %vm659, %v655, 0
      %663 = vmatprep.subr.bf16.mxu0 0
      %664 = vmatpush1.bf16.msra.mxu0 %v661
      %665 = vmatprep.subr.bf16.mxu0 0
      %666 = vmatpush1.bf16.msra.mxu0 0
      %667 = vmatprep.subr.bf16.mxu0 0
      %668 = vmatpush1.bf16.msra.mxu0 0
      %669 = vmatprep.subr.bf16.mxu0 0
      %670 = vmatpush1.bf16.msra.mxu0 0
      %671 = vmatprep.subr.bf16.mxu0 0
      %672 = vmatpush1.bf16.msra.mxu0 0
      %673 = vmatprep.subr.bf16.mxu0 0
      %674 = vmatpush1.bf16.msra.mxu0 0
      %675 = vmatprep.subr.bf16.mxu0 0
      %676 = vmatpush1.bf16.msra.mxu0 0
      %677 = vmatprep.subr.bf16.mxu0 0
      %678 = vmatpush1.bf16.msra.mxu0 0
      %679 = vmatprep.subr.bf16.mxu0 0
      %680 = vmatpush1.bf16.msra.mxu0 0
      %681 = vmatprep.subr.bf16.mxu0 0
      %682 = vmatpush1.bf16.msra.mxu0 0
      %683 = vmatprep.subr.bf16.mxu0 0
      %684 = vmatpush1.bf16.msra.mxu0 0
      %685 = vmatprep.subr.bf16.mxu0 0
      %686 = vmatpush1.bf16.msra.mxu0 0
      %687 = vmatprep.subr.bf16.mxu0 0
      %688 = vmatpush1.bf16.msra.mxu0 0
      %689 = vmatprep.subr.bf16.mxu0 0
      %690 = vmatpush1.bf16.msra.mxu0 0
      %691 = vmatprep.subr.bf16.mxu0 0
      %692 = vmatpush1.bf16.msra.mxu0 0
      %693 = vmatprep.subr.bf16.mxu0 0
      %694 = vmatpush1.bf16.msra.mxu0 0
      %695 = vmatprep.mubr.bf16.mxu0 0
      %696 = vmatmul.mubr.bf16.gmra.mrb[0].mxu0 %v657
      %v697 = vpop.f32.mrb[0].mxu0
      %v698 = vadd.f32 0.0, %v697
      %v699 = vpop.f32.mrb[0].mxu0
      %v700 = vpop.f32.mrb[0].mxu0
      %v701 = vpop.f32.mrb[0].mxu0
      %702 = vdwg.mxu0
      %703 = vst.msk [vmem:[#allocation2] sm:$0xff] %vm594, %v698
      %705 = vrot.lane.b32.xlu0 %v516, 120
      %v706 = vpop.permute.xlu0 %705
      %707 = vrot.lane.b32.xlu0 %v584, 120
      %v708 = vpop.permute.xlu0 %707
      %v710 = vsel %vm594, %v706, 0
      %v713 = vsel %vm594, %v708, 0
      %715 = vmatprep.subr.bf16.mxu0 0
      %716 = vmatpush1.bf16.xpose.msra.mxu0 %v713
      %717 = vmatprep.subr.bf16.mxu0 0
      %718 = vmatpush1.bf16.xpose.msra.mxu0 0
      %719 = vmatprep.subr.bf16.mxu0 0
      %720 = vmatpush1.bf16.xpose.msra.mxu0 0
      %721 = vmatprep.subr.bf16.mxu0 0
      %722 = vmatpush1.bf16.xpose.msra.mxu0 0
      %723 = vmatprep.subr.bf16.mxu0 0
      %724 = vmatpush1.bf16.xpose.msra.mxu0 0
      %725 = vmatprep.subr.bf16.mxu0 0
      %726 = vmatpush1.bf16.xpose.msra.mxu0 0
      %727 = vmatprep.subr.bf16.mxu0 0
      %728 = vmatpush1.bf16.xpose.msra.mxu0 0
      %729 = vmatprep.subr.bf16.mxu0 0
      %730 = vmatpush1.bf16.xpose.msra.mxu0 0
      %731 = vmatprep.subr.bf16.mxu0 0
      %732 = vmatpush1.bf16.xpose.msra.mxu0 0
      %733 = vmatprep.subr.bf16.mxu0 0
      %734 = vmatpush1.bf16.xpose.msra.mxu0 0
      %735 = vmatprep.subr.bf16.mxu0 0
      %736 = vmatpush1.bf16.xpose.msra.mxu0 0
      %737 = vmatprep.subr.bf16.mxu0 0
      %738 = vmatpush1.bf16.xpose.msra.mxu0 0
      %739 = vmatprep.subr.bf16.mxu0 0
      %740 = vmatpush1.bf16.xpose.msra.mxu0 0
      %741 = vmatprep.subr.bf16.mxu0 0
      %742 = vmatpush1.bf16.xpose.msra.mxu0 0
      %743 = vmatprep.subr.bf16.mxu0 0
      %744 = vmatpush1.bf16.xpose.msra.mxu0 0
      %745 = vmatprep.subr.bf16.mxu0 0
      %746 = vmatpush1.bf16.xpose.msra.mxu0 0
      %747 = vmatprep.mubr.bf16.mxu0 0
      %748 = vmatmul.mubr.bf16.gmra.mrb[0].mxu0 %v710
      %v749 = vpop.f32.mrb[0].mxu0
      %v750 = vadd.f32 %v592, %v749
      %v751 = vpop.f32.mrb[0].mxu0
      %v752 = vpop.f32.mrb[0].mxu0
      %v753 = vpop.f32.mrb[0].mxu0
      %754 = vdwg.mxu0
      %v755 = vsel %vm594, %v750, -inf
      %756 = vmax.xlane.f32.xlu0 %v755
      %v757 = vpop.xlane.xlu0 %756
      %v758 = vsub.f32 %v750, %v757
      %v759 = vmul.f32 %v758, 1.442695
      %v760 = vpow.pop %v759
      %v761 = vsel %vm594, %v760, 0.0
      %762 = vadd.xlane.f32.xlu0 %v761
      %v763 = vpop.xlane.xlu0 %762
      %v764 = vrcp.pop %v763
      %v765 = vmul.f32 %v760, %v764
      %v766 = vpack.c.bf16 %v765, %v765
      %767 = vrot.lane.b32.xlu0 %v584, 88
      %v768 = vpop.permute.xlu0 %767
      %v770 = vsel %vm594, %v766, 0
      %v773 = vsel %vm659, %v768, 0
      %775 = vmatprep.subr.bf16.mxu0 0
      %776 = vmatpush1.bf16.msra.mxu0 %v773
      %777 = vmatprep.subr.bf16.mxu0 0
      %778 = vmatpush1.bf16.msra.mxu0 0
      %779 = vmatprep.subr.bf16.mxu0 0
      %780 = vmatpush1.bf16.msra.mxu0 0
      %781 = vmatprep.subr.bf16.mxu0 0
      %782 = vmatpush1.bf16.msra.mxu0 0
      %783 = vmatprep.subr.bf16.mxu0 0
      %784 = vmatpush1.bf16.msra.mxu0 0
      %785 = vmatprep.subr.bf16.mxu0 0
      %786 = vmatpush1.bf16.msra.mxu0 0
      %787 = vmatprep.subr.bf16.mxu0 0
      %788 = vmatpush1.bf16.msra.mxu0 0
      %789 = vmatprep.subr.bf16.mxu0 0
      %790 = vmatpush1.bf16.msra.mxu0 0
      %791 = vmatprep.subr.bf16.mxu0 0
      %792 = vmatpush1.bf16.msra.mxu0 0
      %793 = vmatprep.subr.bf16.mxu0 0
      %794 = vmatpush1.bf16.msra.mxu0 0
      %795 = vmatprep.subr.bf16.mxu0 0
      %796 = vmatpush1.bf16.msra.mxu0 0
      %797 = vmatprep.subr.bf16.mxu0 0
      %798 = vmatpush1.bf16.msra.mxu0 0
      %799 = vmatprep.subr.bf16.mxu0 0
      %800 = vmatpush1.bf16.msra.mxu0 0
      %801 = vmatprep.subr.bf16.mxu0 0
      %802 = vmatpush1.bf16.msra.mxu0 0
      %803 = vmatprep.subr.bf16.mxu0 0
      %804 = vmatpush1.bf16.msra.mxu0 0
      %805 = vmatprep.subr.bf16.mxu0 0
      %806 = vmatpush1.bf16.msra.mxu0 0
      %807 = vmatprep.mubr.bf16.mxu0 0
      %808 = vmatmul.mubr.bf16.gmra.mrb[0].mxu0 %v770
      %v809 = vpop.f32.mrb[0].mxu0
      %v810 = vadd.f32 0.0, %v809
      %v811 = vpop.f32.mrb[0].mxu0
      %v812 = vpop.f32.mrb[0].mxu0
      %v813 = vpop.f32.mrb[0].mxu0
      %814 = vdwg.mxu0
      %816 = vrot.lane.b32.xlu0 %v810, 8
      %v817 = vpop.permute.xlu0 %816
      %vm819 = vcmask 130112
      %820 = vst.msk [vmem:[#allocation2] sm:$0xff] %vm819, %v817
      %821 = vrot.lane.b32.xlu0 %v516, 112
      %v822 = vpop.permute.xlu0 %821
      %823 = vrot.lane.b32.xlu0 %v584, 112
      %v824 = vpop.permute.xlu0 %823
      %v826 = vsel %vm594, %v822, 0
      %v829 = vsel %vm594, %v824, 0
      %831 = vmatprep.subr.bf16.mxu0 0
      %832 = vmatpush1.bf16.xpose.msra.mxu0 %v829
      %833 = vmatprep.subr.bf16.mxu0 0
      %834 = vmatpush1.bf16.xpose.msra.mxu0 0
      %835 = vmatprep.subr.bf16.mxu0 0
      %836 = vmatpush1.bf16.xpose.msra.mxu0 0
      %837 = vmatprep.subr.bf16.mxu0 0
      %838 = vmatpush1.bf16.xpose.msra.mxu0 0
      %839 = vmatprep.subr.bf16.mxu0 0
      %840 = vmatpush1.bf16.xpose.msra.mxu0 0
      %841 = vmatprep.subr.bf16.mxu0 0
      %842 = vmatpush1.bf16.xpose.msra.mxu0 0
      %843 = vmatprep.subr.bf16.mxu0 0
      %844 = vmatpush1.bf16.xpose.msra.mxu0 0
      %845 = vmatprep.subr.bf16.mxu0 0
      %846 = vmatpush1.bf16.xpose.msra.mxu0 0
      %847 = vmatprep.subr.bf16.mxu0 0
      %848 = vmatpush1.bf16.xpose.msra.mxu0 0
      %849 = vmatprep.subr.bf16.mxu0 0
      %850 = vmatpush1.bf16.xpose.msra.mxu0 0
      %851 = vmatprep.subr.bf16.mxu0 0
      %852 = vmatpush1.bf16.xpose.msra.mxu0 0
      %853 = vmatprep.subr.bf16.mxu0 0
      %854 = vmatpush1.bf16.xpose.msra.mxu0 0
      %855 = vmatprep.subr.bf16.mxu0 0
      %856 = vmatpush1.bf16.xpose.msra.mxu0 0
      %857 = vmatprep.subr.bf16.mxu0 0
      %858 = vmatpush1.bf16.xpose.msra.mxu0 0
      %859 = vmatprep.subr.bf16.mxu0 0
      %860 = vmatpush1.bf16.xpose.msra.mxu0 0
      %861 = vmatprep.subr.bf16.mxu0 0
      %862 = vmatpush1.bf16.xpose.msra.mxu0 0
      %863 = vmatprep.mubr.bf16.mxu0 0
      %864 = vmatmul.mubr.bf16.gmra.mrb[0].mxu0 %v826
      %v865 = vpop.f32.mrb[0].mxu0
      %v866 = vadd.f32 %v592, %v865
      %v867 = vpop.f32.mrb[0].mxu0
      %v868 = vpop.f32.mrb[0].mxu0
      %v869 = vpop.f32.mrb[0].mxu0
      %870 = vdwg.mxu0
      %v871 = vsel %vm594, %v866, -inf
      %872 = vmax.xlane.f32.xlu0 %v871
      %v873 = vpop.xlane.xlu0 %872
      %v874 = vsub.f32 %v866, %v873
      %v875 = vmul.f32 %v874, 1.442695
      %v876 = vpow.pop %v875
      %v877 = vsel %vm594, %v876, 0.0
      %878 = vadd.xlane.f32.xlu0 %v877
      %v879 = vpop.xlane.xlu0 %878
      %v880 = vrcp.pop %v879
      %v881 = vmul.f32 %v876, %v880
      %v882 = vpack.c.bf16 %v881, %v881
      %883 = vrot.lane.b32.xlu0 %v584, 80
      %v884 = vpop.permute.xlu0 %883
      %v886 = vsel %vm594, %v882, 0
      %v889 = vsel %vm659, %v884, 0
      %891 = vmatprep.subr.bf16.mxu0 0
      %892 = vmatpush1.bf16.msra.mxu0 %v889
      %893 = vmatprep.subr.bf16.mxu0 0
      %894 = vmatpush1.bf16.msra.mxu0 0
      %895 = vmatprep.subr.bf16.mxu0 0
      %896 = vmatpush1.bf16.msra.mxu0 0
      %897 = vmatprep.subr.bf16.mxu0 0
      %898 = vmatpush1.bf16.msra.mxu0 0
      %899 = vmatprep.subr.bf16.mxu0 0
      %900 = vmatpush1.bf16.msra.mxu0 0
      %901 = vmatprep.subr.bf16.mxu0 0
      %902 = vmatpush1.bf16.msra.mxu0 0
      %903 = vmatprep.subr.bf16.mxu0 0
      %904 = vmatpush1.bf16.msra.mxu0 0
      %905 = vmatprep.subr.bf16.mxu0 0
      %906 = vmatpush1.bf16.msra.mxu0 0
      %907 = vmatprep.subr.bf16.mxu0 0
      %908 = vmatpush1.bf16.msra.mxu0 0
      %909 = vmatprep.subr.bf16.mxu0 0
      %910 = vmatpush1.bf16.msra.mxu0 0
      %911 = vmatprep.subr.bf16.mxu0 0
      %912 = vmatpush1.bf16.msra.mxu0 0
      %913 = vmatprep.subr.bf16.mxu0 0
      %914 = vmatpush1.bf16.msra.mxu0 0
      %915 = vmatprep.subr.bf16.mxu0 0
      %916 = vmatpush1.bf16.msra.mxu0 0
      %917 = vmatprep.subr.bf16.mxu0 0
      %918 = vmatpush1.bf16.msra.mxu0 0
      %919 = vmatprep.subr.bf16.mxu0 0
      %920 = vmatpush1.bf16.msra.mxu0 0
      %921 = vmatprep.subr.bf16.mxu0 0
      %922 = vmatpush1.bf16.msra.mxu0 0
      %923 = vmatprep.mubr.bf16.mxu0 0
      %924 = vmatmul.mubr.bf16.gmra.mrb[0].mxu0 %v886
      %v925 = vpop.f32.mrb[0].mxu0
      %v926 = vadd.f32 0.0, %v925
      %v927 = vpop.f32.mrb[0].mxu0
      %v928 = vpop.f32.mrb[0].mxu0
      %v929 = vpop.f32.mrb[0].mxu0
      %930 = vdwg.mxu0
      %932 = vrot.lane.b32.xlu0 %v926, 16
      %v933 = vpop.permute.xlu0 %932
      %vm935 = vcmask 195712
      %936 = vst.msk [vmem:[#allocation2] sm:$0xff] %vm935, %v933
      %937 = vrot.lane.b32.xlu0 %v516, 104
      %v938 = vpop.permute.xlu0 %937
      %939 = vrot.lane.b32.xlu0 %v584, 104
      %v940 = vpop.permute.xlu0 %939
      %v942 = vsel %vm594, %v938, 0
      %v945 = vsel %vm594, %v940, 0
      %947 = vmatprep.subr.bf16.mxu0 0
      %948 = vmatpush1.bf16.xpose.msra.mxu0 %v945
      %949 = vmatprep.subr.bf16.mxu0 0
      %950 = vmatpush1.bf16.xpose.msra.mxu0 0
      %951 = vmatprep.subr.bf16.mxu0 0
      %952 = vmatpush1.bf16.xpose.msra.mxu0 0
      %953 = vmatprep.subr.bf16.mxu0 0
      %954 = vmatpush1.bf16.xpose.msra.mxu0 0
      %955 = vmatprep.subr.bf16.mxu0 0
      %956 = vmatpush1.bf16.xpose.msra.mxu0 0
      %957 = vmatprep.subr.bf16.mxu0 0
      %958 = vmatpush1.bf16.xpose.msra.mxu0 0
      %959 = vmatprep.subr.bf16.mxu0 0
      %960 = vmatpush1.bf16.xpose.msra.mxu0 0
      %961 = vmatprep.subr.bf16.mxu0 0
      %962 = vmatpush1.bf16.xpose.msra.mxu0 0
      %963 = vmatprep.subr.bf16.mxu0 0
      %964 = vmatpush1.bf16.xpose.msra.mxu0 0
      %965 = vmatprep.subr.bf16.mxu0 0
      %966 = vmatpush1.bf16.xpose.msra.mxu0 0
      %967 = vmatprep.subr.bf16.mxu0 0
      %968 = vmatpush1.bf16.xpose.msra.mxu0 0
      %969 = vmatprep.subr.bf16.mxu0 0
      %970 = vmatpush1.bf16.xpose.msra.mxu0 0
      %971 = vmatprep.subr.bf16.mxu0 0
      %972 = vmatpush1.bf16.xpose.msra.mxu0 0
      %973 = vmatprep.subr.bf16.mxu0 0
      %974 = vmatpush1.bf16.xpose.msra.mxu0 0
      %975 = vmatprep.subr.bf16.mxu0 0
      %976 = vmatpush1.bf16.xpose.msra.mxu0 0
      %977 = vmatprep.subr.bf16.mxu0 0
      %978 = vmatpush1.bf16.xpose.msra.mxu0 0
      %979 = vmatprep.mubr.bf16.mxu0 0
      %980 = vmatmul.mubr.bf16.gmra.mrb[0].mxu0 %v942
      %v981 = vpop.f32.mrb[0].mxu0
      %v982 = vadd.f32 %v592, %v981
      %v983 = vpop.f32.mrb[0].mxu0
      %v984 = vpop.f32.mrb[0].mxu0
      %v985 = vpop.f32.mrb[0].mxu0
      %986 = vdwg.mxu0
      %v987 = vsel %vm594, %v982, -inf
      %988 = vmax.xlane.f32.xlu0 %v987
      %v989 = vpop.xlane.xlu0 %988
      %v990 = vsub.f32 %v982, %v989
      %v991 = vmul.f32 %v990, 1.442695
      %v992 = vpow.pop %v991
      %v993 = vsel %vm594, %v992, 0.0
      %994 = vadd.xlane.f32.xlu0 %v993
      %v995 = vpop.xlane.xlu0 %994
      %v996 = vrcp.pop %v995
      %v997 = vmul.f32 %v992, %v996
      %v998 = vpack.c.bf16 %v997, %v997
      %999 = vrot.lane.b32.xlu0 %v584, 72
      %v1000 = vpop.permute.xlu0 %999
      %v1002 = vsel %vm594, %v998, 0
      %v1005 = vsel %vm659, %v1000, 0
      %1007 = vmatprep.subr.bf16.mxu0 0
      %1008 = vmatpush1.bf16.msra.mxu0 %v1005
      %1009 = vmatprep.subr.bf16.mxu0 0
      %1010 = vmatpush1.bf16.msra.mxu0 0
      %1011 = vmatprep.subr.bf16.mxu0 0
      %1012 = vmatpush1.bf16.msra.mxu0 0
      %1013 = vmatprep.subr.bf16.mxu0 0
      %1014 = vmatpush1.bf16.msra.mxu0 0
      %1015 = vmatprep.subr.bf16.mxu0 0
      %1016 = vmatpush1.bf16.msra.mxu0 0
      %1017 = vmatprep.subr.bf16.mxu0 0
      %1018 = vmatpush1.bf16.msra.mxu0 0
      %1019 = vmatprep.subr.bf16.mxu0 0
      %1020 = vmatpush1.bf16.msra.mxu0 0
      %1021 = vmatprep.subr.bf16.mxu0 0
      %1022 = vmatpush1.bf16.msra.mxu0 0
      %1023 = vmatprep.subr.bf16.mxu0 0
      %1024 = vmatpush1.bf16.msra.mxu0 0
      %1025 = vmatprep.subr.bf16.mxu0 0
      %1026 = vmatpush1.bf16.msra.mxu0 0
      %1027 = vmatprep.subr.bf16.mxu0 0
      %1028 = vmatpush1.bf16.msra.mxu0 0
      %1029 = vmatprep.subr.bf16.mxu0 0
      %1030 = vmatpush1.bf16.msra.mxu0 0
      %1031 = vmatprep.subr.bf16.mxu0 0
      %1032 = vmatpush1.bf16.msra.mxu0 0
      %1033 = vmatprep.subr.bf16.mxu0 0
      %1034 = vmatpush1.bf16.msra.mxu0 0
      %1035 = vmatprep.subr.bf16.mxu0 0
      %1036 = vmatpush1.bf16.msra.mxu0 0
      %1037 = vmatprep.subr.bf16.mxu0 0
      %1038 = vmatpush1.bf16.msra.mxu0 0
      %1039 = vmatprep.mubr.bf16.mxu0 0
      %1040 = vmatmul.mubr.bf16.gmra.mrb[0].mxu0 %v1002
      %v1041 = vpop.f32.mrb[0].mxu0
      %v1042 = vadd.f32 0.0, %v1041
      %v1043 = vpop.f32.mrb[0].mxu0
      %v1044 = vpop.f32.mrb[0].mxu0
      %v1045 = vpop.f32.mrb[0].mxu0
      %1046 = vdwg.mxu0
      %1048 = vrot.lane.b32.xlu0 %v1042, 24
      %v1049 = vpop.permute.xlu0 %1048
      %vm1051 = vcmask 261312
      %1052 = vst.msk [vmem:[#allocation2] sm:$0xff] %vm1051, %v1049
      %v1053 = vld [vmem:[#allocation2] sm:$0xff]
      %v1054 = vpack.c.bf16 %v1053, %v1053
      %v1055 = vld [vmem:[%s7] sm:$0xf]
      %v1056 = vld [vmem:[%s7 + $0x4] sm:$0xf]
      %v1057 = vld [vmem:[%s7 + $0x8] sm:$0xf]
      %v1058 = vld [vmem:[%s7 + $0xc] sm:$0xf]
      %v1059 = vld [vmem:[%s8] sm:$0x1]
      %v1061 = vlaneseq
      %v1062 = vshrl.u32 %v1061, 7
      %v1063 = vsub.s32 0, %v1062
      %v1064 = vrot.slane %v1059, %v1063
      %v1070 = vunpack.c.l.b16 %v1055
      %v1071 = vunpack.c.l.b16 %v1056
      %v1072 = vunpack.c.l.b16 %v1057
      %v1073 = vunpack.c.l.b16 %v1058
      %v1074 = vpack.c.b16 %v1071, %v1070
      %v1075 = vpack.c.b16 %v1073, %v1072
      %v1079 = vsel %vm471, %v1054, 0
      %1081 = vmatprep.subr.bf16.mxu0 0
      %1082 = vmatpush1.bf16.msra.mxu0 %v1074
      %1083 = vmatprep.subr.bf16.mxu0 0
      %1084 = vmatpush1.bf16.msra.mxu0 %v1075
      %1085 = vmatprep.subr.bf16.mxu0 0
      %1086 = vmatpush1.bf16.msra.mxu0 0
      %1087 = vmatprep.subr.bf16.mxu0 0
      %1088 = vmatpush1.bf16.msra.mxu0 0
      %1089 = vmatprep.subr.bf16.mxu0 0
      %1090 = vmatpush1.bf16.msra.mxu0 0
      %1091 = vmatprep.subr.bf16.mxu0 0
      %1092 = vmatpush1.bf16.msra.mxu0 0
      %1093 = vmatprep.subr.bf16.mxu0 0
      %1094 = vmatpush1.bf16.msra.mxu0 0
      %1095 = vmatprep.subr.bf16.mxu0 0
      %1096 = vmatpush1.bf16.msra.mxu0 0
      %1097 = vmatprep.subr.bf16.mxu0 0
      %1098 = vmatpush1.bf16.msra.mxu0 0
      %1099 = vmatprep.subr.bf16.mxu0 0
      %1100 = vmatpush1.bf16.msra.mxu0 0
      %1101 = vmatprep.subr.bf16.mxu0 0
      %1102 = vmatpush1.bf16.msra.mxu0 0
      %1103 = vmatprep.subr.bf16.mxu0 0
      %1104 = vmatpush1.bf16.msra.mxu0 0
      %1105 = vmatprep.subr.bf16.mxu0 0
      %1106 = vmatpush1.bf16.msra.mxu0 0
      %1107 = vmatprep.subr.bf16.mxu0 0
      %1108 = vmatpush1.bf16.msra.mxu0 0
      %1109 = vmatprep.subr.bf16.mxu0 0
      %1110 = vmatpush1.bf16.msra.mxu0 0
      %1111 = vmatprep.subr.bf16.mxu0 0
      %1112 = vmatpush1.bf16.msra.mxu0 0
      %1113 = vmatprep.mubr.bf16.mxu0 0
      %1114 = vmatmul.mubr.bf16.gmra.mrb[0].mxu0 %v1079
      %v1115 = vpop.f32.mrb[0].mxu0
      %v1116 = vadd.f32 %v1064, %v1115
      %v1117 = vpop.f32.mrb[0].mxu0
      %v1118 = vpop.f32.mrb[0].mxu0
      %v1119 = vpop.f32.mrb[0].mxu0
      %1120 = vdwg.mxu0
      %v1121 = vadd.f32 %v1116, %v445
      %v1122 = vsel %vm471, %v1121, 0.0
      %1123 = vadd.xlane.f32.xlu0 %v1122
      %v1124 = vpop.xlane.xlu0 %1123
      %v1125 = vrcp.pop 32.0
      %v1126 = vmul.f32 %v1124, %v1125
      %v1127 = vsub.f32 %v1121, %v1126
      %v1128 = vmul.f32 %v1127, %v1127
      %v1129 = vsel %vm471, %v1128, 0.0
      %1130 = vadd.xlane.f32.xlu0 %v1129
      %v1131 = vpop.xlane.xlu0 %1130
      %v1132 = vmul.f32 %v1131, %v1125
      %v1133 = vadd.f32 %v1132, 1e-12
      %v1134 = vrsqrt.pop %v1133
      %v1135 = vmul.f32 %v1127, %v1134
      %v1136 = vld [vmem:[%s9] sm:$0x1]
      %v1138 = vlaneseq
      %v1139 = vshrl.u32 %v1138, 7
      %v1140 = vsub.s32 0, %v1139
      %v1141 = vrot.slane %v1136, %v1140
      %v1143 = vmul.f32 %v1135, %v1141
      %v1144 = vld [vmem:[%s10] sm:$0x1]
      %v1146 = vlaneseq
      %v1147 = vshrl.u32 %v1146, 7
      %v1148 = vsub.s32 0, %v1147
      %v1149 = vrot.slane %v1144, %v1148
      %v1151 = vadd.f32 %v1143, %v1149
      %1152 = vst.msk [vmem:[%s443] sm:$0xff] %vm471, %v1151
      %p1153 = scmp.lt.s32.totalorder %s26, 1
      %s1154 = scalar_select %p1153, %s26, 1
      %p1155 = scmp.lt.s32.totalorder %s27, 0
      %s1156 = scalar_select %p1155, %s27, 0
      %s1157 = sadd.s32 %s1156, %s1154
      %s1158 = smul.addr %s1157, 8
      %s1159 = scalar_lea.vmem %s11, %s1158
      // Predicated region
      $region65: #{decoder_layer.4} parent=63 // pred_check
        %p1160 = pneg %p302
      $region66: #{decoder_layer.4} parent=63 // pred_check_branch
        %1162 = sbr.rel (%p1160) target = $region68
      $region67: #{decoder_layer.4} parent=63 // pred_region
        _
      $region68: #{decoder_layer.4} parent=63 // pred_fallthru
        _
    $region64: #{decoder_layer.4} parent=5 // pred_fallthru
      _
    %p1163 = scmp.le.s32.totalorder 2, %s17
    // Predicated region
    $region69: #{decoder_layer.4} parent=5 // pred_check
      %p1164 = pneg %p1163
    $region70: #{decoder_layer.4} parent=5 // pred_check_branch
      %1166 = sbr.rel (%p1164) target = $region72
    $region71: #{decoder_layer.4} parent=5 // pred_region
      %s1167 = ssub.s32 %s17, 2
      // Predicated region
      $region73: #{decoder_layer.4} parent=71 // pred_check
        %p1168 = pneg %p308
      $region74: #{decoder_layer.4} parent=71 // pred_check_branch
        %1170 = sbr.rel (%p1168) target = $region76
      $region75: #{decoder_layer.4} parent=71 // pred_region
        %p1171 = scmp.lt.s32.totalorder %s28, 1
        %s1172 = scalar_select %p1171, %s28, 1
        %p1173 = scmp.lt.s32.totalorder %s29, 0
        %s1174 = scalar_select %p1173, %s29, 0
        %s1175 = sadd.s32 %s1174, %s1172
        %s1176 = smul.addr %s1175, 8
        %s1177 = scalar_lea.vmem %s11, %s1176
      $region76: #{decoder_layer.4} parent=71 // pred_fallthru
        _
    $region72: #{decoder_layer.4} parent=5 // pred_fallthru
      _
  $region6: #{decoder_layer.4} parent=0 // loop_footer
    %s21 = sadd.s32 1, %s17
  $region7: #{decoder_layer.4} parent=0 // loop_footer_branch
    %16 = sbr.rel target = $region3
  $region8: #{decoder_layer.4} parent=0 // loop_exit
    _

// kernel: decoder_layer.3
$region0: #{decoder_layer.3}
  #allocation0 [shape = 'u32[]', space=smem, size = 0x4, offset = 0x4, fixed_abs, tag = 'smem constant byte address 0x4 - core index']
  #allocation1 [shape = 'u32[144,128]{1,0:T(1,128)}', space=vmem, size = 0x12000, scoped, tag = 'internal scratch']
  #allocation2 [shape = 'f32[8,32]{1,0:T(8,128)}', space=vmem, size = 0x1000, scoped, tag = 'scratch operand']
  %s0 = inlined_call_operand.hbm [shape: f32[2,8,32], index: 0, kind: input, shape index: {}, may-alias: {0,1}]
  %s1 = inlined_call_operand.hbm [shape: f32[2,8,32], index: 1, kind: input, shape index: {}, may-alias: {0,1}]
  %s2 = inlined_call_operand.vmem [shape: bf16[32,32], index: 2, kind: input, shape index: {}]
  %s3 = inlined_call_operand.vmem [shape: f32[1,32], index: 3, kind: input, shape index: {}]
  %s4 = inlined_call_operand.vmem [shape: bf16[32,64], index: 4, kind: input, shape index: {}]
  %s5 = inlined_call_operand.vmem [shape: f32[1,64], index: 5, kind: input, shape index: {}]
  %s6 = inlined_call_operand.vmem [shape: bf16[32,32], index: 6, kind: input, shape index: {}]
  %s7 = inlined_call_operand.vmem [shape: f32[1,32], index: 7, kind: input, shape index: {}]
  %s8 = inlined_call_operand.vmem [shape: f32[1,32], index: 8, kind: input, shape index: {}]
  %s9 = inlined_call_operand.vmem [shape: f32[1,32], index: 9, kind: input, shape index: {}]
  %s10 = inlined_call_operand.vmem [shape: f32[2,8,32], index: 10, kind: output, shape index: {}]
  %s11 = sld [smem:[#allocation0]]
  $region81: #{decoder_layer.3} parent=0
    _
  %s13 = ssub.s32 1, %s11
  %s14 = scalar_select 0, %s13, %s11
  $region1: #{decoder_layer.3} parent=0
    #allocation3 [shape = 'u8[8192]{0}', space=vmem, size = 0x2000, scoped, tag = 'input window, operand 0']
    #allocation4 [shape = 's32[2]{0}', space=sflag, size = 0x8, scoped, tag = 'scoped memory for decoder_layer.3']
    #allocation5 [shape = 'u8[8192]{0}', space=vmem, size = 0x2000, scoped, tag = 'input window, operand 1']
    #allocation6 [shape = 's32[2]{0}', space=sflag, size = 0x8, scoped, tag = 'scoped memory for decoder_layer.3']
    %15 = vsyncpa [#allocation4], 0
    %s16 = scalar_lea.sflag [#allocation4], 1
    %17 = vsyncpa %s16, 0
    %18 = vsyncpa [#allocation6], 0
    %s19 = scalar_lea.sflag [#allocation6], 1
    %20 = vsyncpa %s19, 0
    loop: start=0, step=1, limit=4
    $region2: #{decoder_layer.3} parent=1 // loop_pre_header
      _
    $region3: #{decoder_layer.3} parent=1 // loop_header
      %s22 = sphi 0, %s26
      %p23 = scmp.ge.s32.totalorder %s22, 4
      %s29 = sphi 0, %s41
      %s30 = sphi 0, %s37
      %s31 = sphi 0, %s29
      %s32 = sphi 0, %s30
      %s33 = sphi 0, %s31
      %s34 = sphi 0, %s32
      %s46 = sphi 0, %s48
      %s49 = sphi 0, %s46
      %s50 = sphi 0, %s49
      %s66 = sphi 0, %s50
      %s72 = sphi 0, %s74
      %s75 = sphi 0, %s72
      %s76 = sphi 0, %s75
      %s92 = sphi 0, %s76
      %s96 = sphi 0, %s96
      %s98 = sphi 0, %s96
      %s99 = sphi 0, %s98
      %s113 = sphi 0, %s99
      %s117 = sphi 0, %s117
      %s119 = sphi 0, %s117
      %s120 = sphi 0, %s119
      %s134 = sphi 0, %s120
      %s138 = sphi 0, %s138
      %s140 = sphi 0, %s138
      %s141 = sphi 0, %s140
      %s155 = sphi 0, %s141
      %s159 = sphi 0, %s159
      %s161 = sphi 0, %s159
      %s162 = sphi 0, %s161
      %s176 = sphi 0, %s162
      %s180 = sphi 0, %s180
      %s182 = sphi 0, %s180
      %s183 = sphi 0, %s182
      %s197 = sphi 0, %s183
      %s201 = sphi 0, %s201
      %s203 = sphi 0, %s201
      %s204 = sphi 0, %s203
      %s218 = sphi 0, %s204
      %s222 = sphi 0, %s222
      %s224 = sphi 0, %s222
      %s225 = sphi 0, %s224
      %s239 = sphi 0, %s225
      %s243 = sphi 0, %s243
      %s245 = sphi 0, %s243
      %s246 = sphi 0, %s245
      %s260 = sphi 0, %s246
      %s268 = sphi 0, %s270
      %s271 = sphi 0, %s268
      %s272 = sphi 0, %s271
      %s288 = sphi 0, %s272
    $region4: #{decoder_layer.3} parent=1 // loop_header_branch
      %25 = sbr.rel (%p23) target = $region8
    $region5: #{decoder_layer.3} parent=1 // loop_body
      %s27 = ssub.s32 %s22, 1
      %s28 = ssub.s32 %s22, 2
      %s35 = sadd.s32 1, %s30
      %p36 = scmp.ge.s32.totalorder %s35, 1
      %s37 = scalar_select %p36, 0, %s35
      %s38 = sadd.s32 1, %s29
      %s39 = scalar_select %p36, %s38, %s29
      %p40 = scmp.ge.s32.totalorder %s39, 2
      %s41 = scalar_select %p40, 0, %s39
      %s42 = ssub.s32 %s29, %s41
      %s43 = ssub.s32 %s30, %s37
      %s44 = sor.u32 %s42, %s43
      %p45 = scmp.eq.s32.totalorder %s44, 0
      %s47 = sadd.s32 %s46, 1
      %s48 = scalar_select %p45, %s46, %s47
      %p51 = pneg %p45
      %p52 = scmp.eq.s32.totalorder %s22, 1
      %p53 = por %p51, %p52
      %p54 = scmp.ne.s32.totalorder %s46, %s49
      %p55 = scmp.eq.s32.totalorder %s22, 0
      %p56 = por %p54, %p55
      %p57 = scmp.ne.s32.totalorder %s46, %s49
      %p58 = scmp.eq.s32.totalorder %s27, 1
      %p59 = por %p57, %p58
      %p60 = scmp.ne.s32.totalorder %s49, %s50
      %p61 = scmp.eq.s32.totalorder %s27, 0
      %p62 = por %p60, %p61
      %p63 = scmp.ne.s32.totalorder %s49, %s50
      %p64 = scmp.eq.s32.totalorder %s28, 1
      %p65 = por %p63, %p64
      %p67 = scmp.ne.s32.totalorder %s50, %s66
      %p68 = scmp.eq.s32.totalorder %s28, 0
      %p69 = por %p67, %p68
      %s70 = ssub.s32 %s29, %s41
      %p71 = scmp.eq.s32.totalorder %s70, 0
      %s73 = sadd.s32 %s72, 1
      %s74 = scalar_select %p71, %s72, %s73
      %p77 = pneg %p71
      %p78 = scmp.eq.s32.totalorder %s22, 1
      %p79 = por %p77, %p78
      %p80 = scmp.ne.s32.totalorder %s72, %s75
      %p81 = scmp.eq.s32.totalorder %s22, 0
      %p82 = por %p80, %p81
      %p83 = scmp.ne.s32.totalorder %s72, %s75
      %p84 = scmp.eq.s32.totalorder %s27, 1
      %p85 = por %p83, %p84
      %p86 = scmp.ne.s32.totalorder %s75, %s76
      %p87 = scmp.eq.s32.totalorder %s27, 0
      %p88 = por %p86, %p87
      %p89 = scmp.ne.s32.totalorder %s75, %s76
      %p90 = scmp.eq.s32.totalorder %s28, 1
      %p91 = por %p89, %p90
      %p93 = scmp.ne.s32.totalorder %s76, %s92
      %p94 = scmp.eq.s32.totalorder %s28, 0
      %p95 = por %p93, %p94
      %s97 = sadd.s32 %s96, 1
      %p100 = scmp.eq.s32.totalorder %s22, 1
      %p101 = scmp.ne.s32.totalorder %s96, %s98
      %p102 = scmp.eq.s32.totalorder %s22, 0
      %p103 = por %p101, %p102
      %p104 = scmp.ne.s32.totalorder %s96, %s98
      %p105 = scmp.eq.s32.totalorder %s27, 1
      %p106 = por %p104, %p105
      %p107 = scmp.ne.s32.totalorder %s98, %s99
      %p108 = scmp.eq.s32.totalorder %s27, 0
      %p109 = por %p107, %p108
      %p110 = scmp.ne.s32.totalorder %s98, %s99
      %p111 = scmp.eq.s32.totalorder %s28, 1
      %p112 = por %p110, %p111
      %p114 = scmp.ne.s32.totalorder %s99, %s113
      %p115 = scmp.eq.s32.totalorder %s28, 0
      %p116 = por %p114, %p115
      %s118 = sadd.s32 %s117, 1
      %p121 = scmp.eq.s32.totalorder %s22, 1
      %p122 = scmp.ne.s32.totalorder %s117, %s119
      %p123 = scmp.eq.s32.totalorder %s22, 0
      %p124 = por %p122, %p123
      %p125 = scmp.ne.s32.totalorder %s117, %s119
      %p126 = scmp.eq.s32.totalorder %s27, 1
      %p127 = por %p125, %p126
      %p128 = scmp.ne.s32.totalorder %s119, %s120
      %p129 = scmp.eq.s32.totalorder %s27, 0
      %p130 = por %p128, %p129
      %p131 = scmp.ne.s32.totalorder %s119, %s120
      %p132 = scmp.eq.s32.totalorder %s28, 1
      %p133 = por %p131, %p132
      %p135 = scmp.ne.s32.totalorder %s120, %s134
      %p136 = scmp.eq.s32.totalorder %s28, 0
      %p137 = por %p135, %p136
      %s139 = sadd.s32 %s138, 1
      %p142 = scmp.eq.s32.totalorder %s22, 1
      %p143 = scmp.ne.s32.totalorder %s138, %s140
      %p144 = scmp.eq.s32.totalorder %s22, 0
      %p145 = por %p143, %p144
      %p146 = scmp.ne.s32.totalorder %s138, %s140
      %p147 = scmp.eq.s32.totalorder %s27, 1
      %p148 = por %p146, %p147
      %p149 = scmp.ne.s32.totalorder %s140, %s141
      %p150 = scmp.eq.s32.totalorder %s27, 0
      %p151 = por %p149, %p150
      %p152 = scmp.ne.s32.totalorder %s140, %s141
      %p153 = scmp.eq.s32.totalorder %s28, 1
      %p154 = por %p152, %p153
      %p156 = scmp.ne.s32.totalorder %s141, %s155
      %p157 = scmp.eq.s32.totalorder %s28, 0
      %p158 = por %p156, %p157
      %s160 = sadd.s32 %s159, 1
      %p163 = scmp.eq.s32.totalorder %s22, 1
      %p164 = scmp.ne.s32.totalorder %s159, %s161
      %p165 = scmp.eq.s32.totalorder %s22, 0
      %p166 = por %p164, %p165
      %p167 = scmp.ne.s32.totalorder %s159, %s161
      %p168 = scmp.eq.s32.totalorder %s27, 1
      %p169 = por %p167, %p168
      %p170 = scmp.ne.s32.totalorder %s161, %s162
      %p171 = scmp.eq.s32.totalorder %s27, 0
      %p172 = por %p170, %p171
      %p173 = scmp.ne.s32.totalorder %s161, %s162
      %p174 = scmp.eq.s32.totalorder %s28, 1
      %p175 = por %p173, %p174
      %p177 = scmp.ne.s32.totalorder %s162, %s176
      %p178 = scmp.eq.s32.totalorder %s28, 0
      %p179 = por %p177, %p178
      %s181 = sadd.s32 %s180, 1
      %p184 = scmp.eq.s32.totalorder %s22, 1
      %p185 = scmp.ne.s32.totalorder %s180, %s182
      %p186 = scmp.eq.s32.totalorder %s22, 0
      %p187 = por %p185, %p186
      %p188 = scmp.ne.s32.totalorder %s180, %s182
      %p189 = scmp.eq.s32.totalorder %s27, 1
      %p190 = por %p188, %p189
      %p191 = scmp.ne.s32.totalorder %s182, %s183
      %p192 = scmp.eq.s32.totalorder %s27, 0
      %p193 = por %p191, %p192
      %p194 = scmp.ne.s32.totalorder %s182, %s183
      %p195 = scmp.eq.s32.totalorder %s28, 1
      %p196 = por %p194, %p195
      %p198 = scmp.ne.s32.totalorder %s183, %s197
      %p199 = scmp.eq.s32.totalorder %s28, 0
      %p200 = por %p198, %p199
      %s202 = sadd.s32 %s201, 1
      %p205 = scmp.eq.s32.totalorder %s22, 1
      %p206 = scmp.ne.s32.totalorder %s201, %s203
      %p207 = scmp.eq.s32.totalorder %s22, 0
      %p208 = por %p206, %p207
      %p209 = scmp.ne.s32.totalorder %s201, %s203
      %p210 = scmp.eq.s32.totalorder %s27, 1
      %p211 = por %p209, %p210
      %p212 = scmp.ne.s32.totalorder %s203, %s204
      %p213 = scmp.eq.s32.totalorder %s27, 0
      %p214 = por %p212, %p213
      %p215 = scmp.ne.s32.totalorder %s203, %s204
      %p216 = scmp.eq.s32.totalorder %s28, 1
      %p217 = por %p215, %p216
      %p219 = scmp.ne.s32.totalorder %s204, %s218
      %p220 = scmp.eq.s32.totalorder %s28, 0
      %p221 = por %p219, %p220
      %s223 = sadd.s32 %s222, 1
      %p226 = scmp.eq.s32.totalorder %s22, 1
      %p227 = scmp.ne.s32.totalorder %s222, %s224
      %p228 = scmp.eq.s32.totalorder %s22, 0
      %p229 = por %p227, %p228
      %p230 = scmp.ne.s32.totalorder %s222, %s224
      %p231 = scmp.eq.s32.totalorder %s27, 1
      %p232 = por %p230, %p231
      %p233 = scmp.ne.s32.totalorder %s224, %s225
      %p234 = scmp.eq.s32.totalorder %s27, 0
      %p235 = por %p233, %p234
      %p236 = scmp.ne.s32.totalorder %s224, %s225
      %p237 = scmp.eq.s32.totalorder %s28, 1
      %p238 = por %p236, %p237
      %p240 = scmp.ne.s32.totalorder %s225, %s239
      %p241 = scmp.eq.s32.totalorder %s28, 0
      %p242 = por %p240, %p241
      %s244 = sadd.s32 %s243, 1
      %p247 = scmp.eq.s32.totalorder %s22, 1
      %p248 = scmp.ne.s32.totalorder %s243, %s245
      %p249 = scmp.eq.s32.totalorder %s22, 0
      %p250 = por %p248, %p249
      %p251 = scmp.ne.s32.totalorder %s243, %s245
      %p252 = scmp.eq.s32.totalorder %s27, 1
      %p253 = por %p251, %p252
      %p254 = scmp.ne.s32.totalorder %s245, %s246
      %p255 = scmp.eq.s32.totalorder %s27, 0
      %p256 = por %p254, %p255
      %p257 = scmp.ne.s32.totalorder %s245, %s246
      %p258 = scmp.eq.s32.totalorder %s28, 1
      %p259 = por %p257, %p258
      %p261 = scmp.ne.s32.totalorder %s246, %s260
      %p262 = scmp.eq.s32.totalorder %s28, 0
      %p263 = por %p261, %p262
      %s264 = ssub.s32 %s29, %s41
      %s265 = ssub.s32 %s30, %s37
      %s266 = sor.u32 %s264, %s265
      %p267 = scmp.eq.s32.totalorder %s266, 0
      %s269 = sadd.s32 %s268, 1
      %s270 = scalar_select %p267, %s268, %s269
      %p273 = pneg %p267
      %p274 = scmp.eq.s32.totalorder %s22, 1
      %p275 = por %p273, %p274
      %p276 = scmp.ne.s32.totalorder %s268, %s271
      %p277 = scmp.eq.s32.totalorder %s22, 0
      %p278 = por %p276, %p277
      %p279 = scmp.ne.s32.totalorder %s268, %s271
      %p280 = scmp.eq.s32.totalorder %s27, 1
      %p281 = por %p279, %p280
      %p282 = scmp.ne.s32.totalorder %s271, %s272
      %p283 = scmp.eq.s32.totalorder %s27, 0
      %p284 = por %p282, %p283
      %p285 = scmp.ne.s32.totalorder %s271, %s272
      %p286 = scmp.eq.s32.totalorder %s28, 1
      %p287 = por %p285, %p286
      %p289 = scmp.ne.s32.totalorder %s272, %s288
      %p290 = scmp.eq.s32.totalorder %s28, 0
      %p291 = por %p289, %p290
      %p292 = scmp.le.s32.totalorder 1, %s22
      %p293 = scmp.lt.s32.totalorder %s22, 3
      %p294 = pnand %p292, %p293
      %p295 = pneg %p294
      // Predicated region
      $region9: #{decoder_layer.3} parent=5 // pred_check
        _
      $region10: #{decoder_layer.3} parent=5 // pred_check_branch
        %297 = sbr.rel (%p294) target = $region12
      $region11: #{decoder_layer.3} parent=5 // pred_region
        %s298 = ssub.s32 %s22, 1
        // Predicated region
        $region13: #{decoder_layer.3} parent=11 // pred_check
          %p299 = pneg %p109
        $region14: #{decoder_layer.3} parent=11 // pred_check_branch
          %301 = sbr.rel (%p299) target = $region16
        $region15: #{decoder_layer.3} parent=11 // pred_region
          _
        $region16: #{decoder_layer.3} parent=11 // pred_fallthru
          _
        // Predicated region
        $region17: #{decoder_layer.3} parent=11 // pred_check
          %p302 = pneg %p130
        $region18: #{decoder_layer.3} parent=11 // pred_check_branch
          %304 = sbr.rel (%p302) target = $region20
        $region19: #{decoder_layer.3} parent=11 // pred_region
          _
        $region20: #{decoder_layer.3} parent=11 // pred_fallthru
          _
        // Predicated region
        $region21: #{decoder_layer.3} parent=11 // pred_check
          %p305 = pneg %p151
        $region22: #{decoder_layer.3} parent=11 // pred_check_branch
          %307 = sbr.rel (%p305) target = $region24
        $region23: #{decoder_layer.3} parent=11 // pred_region
          _
        $region24: #{decoder_layer.3} parent=11 // pred_fallthru
          _
        // Predicated region
        $region25: #{decoder_layer.3} parent=11 // pred_check
          %p308 = pneg %p172
        $region26: #{decoder_layer.3} parent=11 // pred_check_branch
          %310 = sbr.rel (%p308) target = $region28
        $region27: #{decoder_layer.3} parent=11 // pred_region
          _
        $region28: #{decoder_layer.3} parent=11 // pred_fallthru
          _
        // Predicated region
        $region29: #{decoder_layer.3} parent=11 // pred_check
          %p311 = pneg %p193
        $region30: #{decoder_layer.3} parent=11 // pred_check_branch
          %313 = sbr.rel (%p311) target = $region32
        $region31: #{decoder_layer.3} parent=11 // pred_region
          _
        $region32: #{decoder_layer.3} parent=11 // pred_fallthru
          _
        // Predicated region
        $region33: #{decoder_layer.3} parent=11 // pred_check
          %p314 = pneg %p214
        $region34: #{decoder_layer.3} parent=11 // pred_check_branch
          %316 = sbr.rel (%p314) target = $region36
        $region35: #{decoder_layer.3} parent=11 // pred_region
          _
        $region36: #{decoder_layer.3} parent=11 // pred_fallthru
          _
        // Predicated region
        $region37: #{decoder_layer.3} parent=11 // pred_check
          %p317 = pneg %p235
        $region38: #{decoder_layer.3} parent=11 // pred_check_branch
          %319 = sbr.rel (%p317) target = $region40
        $region39: #{decoder_layer.3} parent=11 // pred_region
          _
        $region40: #{decoder_layer.3} parent=11 // pred_fallthru
          _
        // Predicated region
        $region41: #{decoder_layer.3} parent=11 // pred_check
          %p320 = pneg %p256
        $region42: #{decoder_layer.3} parent=11 // pred_check_branch
          %322 = sbr.rel (%p320) target = $region44
        $region43: #{decoder_layer.3} parent=11 // pred_region
          _
        $region44: #{decoder_layer.3} parent=11 // pred_fallthru
          _
      $region12: #{decoder_layer.3} parent=5 // pred_fallthru
        _
      %p323 = scmp.lt.s32.totalorder %s22, 2
      // Predicated region
      $region45: #{decoder_layer.3} parent=5 // pred_check
        %p324 = pneg %p323
      $region46: #{decoder_layer.3} parent=5 // pred_check_branch
        %326 = sbr.rel (%p324) target = $region48
      $region47: #{decoder_layer.3} parent=5 // pred_region
        // Predicated region
        $region49: #{decoder_layer.3} parent=47 // pred_check
          %p327 = pneg %p56
        $region50: #{decoder_layer.3} parent=47 // pred_check_branch
          %329 = sbr.rel (%p327) target = $region52
        $region51: #{decoder_layer.3} parent=47 // pred_region
          %s330 = sand.u32 %s46, 1
          %s331 = scalar_lea.sflag [#allocation4], %s330
          %s332 = sand.u32 %s46, 1
          %s333 = smul.addr %s332, 8
          %s334 = scalar_lea.vmem [#allocation3], %s333
          %s336 = ssub.s32 128, 128
          %337 = vsyncadd %s331, %s336
          %s338 = sadd.s32 %s30, %s29
          %s339 = smul.addr %s338, 128
          %s340 = scalar_lea.hbm %s0, %s339
          %s342 = sshll.u32 %s334, 4
          %s343 = int_to_ptr.vmem [resolvable:$true] %s342
          %345 = dma.hbm_to_vmem [thread:$0]  %s340, 128, %s343, %s331
        $region52: #{decoder_layer.3} parent=47 // pred_fallthru
          _
        // Predicated region
        $region53: #{decoder_layer.3} parent=47 // pred_check
          %p346 = pneg %p82
        $region54: #{decoder_layer.3} parent=47 // pred_check_branch
          %348 = sbr.rel (%p346) target = $region56
        $region55: #{decoder_layer.3} parent=47 // pred_region
          %s349 = sand.u32 %s72, 1
          %s350 = scalar_lea.sflag [#allocation6], %s349
          %s351 = sand.u32 %s72, 1
          %s352 = smul.addr %s351, 8
          %s353 = scalar_lea.vmem [#allocation5], %s352
          %s355 = ssub.s32 128, 128
          %356 = vsyncadd %s350, %s355
          %s357 = smul.addr %s29, 128
          %s358 = scalar_lea.hbm %s1, %s357
          %s360 = sshll.u32 %s353, 4
          %s361 = int_to_ptr.vmem [resolvable:$true] %s360
          %363 = dma.hbm_to_vmem [thread:$0]  %s358, 128, %s361, %s350
        $region56: #{decoder_layer.3} parent=47 // pred_fallthru
          _
      $region48: #{decoder_layer.3} parent=5 // pred_fallthru
        _
      %p364 = scmp.le.s32.totalorder 1, %s22
      %p365 = scmp.lt.s32.totalorder %s22, 3
      %p366 = pnand %p364, %p365
      %p367 = pneg %p366
      // Predicated region
      $region57: #{decoder_layer.3} parent=5 // pred_check
        _
      $region58: #{decoder_layer.3} parent=5 // pred_check_branch
        %369 = sbr.rel (%p366) target = $region60
      $region59: #{decoder_layer.3} parent=5 // pred_region
        %s370 = ssub.s32 %s22, 1
        %s371 = sand.u32 %s49, 1
        %s372 = scalar_lea.sflag [#allocation4], %s371
        %s373 = sand.u32 %s49, 1
        %s374 = smul.addr %s373, 8
        %s375 = scalar_lea.vmem [#allocation3], %s374
        // Predicated region
        $region61: #{decoder_layer.3} parent=59 // pred_check
          %p376 = pneg %p62
        $region62: #{decoder_layer.3} parent=59 // pred_check_branch
          %378 = sbr.rel (%p376) target = $region64
        $region63: #{decoder_layer.3} parent=59 // pred_region
          %379 = dma.done %s372, 128
        $region64: #{decoder_layer.3} parent=59 // pred_fallthru
          _
        %s380 = sand.u32 %s75, 1
        %s381 = scalar_lea.sflag [#allocation6], %s380
        %s382 = sand.u32 %s75, 1
        %s383 = smul.addr %s382, 8
        %s384 = scalar_lea.vmem [#allocation5], %s383
        // Predicated region
        $region65: #{decoder_layer.3} parent=59 // pred_check
          %p385 = pneg %p88
        $region66: #{decoder_layer.3} parent=59 // pred_check_branch
          %387 = sbr.rel (%p385) target = $region68
        $region67: #{decoder_layer.3} parent=59 // pred_region
          %388 = dma.done %s381, 128
        $region68: #{decoder_layer.3} parent=59 // pred_fallthru
          _
        %s389 = sand.u32 %s49, 1
        %s390 = scalar_lea.sflag [#allocation4], %s389
        %s391 = sand.u32 %s49, 1
        %s392 = smul.addr %s391, 8
        %s393 = scalar_lea.vmem [#allocation3], %s392
        %p394 = pneg %p62
        %p395 = pneg %p59
        %s396 = sand.u32 %s75, 1
        %s397 = scalar_lea.sflag [#allocation6], %s396
        %s398 = sand.u32 %s75, 1
        %s399 = smul.addr %s398, 8
        %s400 = scalar_lea.vmem [#allocation5], %s399
        %p401 = pneg %p88
        %p402 = pneg %p85
        %p403 = pneg %p109
        %p404 = pneg %p106
        %p405 = pneg %p130
        %p406 = pneg %p127
        %p407 = pneg %p151
        %p408 = pneg %p148
        %p409 = pneg %p172
        %p410 = pneg %p169
        %p411 = pneg %p193
        %p412 = pneg %p190
        %p413 = pneg %p214
        %p414 = pneg %p211
        %p415 = pneg %p235
        %p416 = pneg %p232
        %p417 = pneg %p256
        %p418 = pneg %p253
        %p419 = pneg %p284
        %p420 = pneg %p281
        %p421 = scmp.lt.s32.totalorder %s31, 1
        %s422 = scalar_select %p421, %s31, 1
        %p423 = scmp.lt.s32.totalorder %s32, 0
        %s424 = scalar_select %p423, %s32, 0
        %s425 = sadd.s32 %s424, %s422
        %s426 = smul.addr %s425, 8
        %s427 = scalar_lea.vmem %s10, %s426
        %p428 = scmp.lt.s32.totalorder %s31, 1
        %s429 = scalar_select %p428, %s31, 1
        %p430 = scmp.lt.s32.totalorder %s32, 0
        %s431 = scalar_select %p430, %s32, 0
        %s432 = sadd.s32 %s431, %s429
        %s433 = smul.addr %s432, 8
        %s434 = scalar_lea.vmem %s10, %s433
        %v436 = vld [vmem:[%s375] sm:$0xff]
        %v437 = vld [vmem:[%s384] sm:$0xff]
        %v438 = vpack.c.bf16 %v436, %v436
        %v439 = vld [vmem:[%s2] sm:$0xf]
        %v440 = vld [vmem:[%s2 + $0x4] sm:$0xf]
        %v441 = vld [vmem:[%s2 + $0x8] sm:$0xf]
        %v442 = vld [vmem:[%s2 + $0xc] sm:$0xf]
        %v443 = vld [vmem:[%s3] sm:$0x1]
        %v445 = vlaneseq
        %v446 = vshrl.u32 %v445, 7
        %v447 = vsub.s32 0, %v446
        %v448 = vrot.slane %v443, %v447
        %v454 = vunpack.c.l.b16 %v439
        %v455 = vunpack.c.l.b16 %v440
        %v456 = vunpack.c.l.b16 %v441
        %v457 = vunpack.c.l.b16 %v442
        %v458 = vpack.c.b16 %v455, %v454
        %v459 = vpack.c.b16 %v457, %v456
        %vm462 = vcmask 261120
        %v464 = vsel %vm462, %v438, 0
        %466 = vmatprep.subr.bf16.mxu0 0
        %467 = vmatpush1.bf16.msra.mxu0 %v458
        %468 = vmatprep.subr.bf16.mxu0 0
        %469 = vmatpush1.bf16.msra.mxu0 %v459
        %470 = vmatprep.subr.bf16.mxu0 0
        %471 = vmatpush1.bf16.msra.mxu0 0
        %472 = vmatprep.subr.bf16.mxu0 0
        %473 = vmatpush1.bf16.msra.mxu0 0
        %474 = vmatprep.subr.bf16.mxu0 0
        %475 = vmatpush1.bf16.msra.mxu0 0
        %476 = vmatprep.subr.bf16.mxu0 0
        %477 = vmatpush1.bf16.msra.mxu0 0
        %478 = vmatprep.subr.bf16.mxu0 0
        %479 = vmatpush1.bf16.msra.mxu0 0
        %480 = vmatprep.subr.bf16.mxu0 0
        %481 = vmatpush1.bf16.msra.mxu0 0
        %482 = vmatprep.subr.bf16.mxu0 0
        %483 = vmatpush1.bf16.msra.mxu0 0
        %484 = vmatprep.subr.bf16.mxu0 0
        %485 = vmatpush1.bf16.msra.mxu0 0
        %486 = vmatprep.subr.bf16.mxu0 0
        %487 = vmatpush1.bf16.msra.mxu0 0
        %488 = vmatprep.subr.bf16.mxu0 0
        %489 = vmatpush1.bf16.msra.mxu0 0
        %490 = vmatprep.subr.bf16.mxu0 0
        %491 = vmatpush1.bf16.msra.mxu0 0
        %492 = vmatprep.subr.bf16.mxu0 0
        %493 = vmatpush1.bf16.msra.mxu0 0
        %494 = vmatprep.subr.bf16.mxu0 0
        %495 = vmatpush1.bf16.msra.mxu0 0
        %496 = vmatprep.subr.bf16.mxu0 0
        %497 = vmatpush1.bf16.msra.mxu0 0
        %498 = vmatprep.mubr.bf16.mxu0 0
        %499 = vmatmul.mubr.bf16.gmra.mrb[0].mxu0 %v464
        %v500 = vpop.f32.mrb[0].mxu0
        %v501 = vadd.f32 %v448, %v500
        %v502 = vpop.f32.mrb[0].mxu0
        %v503 = vpop.f32.mrb[0].mxu0
        %v504 = vpop.f32.mrb[0].mxu0
        %505 = vdwg.mxu0
        %v506 = vmul.f32 %v501, 0.35355338
        %v507 = vpack.c.bf16 %v506, %v506
        %v508 = vpack.c.bf16 %v437, %v437
        %v509 = vld [vmem:[%s4] sm:$0xf]
        %v510 = vld [vmem:[%s4 + $0x4] sm:$0xf]
        %v511 = vld [vmem:[%s4 + $0x8] sm:$0xf]
        %v512 = vld [vmem:[%s4 + $0xc] sm:$0xf]
        %v513 = vld [vmem:[%s5] sm:$0x1]
        %v515 = vlaneseq
        %v516 = vshrl.u32 %v515, 7
        %v517 = vsub.s32 0, %v516
        %v518 = vrot.slane %v513, %v517
        %v524 = vunpack.c.l.b16 %v509
        %v525 = vunpack.c.l.b16 %v510
        %v526 = vunpack.c.l.b16 %v511
        %v527 = vunpack.c.l.b16 %v512
        %v528 = vpack.c.b16 %v525, %v524
        %v529 = vpack.c.b16 %v527, %v526
        %v533 = vsel %vm462, %v508, 0
        %535 = vmatprep.subr.bf16.mxu0 0
        %536 = vmatpush1.bf16.msra.mxu0 %v528
        %537 = vmatprep.subr.bf16.mxu0 0
        %538 = vmatpush1.bf16.msra.mxu0 %v529
        %539 = vmatprep.subr.bf16.mxu0 0
        %540 = vmatpush1.bf16.msra.mxu0 0
        %541 = vmatprep.subr.bf16.mxu0 0
        %542 = vmatpush1.bf16.msra.mxu0 0
        %543 = vmatprep.subr.bf16.mxu0 0
        %544 = vmatpush1.bf16.msra.mxu0 0
        %545 = vmatprep.subr.bf16.mxu0 0
        %546 = vmatpush1.bf16.msra.mxu0 0
        %547 = vmatprep.subr.bf16.mxu0 0
        %548 = vmatpush1.bf16.msra.mxu0 0
        %549 = vmatprep.subr.bf16.mxu0 0
        %550 = vmatpush1.bf16.msra.mxu0 0
        %551 = vmatprep.subr.bf16.mxu0 0
        %552 = vmatpush1.bf16.msra.mxu0 0
        %553 = vmatprep.subr.bf16.mxu0 0
        %554 = vmatpush1.bf16.msra.mxu0 0
        %555 = vmatprep.subr.bf16.mxu0 0
        %556 = vmatpush1.bf16.msra.mxu0 0
        %557 = vmatprep.subr.bf16.mxu0 0
        %558 = vmatpush1.bf16.msra.mxu0 0
        %559 = vmatprep.subr.bf16.mxu0 0
        %560 = vmatpush1.bf16.msra.mxu0 0
        %561 = vmatprep.subr.bf16.mxu0 0
        %562 = vmatpush1.bf16.msra.mxu0 0
        %563 = vmatprep.subr.bf16.mxu0 0
        %564 = vmatpush1.bf16.msra.mxu0 0
        %565 = vmatprep.subr.bf16.mxu0 0
        %566 = vmatpush1.bf16.msra.mxu0 0
        %567 = vmatprep.mubr.bf16.mxu0 0
        %568 = vmatmul.mubr.bf16.gmra.mrb[0].mxu0 %v533
        %v569 = vpop.f32.mrb[0].mxu0
        %v570 = vadd.f32 %v518, %v569
        %v571 = vpop.f32.mrb[0].mxu0
        %v572 = vpop.f32.mrb[0].mxu0
        %v573 = vpop.f32.mrb[0].mxu0
        %574 = vdwg.mxu0
        %v575 = vpack.c.bf16 %v570, %v570
        %vm576 = vcmask 64512
        %v578 = vsel %vm576, %v507, 0
        %v581 = vsel %vm576, %v575, 0
        %583 = vmatprep.subr.bf16.mxu0 0
        %584 = vmatpush1.bf16.xpose.msra.mxu0 %v581
        %585 = vmatprep.subr.bf16.mxu0 0
        %586 = vmatpush1.bf16.xpose.msra.mxu0 0
        %587 = vmatprep.subr.bf16.mxu0 0
        %588 = vmatpush1.bf16.xpose.msra.mxu0 0
        %589 = vmatprep.subr.bf16.mxu0 0
        %590 = vmatpush1.bf16.xpose.msra.mxu0 0
        %591 = vmatprep.subr.bf16.mxu0 0
        %592 = vmatpush1.bf16.xpose.msra.mxu0 0
        %593 = vmatprep.subr.bf16.mxu0 0
        %594 = vmatpush1.bf16.xpose.msra.mxu0 0
        %595 = vmatprep.subr.bf16.mxu0 0
        %596 = vmatpush1.bf16.xpose.msra.mxu0 0
        %597 = vmatprep.subr.bf16.mxu0 0
        %598 = vmatpush1.bf16.xpose.msra.mxu0 0
        %599 = vmatprep.subr.bf16.mxu0 0
        %600 = vmatpush1.bf16.xpose.msra.mxu0 0
        %601 = vmatprep.subr.bf16.mxu0 0
        %602 = vmatpush1.bf16.xpose.msra.mxu0 0
        %603 = vmatprep.subr.bf16.mxu0 0
        %604 = vmatpush1.bf16.xpose.msra.mxu0 0
        %605 = vmatprep.subr.bf16.mxu0 0
        %606 = vmatpush1.bf16.xpose.msra.mxu0 0
        %607 = vmatprep.subr.bf16.mxu0 0
        %608 = vmatpush1.bf16.xpose.msra.mxu0 0
        %609 = vmatprep.subr.bf16.mxu0 0
        %610 = vmatpush1.bf16.xpose.msra.mxu0 0
        %611 = vmatprep.subr.bf16.mxu0 0
        %612 = vmatpush1.bf16.xpose.msra.mxu0 0
        %613 = vmatprep.subr.bf16.mxu0 0
        %614 = vmatpush1.bf16.xpose.msra.mxu0 0
        %615 = vmatprep.mubr.bf16.mxu0 0
        %616 = vmatmul.mubr.bf16.gmra.mrb[0].mxu0 %v578
        %v617 = vpop.f32.mrb[0].mxu0
        %v618 = vadd.f32 0.0, %v617
        %v619 = vpop.f32.mrb[0].mxu0
        %v620 = vpop.f32.mrb[0].mxu0
        %v621 = vpop.f32.mrb[0].mxu0
        %622 = vdwg.mxu0
        %v623 = vsel %vm576, %v618, -inf
        %624 = vmax.xlane.f32.xlu0 %v623
        %v625 = vpop.xlane.xlu0 %624
        %v626 = vsub.f32 %v618, %v625
        %v627 = vmul.f32 %v626, 1.442695
        %v628 = vpow.pop %v627
        %v629 = vsel %vm576, %v628, 0.0
        %630 = vadd.xlane.f32.xlu0 %v629
        %v631 = vpop.xlane.xlu0 %630
        %v632 = vrcp.pop %v631
        %v633 = vmul.f32 %v628, %v632
        %v634 = vpack.c.bf16 %v633, %v633
        %636 = vrot.lane.b32.xlu0 %v575, 96
        %v637 = vpop.permute.xlu0 %636
        %v639 = vsel %vm576, %v634, 0
        %vm641 = vcmask 1043456
        %v643 = vsel %vm641, %v637, 0
        %645 = vmatprep.subr.bf16.mxu0 0
        %646 = vmatpush1.bf16.msra.mxu0 %v643
        %647 = vmatprep.subr.bf16.mxu0 0
        %648 = vmatpush1.bf16.msra.mxu0 0
        %649 = vmatprep.subr.bf16.mxu0 0
        %650 = vmatpush1.bf16.msra.mxu0 0
        %651 = vmatprep.subr.bf16.mxu0 0
        %652 = vmatpush1.bf16.msra.mxu0 0
        %653 = vmatprep.subr.bf16.mxu0 0
        %654 = vmatpush1.bf16.msra.mxu0 0
        %655 = vmatprep.subr.bf16.mxu0 0
        %656 = vmatpush1.bf16.msra.mxu0 0
        %657 = vmatprep.subr.bf16.mxu0 0
        %658 = vmatpush1.bf16.msra.mxu0 0
        %659 = vmatprep.subr.bf16.mxu0 0
        %660 = vmatpush1.bf16.msra.mxu0 0
        %661 = vmatprep.subr.bf16.mxu0 0
        %662 = vmatpush1.bf16.msra.mxu0 0
        %663 = vmatprep.subr.bf16.mxu0 0
        %664 = vmatpush1.bf16.msra.mxu0 0
        %665 = vmatprep.subr.bf16.mxu0 0
        %666 = vmatpush1.bf16.msra.mxu0 0
        %667 = vmatprep.subr.bf16.mxu0 0
        %668 = vmatpush1.bf16.msra.mxu0 0
        %669 = vmatprep.subr.bf16.mxu0 0
        %670 = vmatpush1.bf16.msra.mxu0 0
        %671 = vmatprep.subr.bf16.mxu0 0
        %672 = vmatpush1.bf16.msra.mxu0 0
        %673 = vmatprep.subr.bf16.mxu0 0
        %674 = vmatpush1.bf16.msra.mxu0 0
        %675 = vmatprep.subr.bf16.mxu0 0
        %676 = vmatpush1.bf16.msra.mxu0 0
        %677 = vmatprep.mubr.bf16.mxu0 0
        %678 = vmatmul.mubr.bf16.gmra.mrb[0].mxu0 %v639
        %v679 = vpop.f32.mrb[0].mxu0
        %v680 = vadd.f32 0.0, %v679
        %v681 = vpop.f32.mrb[0].mxu0
        %v682 = vpop.f32.mrb[0].mxu0
        %v683 = vpop.f32.mrb[0].mxu0
        %684 = vdwg.mxu0
        %685 = vst.msk [vmem:[#allocation2] sm:$0xff] %vm576, %v680
        %687 = vrot.lane.b32.xlu0 %v507, 120
        %v688 = vpop.permute.xlu0 %687
        %689 = vrot.lane.b32.xlu0 %v575, 120
        %v690 = vpop.permute.xlu0 %689
        %v692 = vsel %vm576, %v688, 0
        %v695 = vsel %vm576, %v690, 0
        %697 = vmatprep.subr.bf16.mxu0 0
        %698 = vmatpush1.bf16.xpose.msra.mxu0 %v695
        %699 = vmatprep.subr.bf16.mxu0 0
        %700 = vmatpush1.bf16.xpose.msra.mxu0 0
        %701 = vmatprep.subr.bf16.mxu0 0
        %702 = vmatpush1.bf16.xpose.msra.mxu0 0
        %703 = vmatprep.subr.bf16.mxu0 0
        %704 = vmatpush1.bf16.xpose.msra.mxu0 0
        %705 = vmatprep.subr.bf16.mxu0 0
        %706 = vmatpush1.bf16.xpose.msra.mxu0 0
        %707 = vmatprep.subr.bf16.mxu0 0
        %708 = vmatpush1.bf16.xpose.msra.mxu0 0
        %709 = vmatprep.subr.bf16.mxu0 0
        %710 = vmatpush1.bf16.xpose.msra.mxu0 0
        %711 = vmatprep.subr.bf16.mxu0 0
        %712 = vmatpush1.bf16.xpose.msra.mxu0 0
        %713 = vmatprep.subr.bf16.mxu0 0
        %714 = vmatpush1.bf16.xpose.msra.mxu0 0
        %715 = vmatprep.subr.bf16.mxu0 0
        %716 = vmatpush1.bf16.xpose.msra.mxu0 0
        %717 = vmatprep.subr.bf16.mxu0 0
        %718 = vmatpush1.bf16.xpose.msra.mxu0 0
        %719 = vmatprep.subr.bf16.mxu0 0
        %720 = vmatpush1.bf16.xpose.msra.mxu0 0
        %721 = vmatprep.subr.bf16.mxu0 0
        %722 = vmatpush1.bf16.xpose.msra.mxu0 0
        %723 = vmatprep.subr.bf16.mxu0 0
        %724 = vmatpush1.bf16.xpose.msra.mxu0 0
        %725 = vmatprep.subr.bf16.mxu0 0
        %726 = vmatpush1.bf16.xpose.msra.mxu0 0
        %727 = vmatprep.subr.bf16.mxu0 0
        %728 = vmatpush1.bf16.xpose.msra.mxu0 0
        %729 = vmatprep.mubr.bf16.mxu0 0
        %730 = vmatmul.mubr.bf16.gmra.mrb[0].mxu0 %v692
        %v731 = vpop.f32.mrb[0].mxu0
        %v732 = vadd.f32 0.0, %v731
        %v733 = vpop.f32.mrb[0].mxu0
        %v734 = vpop.f32.mrb[0].mxu0
        %v735 = vpop.f32.mrb[0].mxu0
        %736 = vdwg.mxu0
        %v737 = vsel %vm576, %v732, -inf
        %738 = vmax.xlane.f32.xlu0 %v737
        %v739 = vpop.xlane.xlu0 %738
        %v740 = vsub.f32 %v732, %v739
        %v741 = vmul.f32 %v740, 1.442695
        %v742 = vpow.pop %v741
        %v743 = vsel %vm576, %v742, 0.0
        %744 = vadd.xlane.f32.xlu0 %v743
        %v745 = vpop.xlane.xlu0 %744
        %v746 = vrcp.pop %v745
        %v747 = vmul.f32 %v742, %v746
        %v748 = vpack.c.bf16 %v747, %v747
        %749 = vrot.lane.b32.xlu0 %v575, 88
        %v750 = vpop.permute.xlu0 %749
        %v752 = vsel %vm576, %v748, 0
        %v755 = vsel %vm641, %v750, 0
        %757 = vmatprep.subr.bf16.mxu0 0
        %758 = vmatpush1.bf16.msra.mxu0 %v755
        %759 = vmatprep.subr.bf16.mxu0 0
        %760 = vmatpush1.bf16.msra.mxu0 0
        %761 = vmatprep.subr.bf16.mxu0 0
        %762 = vmatpush1.bf16.msra.mxu0 0
        %763 = vmatprep.subr.bf16.mxu0 0
        %764 = vmatpush1.bf16.msra.mxu0 0
        %765 = vmatprep.subr.bf16.mxu0 0
        %766 = vmatpush1.bf16.msra.mxu0 0
        %767 = vmatprep.subr.bf16.mxu0 0
        %768 = vmatpush1.bf16.msra.mxu0 0
        %769 = vmatprep.subr.bf16.mxu0 0
        %770 = vmatpush1.bf16.msra.mxu0 0
        %771 = vmatprep.subr.bf16.mxu0 0
        %772 = vmatpush1.bf16.msra.mxu0 0
        %773 = vmatprep.subr.bf16.mxu0 0
        %774 = vmatpush1.bf16.msra.mxu0 0
        %775 = vmatprep.subr.bf16.mxu0 0
        %776 = vmatpush1.bf16.msra.mxu0 0
        %777 = vmatprep.subr.bf16.mxu0 0
        %778 = vmatpush1.bf16.msra.mxu0 0
        %779 = vmatprep.subr.bf16.mxu0 0
        %780 = vmatpush1.bf16.msra.mxu0 0
        %781 = vmatprep.subr.bf16.mxu0 0
        %782 = vmatpush1.bf16.msra.mxu0 0
        %783 = vmatprep.subr.bf16.mxu0 0
        %784 = vmatpush1.bf16.msra.mxu0 0
        %785 = vmatprep.subr.bf16.mxu0 0
        %786 = vmatpush1.bf16.msra.mxu0 0
        %787 = vmatprep.subr.bf16.mxu0 0
        %788 = vmatpush1.bf16.msra.mxu0 0
        %789 = vmatprep.mubr.bf16.mxu0 0
        %790 = vmatmul.mubr.bf16.gmra.mrb[0].mxu0 %v752
        %v791 = vpop.f32.mrb[0].mxu0
        %v792 = vadd.f32 0.0, %v791
        %v793 = vpop.f32.mrb[0].mxu0
        %v794 = vpop.f32.mrb[0].mxu0
        %v795 = vpop.f32.mrb[0].mxu0
        %796 = vdwg.mxu0
        %798 = vrot.lane.b32.xlu0 %v792, 8
        %v799 = vpop.permute.xlu0 %798
        %vm801 = vcmask 130112
        %802 = vst.msk [vmem:[#allocation2] sm:$0xff] %vm801, %v799
        %803 = vrot.lane.b32.xlu0 %v507, 112
        %v804 = vpop.permute.xlu0 %803
        %805 = vrot.lane.b32.xlu0 %v575, 112
        %v806 = vpop.permute.xlu0 %805
        %v808 = vsel %vm576, %v804, 0
        %v811 = vsel %vm576, %v806, 0
        %813 = vmatprep.subr.bf16.mxu0 0
        %814 = vmatpush1.bf16.xpose.msra.mxu0 %v811
        %815 = vmatprep.subr.bf16.mxu0 0
        %816 = vmatpush1.bf16.xpose.msra.mxu0 0
        %817 = vmatprep.subr.bf16.mxu0 0
        %818 = vmatpush1.bf16.xpose.msra.mxu0 0
        %819 = vmatprep.subr.bf16.mxu0 0
        %820 = vmatpush1.bf16.xpose.msra.mxu0 0
        %821 = vmatprep.subr.bf16.mxu0 0
        %822 = vmatpush1.bf16.xpose.msra.mxu0 0
        %823 = vmatprep.subr.bf16.mxu0 0
        %824 = vmatpush1.bf16.xpose.msra.mxu0 0
        %825 = vmatprep.subr.bf16.mxu0 0
        %826 = vmatpush1.bf16.xpose.msra.mxu0 0
        %827 = vmatprep.subr.bf16.mxu0 0
        %828 = vmatpush1.bf16.xpose.msra.mxu0 0
        %829 = vmatprep.subr.bf16.mxu0 0
        %830 = vmatpush1.bf16.xpose.msra.mxu0 0
        %831 = vmatprep.subr.bf16.mxu0 0
        %832 = vmatpush1.bf16.xpose.msra.mxu0 0
        %833 = vmatprep.subr.bf16.mxu0 0
        %834 = vmatpush1.bf16.xpose.msra.mxu0 0
        %835 = vmatprep.subr.bf16.mxu0 0
        %836 = vmatpush1.bf16.xpose.msra.mxu0 0
        %837 = vmatprep.subr.bf16.mxu0 0
        %838 = vmatpush1.bf16.xpose.msra.mxu0 0
        %839 = vmatprep.subr.bf16.mxu0 0
        %840 = vmatpush1.bf16.xpose.msra.mxu0 0
        %841 = vmatprep.subr.bf16.mxu0 0
        %842 = vmatpush1.bf16.xpose.msra.mxu0 0
        %843 = vmatprep.subr.bf16.mxu0 0
        %844 = vmatpush1.bf16.xpose.msra.mxu0 0
        %845 = vmatprep.mubr.bf16.mxu0 0
        %846 = vmatmul.mubr.bf16.gmra.mrb[0].mxu0 %v808
        %v847 = vpop.f32.mrb[0].mxu0
        %v848 = vadd.f32 0.0, %v847
        %v849 = vpop.f32.mrb[0].mxu0
        %v850 = vpop.f32.mrb[0].mxu0
        %v851 = vpop.f32.mrb[0].mxu0
        %852 = vdwg.mxu0
        %v853 = vsel %vm576, %v848, -inf
        %854 = vmax.xlane.f32.xlu0 %v853
        %v855 = vpop.xlane.xlu0 %854
        %v856 = vsub.f32 %v848, %v855
        %v857 = vmul.f32 %v856, 1.442695
        %v858 = vpow.pop %v857
        %v859 = vsel %vm576, %v858, 0.0
        %860 = vadd.xlane.f32.xlu0 %v859
        %v861 = vpop.xlane.xlu0 %860
        %v862 = vrcp.pop %v861
        %v863 = vmul.f32 %v858, %v862
        %v864 = vpack.c.bf16 %v863, %v863
        %865 = vrot.lane.b32.xlu0 %v575, 80
        %v866 = vpop.permute.xlu0 %865
        %v868 = vsel %vm576, %v864, 0
        %v871 = vsel %vm641, %v866, 0
        %873 = vmatprep.subr.bf16.mxu0 0
        %874 = vmatpush1.bf16.msra.mxu0 %v871
        %875 = vmatprep.subr.bf16.mxu0 0
        %876 = vmatpush1.bf16.msra.mxu0 0
        %877 = vmatprep.subr.bf16.mxu0 0
        %878 = vmatpush1.bf16.msra.mxu0 0
        %879 = vmatprep.subr.bf16.mxu0 0
        %880 = vmatpush1.bf16.msra.mxu0 0
        %881 = vmatprep.subr.bf16.mxu0 0
        %882 = vmatpush1.bf16.msra.mxu0 0
        %883 = vmatprep.subr.bf16.mxu0 0
        %884 = vmatpush1.bf16.msra.mxu0 0
        %885 = vmatprep.subr.bf16.mxu0 0
        %886 = vmatpush1.bf16.msra.mxu0 0
        %887 = vmatprep.subr.bf16.mxu0 0
        %888 = vmatpush1.bf16.msra.mxu0 0
        %889 = vmatprep.subr.bf16.mxu0 0
        %890 = vmatpush1.bf16.msra.mxu0 0
        %891 = vmatprep.subr.bf16.mxu0 0
        %892 = vmatpush1.bf16.msra.mxu0 0
        %893 = vmatprep.subr.bf16.mxu0 0
        %894 = vmatpush1.bf16.msra.mxu0 0
        %895 = vmatprep.subr.bf16.mxu0 0
        %896 = vmatpush1.bf16.msra.mxu0 0
        %897 = vmatprep.subr.bf16.mxu0 0
        %898 = vmatpush1.bf16.msra.mxu0 0
        %899 = vmatprep.subr.bf16.mxu0 0
        %900 = vmatpush1.bf16.msra.mxu0 0
        %901 = vmatprep.subr.bf16.mxu0 0
        %902 = vmatpush1.bf16.msra.mxu0 0
        %903 = vmatprep.subr.bf16.mxu0 0
        %904 = vmatpush1.bf16.msra.mxu0 0
        %905 = vmatprep.mubr.bf16.mxu0 0
        %906 = vmatmul.mubr.bf16.gmra.mrb[0].mxu0 %v868
        %v907 = vpop.f32.mrb[0].mxu0
        %v908 = vadd.f32 0.0, %v907
        %v909 = vpop.f32.mrb[0].mxu0
        %v910 = vpop.f32.mrb[0].mxu0
        %v911 = vpop.f32.mrb[0].mxu0
        %912 = vdwg.mxu0
        %914 = vrot.lane.b32.xlu0 %v908, 16
        %v915 = vpop.permute.xlu0 %914
        %vm917 = vcmask 195712
        %918 = vst.msk [vmem:[#allocation2] sm:$0xff] %vm917, %v915
        %919 = vrot.lane.b32.xlu0 %v507, 104
        %v920 = vpop.permute.xlu0 %919
        %921 = vrot.lane.b32.xlu0 %v575, 104
        %v922 = vpop.permute.xlu0 %921
        %v924 = vsel %vm576, %v920, 0
        %v927 = vsel %vm576, %v922, 0
        %929 = vmatprep.subr.bf16.mxu0 0
        %930 = vmatpush1.bf16.xpose.msra.mxu0 %v927
        %931 = vmatprep.subr.bf16.mxu0 0
        %932 = vmatpush1.bf16.xpose.msra.mxu0 0
        %933 = vmatprep.subr.bf16.mxu0 0
        %934 = vmatpush1.bf16.xpose.msra.mxu0 0
        %935 = vmatprep.subr.bf16.mxu0 0
        %936 = vmatpush1.bf16.xpose.msra.mxu0 0
        %937 = vmatprep.subr.bf16.mxu0 0
        %938 = vmatpush1.bf16.xpose.msra.mxu0 0
        %939 = vmatprep.subr.bf16.mxu0 0
        %940 = vmatpush1.bf16.xpose.msra.mxu0 0
        %941 = vmatprep.subr.bf16.mxu0 0
        %942 = vmatpush1.bf16.xpose.msra.mxu0 0
        %943 = vmatprep.subr.bf16.mxu0 0
        %944 = vmatpush1.bf16.xpose.msra.mxu0 0
        %945 = vmatprep.subr.bf16.mxu0 0
        %946 = vmatpush1.bf16.xpose.msra.mxu0 0
        %947 = vmatprep.subr.bf16.mxu0 0
        %948 = vmatpush1.bf16.xpose.msra.mxu0 0
        %949 = vmatprep.subr.bf16.mxu0 0
        %950 = vmatpush1.bf16.xpose.msra.mxu0 0
        %951 = vmatprep.subr.bf16.mxu0 0
        %952 = vmatpush1.bf16.xpose.msra.mxu0 0
        %953 = vmatprep.subr.bf16.mxu0 0
        %954 = vmatpush1.bf16.xpose.msra.mxu0 0
        %955 = vmatprep.subr.bf16.mxu0 0
        %956 = vmatpush1.bf16.xpose.msra.mxu0 0
        %957 = vmatprep.subr.bf16.mxu0 0
        %958 = vmatpush1.bf16.xpose.msra.mxu0 0
        %959 = vmatprep.subr.bf16.mxu0 0
        %960 = vmatpush1.bf16.xpose.msra.mxu0 0
        %961 = vmatprep.mubr.bf16.mxu0 0
        %962 = vmatmul.mubr.bf16.gmra.mrb[0].mxu0 %v924
        %v963 = vpop.f32.mrb[0].mxu0
        %v964 = vadd.f32 0.0, %v963
        %v965 = vpop.f32.mrb[0].mxu0
        %v966 = vpop.f32.mrb[0].mxu0
        %v967 = vpop.f32.mrb[0].mxu0
        %968 = vdwg.mxu0
        %v969 = vsel %vm576, %v964, -inf
        %970 = vmax.xlane.f32.xlu0 %v969
        %v971 = vpop.xlane.xlu0 %970
        %v972 = vsub.f32 %v964, %v971
        %v973 = vmul.f32 %v972, 1.442695
        %v974 = vpow.pop %v973
        %v975 = vsel %vm576, %v974, 0.0
        %976 = vadd.xlane.f32.xlu0 %v975
        %v977 = vpop.xlane.xlu0 %976
        %v978 = vrcp.pop %v977
        %v979 = vmul.f32 %v974, %v978
        %v980 = vpack.c.bf16 %v979, %v979
        %981 = vrot.lane.b32.xlu0 %v575, 72
        %v982 = vpop.permute.xlu0 %981
        %v984 = vsel %vm576, %v980, 0
        %v987 = vsel %vm641, %v982, 0
        %989 = vmatprep.subr.bf16.mxu0 0
        %990 = vmatpush1.bf16.msra.mxu0 %v987
        %991 = vmatprep.subr.bf16.mxu0 0
        %992 = vmatpush1.bf16.msra.mxu0 0
        %993 = vmatprep.subr.bf16.mxu0 0
        %994 = vmatpush1.bf16.msra.mxu0 0
        %995 = vmatprep.subr.bf16.mxu0 0
        %996 = vmatpush1.bf16.msra.mxu0 0
        %997 = vmatprep.subr.bf16.mxu0 0
        %998 = vmatpush1.bf16.msra.mxu0 0
        %999 = vmatprep.subr.bf16.mxu0 0
        %1000 = vmatpush1.bf16.msra.mxu0 0
        %1001 = vmatprep.subr.bf16.mxu0 0
        %1002 = vmatpush1.bf16.msra.mxu0 0
        %1003 = vmatprep.subr.bf16.mxu0 0
        %1004 = vmatpush1.bf16.msra.mxu0 0
        %1005 = vmatprep.subr.bf16.mxu0 0
        %1006 = vmatpush1.bf16.msra.mxu0 0
        %1007 = vmatprep.subr.bf16.mxu0 0
        %1008 = vmatpush1.bf16.msra.mxu0 0
        %1009 = vmatprep.subr.bf16.mxu0 0
        %1010 = vmatpush1.bf16.msra.mxu0 0
        %1011 = vmatprep.subr.bf16.mxu0 0
        %1012 = vmatpush1.bf16.msra.mxu0 0
        %1013 = vmatprep.subr.bf16.mxu0 0
        %1014 = vmatpush1.bf16.msra.mxu0 0
        %1015 = vmatprep.subr.bf16.mxu0 0
        %1016 = vmatpush1.bf16.msra.mxu0 0
        %1017 = vmatprep.subr.bf16.mxu0 0
        %1018 = vmatpush1.bf16.msra.mxu0 0
        %1019 = vmatprep.subr.bf16.mxu0 0
        %1020 = vmatpush1.bf16.msra.mxu0 0
        %1021 = vmatprep.mubr.bf16.mxu0 0
        %1022 = vmatmul.mubr.bf16.gmra.mrb[0].mxu0 %v984
        %v1023 = vpop.f32.mrb[0].mxu0
        %v1024 = vadd.f32 0.0, %v1023
        %v1025 = vpop.f32.mrb[0].mxu0
        %v1026 = vpop.f32.mrb[0].mxu0
        %v1027 = vpop.f32.mrb[0].mxu0
        %1028 = vdwg.mxu0
        %1030 = vrot.lane.b32.xlu0 %v1024, 24
        %v1031 = vpop.permute.xlu0 %1030
        %vm1033 = vcmask 261312
        %1034 = vst.msk [vmem:[#allocation2] sm:$0xff] %vm1033, %v1031
        %v1035 = vld [vmem:[#allocation2] sm:$0xff]
        %v1036 = vpack.c.bf16 %v1035, %v1035
        %v1037 = vld [vmem:[%s6] sm:$0xf]
        %v1038 = vld [vmem:[%s6 + $0x4] sm:$0xf]
        %v1039 = vld [vmem:[%s6 + $0x8] sm:$0xf]
        %v1040 = vld [vmem:[%s6 + $0xc] sm:$0xf]
        %v1041 = vld [vmem:[%s7] sm:$0x1]
        %v1043 = vlaneseq
        %v1044 = vshrl.u32 %v1043, 7
        %v1045 = vsub.s32 0, %v1044
        %v1046 = vrot.slane %v1041, %v1045
        %v1052 = vunpack.c.l.b16 %v1037
        %v1053 = vunpack.c.l.b16 %v1038
        %v1054 = vunpack.c.l.b16 %v1039
        %v1055 = vunpack.c.l.b16 %v1040
        %v1056 = vpack.c.b16 %v1053, %v1052
        %v1057 = vpack.c.b16 %v1055, %v1054
        %v1061 = vsel %vm462, %v1036, 0
        %1063 = vmatprep.subr.bf16.mxu0 0
        %1064 = vmatpush1.bf16.msra.mxu0 %v1056
        %1065 = vmatprep.subr.bf16.mxu0 0
        %1066 = vmatpush1.bf16.msra.mxu0 %v1057
        %1067 = vmatprep.subr.bf16.mxu0 0
        %1068 = vmatpush1.bf16.msra.mxu0 0
        %1069 = vmatprep.subr.bf16.mxu0 0
        %1070 = vmatpush1.bf16.msra.mxu0 0
        %1071 = vmatprep.subr.bf16.mxu0 0
        %1072 = vmatpush1.bf16.msra.mxu0 0
        %1073 = vmatprep.subr.bf16.mxu0 0
        %1074 = vmatpush1.bf16.msra.mxu0 0
        %1075 = vmatprep.subr.bf16.mxu0 0
        %1076 = vmatpush1.bf16.msra.mxu0 0
        %1077 = vmatprep.subr.bf16.mxu0 0
        %1078 = vmatpush1.bf16.msra.mxu0 0
        %1079 = vmatprep.subr.bf16.mxu0 0
        %1080 = vmatpush1.bf16.msra.mxu0 0
        %1081 = vmatprep.subr.bf16.mxu0 0
        %1082 = vmatpush1.bf16.msra.mxu0 0
        %1083 = vmatprep.subr.bf16.mxu0 0
        %1084 = vmatpush1.bf16.msra.mxu0 0
        %1085 = vmatprep.subr.bf16.mxu0 0
        %1086 = vmatpush1.bf16.msra.mxu0 0
        %1087 = vmatprep.subr.bf16.mxu0 0
        %1088 = vmatpush1.bf16.msra.mxu0 0
        %1089 = vmatprep.subr.bf16.mxu0 0
        %1090 = vmatpush1.bf16.msra.mxu0 0
        %1091 = vmatprep.subr.bf16.mxu0 0
        %1092 = vmatpush1.bf16.msra.mxu0 0
        %1093 = vmatprep.subr.bf16.mxu0 0
        %1094 = vmatpush1.bf16.msra.mxu0 0
        %1095 = vmatprep.mubr.bf16.mxu0 0
        %1096 = vmatmul.mubr.bf16.gmra.mrb[0].mxu0 %v1061
        %v1097 = vpop.f32.mrb[0].mxu0
        %v1098 = vadd.f32 %v1046, %v1097
        %v1099 = vpop.f32.mrb[0].mxu0
        %v1100 = vpop.f32.mrb[0].mxu0
        %v1101 = vpop.f32.mrb[0].mxu0
        %1102 = vdwg.mxu0
        %v1103 = vadd.f32 %v1098, %v436
        %v1104 = vsel %vm462, %v1103, 0.0
        %1105 = vadd.xlane.f32.xlu0 %v1104
        %v1106 = vpop.xlane.xlu0 %1105
        %v1107 = vrcp.pop 32.0
        %v1108 = vmul.f32 %v1106, %v1107
        %v1109 = vsub.f32 %v1103, %v1108
        %v1110 = vmul.f32 %v1109, %v1109
        %v1111 = vsel %vm462, %v1110, 0.0
        %1112 = vadd.xlane.f32.xlu0 %v1111
        %v1113 = vpop.xlane.xlu0 %1112
        %v1114 = vmul.f32 %v1113, %v1107
        %v1115 = vadd.f32 %v1114, 1e-12
        %v1116 = vrsqrt.pop %v1115
        %v1117 = vmul.f32 %v1109, %v1116
        %v1118 = vld [vmem:[%s8] sm:$0x1]
        %v1120 = vlaneseq
        %v1121 = vshrl.u32 %v1120, 7
        %v1122 = vsub.s32 0, %v1121
        %v1123 = vrot.slane %v1118, %v1122
        %v1125 = vmul.f32 %v1117, %v1123
        %v1126 = vld [vmem:[%s9] sm:$0x1]
        %v1128 = vlaneseq
        %v1129 = vshrl.u32 %v1128, 7
        %v1130 = vsub.s32 0, %v1129
        %v1131 = vrot.slane %v1126, %v1130
        %v1133 = vadd.f32 %v1125, %v1131
        %1134 = vst.msk [vmem:[%s434] sm:$0xff] %vm462, %v1133
        %p1135 = scmp.lt.s32.totalorder %s31, 1
        %s1136 = scalar_select %p1135, %s31, 1
        %p1137 = scmp.lt.s32.totalorder %s32, 0
        %s1138 = scalar_select %p1137, %s32, 0
        %s1139 = sadd.s32 %s1138, %s1136
        %s1140 = smul.addr %s1139, 8
        %s1141 = scalar_lea.vmem %s10, %s1140
        // Predicated region
        $region69: #{decoder_layer.3} parent=59 // pred_check
          %p1142 = pneg %p281
        $region70: #{decoder_layer.3} parent=59 // pred_check_branch
          %1144 = sbr.rel (%p1142) target = $region72
        $region71: #{decoder_layer.3} parent=59 // pred_region
          _
        $region72: #{decoder_layer.3} parent=59 // pred_fallthru
          _
      $region60: #{decoder_layer.3} parent=5 // pred_fallthru
        _
      %p1145 = scmp.le.s32.totalorder 2, %s22
      // Predicated region
      $region73: #{decoder_layer.3} parent=5 // pred_check
        %p1146 = pneg %p1145
      $region74: #{decoder_layer.3} parent=5 // pred_check_branch
        %1148 = sbr.rel (%p1146) target = $region76
      $region75: #{decoder_layer.3} parent=5 // pred_region
        %s1149 = ssub.s32 %s22, 2
        // Predicated region
        $region77: #{decoder_layer.3} parent=75 // pred_check
          %p1150 = pneg %p287
        $region78: #{decoder_layer.3} parent=75 // pred_check_branch
          %1152 = sbr.rel (%p1150) target = $region80
        $region79: #{decoder_layer.3} parent=75 // pred_region
          %p1153 = scmp.lt.s32.totalorder %s33, 1
          %s1154 = scalar_select %p1153, %s33, 1
          %p1155 = scmp.lt.s32.totalorder %s34, 0
          %s1156 = scalar_select %p1155, %s34, 0
          %s1157 = sadd.s32 %s1156, %s1154
          %s1158 = smul.addr %s1157, 8
          %s1159 = scalar_lea.vmem %s10, %s1158
        $region80: #{decoder_layer.3} parent=75 // pred_fallthru
          _
      $region76: #{decoder_layer.3} parent=5 // pred_fallthru
        _
    $region6: #{decoder_layer.3} parent=1 // loop_footer
      %s26 = sadd.s32 1, %s22
    $region7: #{decoder_layer.3} parent=1 // loop_footer_branch
      %21 = sbr.rel target = $region3
    $region8: #{decoder_layer.3} parent=1 // loop_exit
      _
    %1160 = vsyncpa [#allocation4], 1
    %s1161 = scalar_lea.sflag [#allocation4], 1
    %1162 = vsyncpa %s1161, 1
    %1163 = vsyncpa [#allocation6], 1
    %s1164 = scalar_lea.sflag [#allocation6], 1
    %1165 = vsyncpa %s1164, 1

</llo_original>
